<compile_context>
chip_gen: v5e
topology: v5e:2x2
jax: 0.10.0
libtpu: 0.0.40
codegen_flags: <defaults>
</compile_context>

<pallas_src>
import math
import functools

import jax
import jax.numpy as jnp
from jax.experimental import pallas as pl
from jax.experimental.pallas import tpu as pltpu

NEG_INF = -1e9          # finite "minus infinity" (avoids NaN on fully-masked rows)
TM, TN, TK = 256, 256, 512   # tile targets (fit 32 MiB scoped VMEM incl. v7x)
VMEM_LIMIT = 32 * 1024 * 1024


def _pick_tile(dim, target, align):
    """Largest tile <= target that divides dim and is a multiple of align; else full dim."""
    if dim <= target:
        return dim
    t = (target // align) * align
    while t >= align:
        if dim % t == 0:
            return t
        t -= align
    return dim


# ----------------------------------------------------------------------------
# Pallas kernels
# ----------------------------------------------------------------------------

def _linear_kernel(x_ref, w_ref, b_ref, o_ref, acc_ref, *, relu):
    @pl.when(pl.program_id(2) == 0)
    def _():
        acc_ref[...] = jnp.zeros_like(acc_ref)

    acc_ref[...] += jnp.dot(x_ref[...].astype(jnp.bfloat16), w_ref[...],
                            preferred_element_type=jnp.float32)

    @pl.when(pl.program_id(2) == pl.num_programs(2) - 1)
    def _():
        y = acc_ref[...] + b_ref[...]
        if relu:
            y = jnp.maximum(y, 0.0)
        o_ref[...] = y.astype(o_ref.dtype)


def linear(x2d, w_t, b_row, relu=False):
    """x2d: (M, K) f32; w_t: (K, Nout) bf16 (pre-transposed); b_row: (1, Nout) f32."""
    M, K = x2d.shape
    Nout = w_t.shape[1]
    tm = _pick_tile(M, TM, 8)
    tn = _pick_tile(Nout, TN, 128)
    tk = _pick_tile(K, TK, 128)
    return pl.pallas_call(
        functools.partial(_linear_kernel, relu=relu),
        out_shape=jax.ShapeDtypeStruct((M, Nout), jnp.float32),
        grid=(M // tm, Nout // tn, K // tk),
        in_specs=[
            pl.BlockSpec((tm, tk), lambda i, j, k: (i, k)),
            pl.BlockSpec((tk, tn), lambda i, j, k: (k, j)),
            pl.BlockSpec((1, tn), lambda i, j, k: (0, j)),
        ],
        out_specs=pl.BlockSpec((tm, tn), lambda i, j, k: (i, j)),
        scratch_shapes=[pltpu.VMEM((tm, tn), jnp.float32)],
        compiler_params=pltpu.CompilerParams(
            dimension_semantics=("parallel", "parallel", "arbitrary"),
            vmem_limit_bytes=VMEM_LIMIT),
    )(x2d, w_t, b_row)


def _ffn_kernel(x_ref, w1_ref, b1_ref, w2_ref, b2_ref, o_ref):
    h = jnp.dot(x_ref[...].astype(jnp.bfloat16), w1_ref[...],
                preferred_element_type=jnp.float32) + b1_ref[...]
    h = jnp.maximum(h, 0.0)
    y = jnp.dot(h.astype(jnp.bfloat16), w2_ref[...],
                preferred_element_type=jnp.float32) + b2_ref[...]
    o_ref[...] = y.astype(o_ref.dtype)


def feed_forward_2d(x2d, p):
    """Fused linear1 + ReLU + linear2 over row tiles (weights held fully in VMEM)."""
    M, E = x2d.shape
    F = p["w1_t"].shape[1]
    tm = _pick_tile(M, TM, 8)
    return pl.pallas_call(
        _ffn_kernel,
        out_shape=jax.ShapeDtypeStruct((M, E), jnp.float32),
        grid=(M // tm,),
        in_specs=[
            pl.BlockSpec((tm, E), lambda i: (i, 0)),
            pl.BlockSpec((E, F), lambda i: (0, 0)),
            pl.BlockSpec((1, F), lambda i: (0, 0)),
            pl.BlockSpec((F, E), lambda i: (0, 0)),
            pl.BlockSpec((1, E), lambda i: (0, 0)),
        ],
        out_specs=pl.BlockSpec((tm, E), lambda i: (i, 0)),
        compiler_params=pltpu.CompilerParams(
            dimension_semantics=("parallel",),
            vmem_limit_bytes=VMEM_LIMIT),
    )(x2d, p["w1_t"], p["b1"], p["w2_t"], p["b2"])


def _add_ln_kernel(x_ref, r_ref, g_ref, b_ref, o_ref):
    x = x_ref[...] + r_ref[...]
    mu = jnp.mean(x, axis=-1, keepdims=True)
    var = jnp.mean((x - mu) ** 2, axis=-1, keepdims=True)
    o_ref[...] = (x - mu) * jax.lax.rsqrt(var + 1e-5) * g_ref[...] + b_ref[...]


def _ln_kernel(x_ref, g_ref, b_ref, o_ref):
    x = x_ref[...]
    mu = jnp.mean(x, axis=-1, keepdims=True)
    var = jnp.mean((x - mu) ** 2, axis=-1, keepdims=True)
    o_ref[...] = (x - mu) * jax.lax.rsqrt(var + 1e-5) * g_ref[...] + b_ref[...]


def add_layer_norm(x2d, r2d, p):
    """LayerNorm(x + residual) fused in one kernel (row tiled)."""
    M, E = x2d.shape
    tm = _pick_tile(M, TM, 8)
    return pl.pallas_call(
        _add_ln_kernel,
        out_shape=jax.ShapeDtypeStruct((M, E), jnp.float32),
        grid=(M // tm,),
        in_specs=[
            pl.BlockSpec((tm, E), lambda i: (i, 0)),
            pl.BlockSpec((tm, E), lambda i: (i, 0)),
            pl.BlockSpec((1, E), lambda i: (0, 0)),
            pl.BlockSpec((1, E), lambda i: (0, 0)),
        ],
        out_specs=pl.BlockSpec((tm, E), lambda i: (i, 0)),
        compiler_params=pltpu.CompilerParams(
            dimension_semantics=("parallel",),
            vmem_limit_bytes=VMEM_LIMIT),
    )(x2d, r2d, p["gamma"], p["beta"])


def layer_norm(x2d, p):
    M, E = x2d.shape
    tm = _pick_tile(M, TM, 8)
    return pl.pallas_call(
        _ln_kernel,
        out_shape=jax.ShapeDtypeStruct((M, E), jnp.float32),
        grid=(M // tm,),
        in_specs=[
            pl.BlockSpec((tm, E), lambda i: (i, 0)),
            pl.BlockSpec((1, E), lambda i: (0, 0)),
            pl.BlockSpec((1, E), lambda i: (0, 0)),
        ],
        out_specs=pl.BlockSpec((tm, E), lambda i: (i, 0)),
        compiler_params=pltpu.CompilerParams(
            dimension_semantics=("parallel",),
            vmem_limit_bytes=VMEM_LIMIT),
    )(x2d, p["gamma"], p["beta"])


def _sdpa_kernel(q_ref, k_ref, v_ref, am_ref, kp_ref, o_ref):
    # All heads of one batch element per grid step.
    # q is pre-scaled by 1/sqrt(Dh); softmax math kept in f32 (v5e has no bf16 VPU/EUP).
    q = q_ref[...].astype(jnp.bfloat16)                    # (H, Tq, Dh)
    k = k_ref[...].astype(jnp.bfloat16)                    # (H, Tk, Dh)
    s = jnp.einsum("hqd,hkd->hqk", q, k,
                   preferred_element_type=jnp.float32)     # (H, Tq, Tk)
    s = s + am_ref[...] + kp_ref[...]                      # + (Tq,Tk) + (1,Tk) (bcast)
    s = s - jnp.max(s, axis=-1, keepdims=True)
    p = jnp.exp(s)
    denom = jnp.sum(p, axis=-1, keepdims=True)
    o = jnp.einsum("hqk,hkd->hqd", p.astype(jnp.bfloat16),
                   v_ref[...].astype(jnp.bfloat16),
                   preferred_element_type=jnp.float32)     # (H, Tq, Dh)
    o_ref[...] = o * pl.reciprocal(denom, approx=True)


def sdpa(q, k, v, attn_mask_add, kp_add):
    """q: (N,H,Tq,Dh) pre-scaled; k,v: (N,H,Tk,Dh); attn_mask_add: (Tq,Tk);
    kp_add: (N,1,Tk) additive key-padding mask. Masks composed in-kernel."""
    N, H, Tq, Dh = q.shape
    Tk = k.shape[2]
    return pl.pallas_call(
        _sdpa_kernel,
        out_shape=jax.ShapeDtypeStruct((N, H, Tq, Dh), jnp.float32),
        grid=(N,),
        in_specs=[
            pl.BlockSpec((None, H, Tq, Dh), lambda n: (n, 0, 0, 0)),
            pl.BlockSpec((None, H, Tk, Dh), lambda n: (n, 0, 0, 0)),
            pl.BlockSpec((None, H, Tk, Dh), lambda n: (n, 0, 0, 0)),
            pl.BlockSpec((Tq, Tk), lambda n: (0, 0)),
            pl.BlockSpec((None, 1, Tk), lambda n: (n, 0, 0)),
        ],
        out_specs=pl.BlockSpec((None, H, Tq, Dh), lambda n: (n, 0, 0, 0)),
        compiler_params=pltpu.CompilerParams(
            dimension_semantics=("parallel",),
            vmem_limit_bytes=VMEM_LIMIT),
    )(q, k, v, attn_mask_add, kp_add)


# ----------------------------------------------------------------------------
# Transformer building blocks (glue in JAX under jit, hot math in Pallas kernels)
# ----------------------------------------------------------------------------

def _heads(x2d, T, N, H, Dh, scale=None):
    x = x2d.reshape(T, N, H, Dh).transpose(1, 2, 0, 3)     # (N, H, T, Dh)
    if scale is not None:
        x = x * scale
    return x


def _attention_block(q2d, k2d, v2d, Tq, Tk, N, H, Dh, attn_mask, key_padding_mask, p):
    scale = 1.0 / math.sqrt(Dh)
    qh = _heads(q2d, Tq, N, H, Dh, scale)
    kh = _heads(k2d, Tk, N, H, Dh)
    vh = _heads(v2d, Tk, N, H, Dh)

    if attn_mask is None:
        am = jnp.zeros((Tq, Tk), jnp.float32)
    else:
        am = attn_mask.astype(jnp.float32)
    if key_padding_mask is None:
        kp = jnp.zeros((N, 1, Tk), jnp.float32)
    else:
        kp = jnp.where(key_padding_mask, NEG_INF, 0.0).astype(jnp.float32)[:, None, :]

    o = sdpa(qh, kh, vh, am, kp)                           # (N, H, Tq, Dh)
    o2d = o.transpose(2, 0, 1, 3).reshape(Tq * N, H * Dh)
    return linear(o2d, p["wo_t"], p["bo"])                 # (Tq*N, E)


def self_attention(x, p, attn_mask, key_padding_mask, nhead):
    T, N, E = x.shape
    H, Dh = nhead, E // nhead
    qkv = linear(x.reshape(T * N, E), p["w_in_t"], p["b_in"])      # fused QKV (Nout=3E)
    q2d, k2d, v2d = qkv[:, :E], qkv[:, E:2 * E], qkv[:, 2 * E:]
    out = _attention_block(q2d, k2d, v2d, T, T, N, H, Dh,
                           attn_mask, key_padding_mask, p)
    return out.reshape(T, N, E)


def cross_attention(x, memory, p, key_padding_mask, nhead):
    Tq, N, E = x.shape
    Tk = memory.shape[0]
    H, Dh = nhead, E // nhead
    q2d = linear(x.reshape(Tq * N, E), p["wq_t"], p["bq"])
    kv = linear(memory.reshape(Tk * N, E), p["wkv_t"], p["bkv"])   # fused KV (Nout=2E)
    k2d, v2d = kv[:, :E], kv[:, E:]
    out = _attention_block(q2d, k2d, v2d, Tq, Tk, N, H, Dh,
                           None, key_padding_mask, p)
    return out.reshape(Tq, N, E)


def encoder_layer(x, p, src_mask, src_key_padding_mask, nhead):
    T, N, E = x.shape
    M = T * N
    sa = self_attention(x, p["self_attn"], src_mask, src_key_padding_mask, nhead)
    x2d = add_layer_norm(x.reshape(M, E), sa.reshape(M, E), p["norm1"])
    ff = feed_forward_2d(x2d, p["ffn"])
    x2d = add_layer_norm(x2d, ff, p["norm2"])
    return x2d.reshape(T, N, E)


def decoder_layer(x, memory, p, tgt_mask, tgt_key_padding_mask,
                  memory_key_padding_mask, nhead):
    T, N, E = x.shape
    M = T * N
    sa = self_attention(x, p["self_attn"], tgt_mask, tgt_key_padding_mask, nhead)
    x2d = add_layer_norm(x.reshape(M, E), sa.reshape(M, E), p["norm1"])
    ca = cross_attention(x2d.reshape(T, N, E), memory, p["cross_attn"],
                         memory_key_padding_mask, nhead)
    x2d = add_layer_norm(x2d, ca.reshape(M, E), p["norm2"])
    ff = feed_forward_2d(x2d, p["ffn"])
    x2d = add_layer_norm(x2d, ff, p["norm3"])
    return x2d.reshape(T, N, E)


def positional_encoding_table(emb_size, maxlen=64):
    den = jnp.exp(-jnp.arange(0, emb_size, 2, dtype=jnp.float32)
                  * math.log(10000.0) / emb_size)
    pos = jnp.arange(0, maxlen, dtype=jnp.float32).reshape(maxlen, 1)
    pe = jnp.zeros((maxlen, emb_size), jnp.float32)
    pe = pe.at[:, 0::2].set(jnp.sin(pos * den))
    pe = pe.at[:, 1::2].set(jnp.cos(pos * den))
    return pe[:, None, :]                                  # (maxlen, 1, E)


def token_embed(tokens, table, emb_size):
    # TODO(synk): nn.Embedding gather kept in JAX glue (fused by XLA under jit).
    return jnp.take(table, tokens.astype(jnp.int32), axis=0) * math.sqrt(emb_size)


# ----------------------------------------------------------------------------
# Parameters & full forward
# ----------------------------------------------------------------------------

def init_params(key, num_encoder_layers, num_decoder_layers, emb_size, nhead,
                src_vocab_size, tgt_vocab_size, dim_feedforward):
    keys = iter(jax.random.split(key, 1024))
    E = emb_size

    def nrm(shape, scale=0.05):
        return (scale * jax.random.normal(next(keys), shape)).astype(jnp.float32)

    def mha_p():
        w_in = nrm((3 * E, E))                             # torch layout (3E, E)
        b_in = jnp.zeros((3 * E,), jnp.float32)
        wo = nrm((E, E))
        w_in_t = w_in.T.astype(jnp.bfloat16)               # pre-transposed (E, 3E) bf16
        return dict(
            w_in_t=w_in_t, b_in=b_in.reshape(1, -1),
            wq_t=w_in_t[:, :E], bq=b_in[:E].reshape(1, -1),
            wkv_t=w_in_t[:, E:], bkv=b_in[E:].reshape(1, -1),
            wo_t=wo.T.astype(jnp.bfloat16), bo=jnp.zeros((1, E), jnp.float32),
        )

    def ln_p():
        return dict(gamma=jnp.ones((1, E), jnp.float32),
                    beta=jnp.zeros((1, E), jnp.float32))

    def ff_p():
        return dict(
            w1_t=nrm((dim_feedforward, E)).T.astype(jnp.bfloat16),
            b1=jnp.zeros((1, dim_feedforward), jnp.float32),
            w2_t=nrm((E, dim_feedforward)).T.astype(jnp.bfloat16),
            b2=jnp.zeros((1, E), jnp.float32),
        )

    enc_layers = [dict(self_attn=mha_p(), ffn=ff_p(), norm1=ln_p(), norm2=ln_p())
                  for _ in range(num_encoder_layers)]
    dec_layers = [dict(self_attn=mha_p(), cross_attn=mha_p(), ffn=ff_p(),
                       norm1=ln_p(), norm2=ln_p(), norm3=ln_p())
                  for _ in range(num_decoder_layers)]

    return dict(
        src_tok_emb=nrm((src_vocab_size, E), 1.0),
        tgt_tok_emb=nrm((tgt_vocab_size, E), 1.0),
        pos_embedding=positional_encoding_table(E),
        encoder_layers=enc_layers,
        decoder_layers=dec_layers,
        encoder_norm=ln_p(),
        decoder_norm=ln_p(),
        generator_w_t=nrm((tgt_vocab_size, E)).T.astype(jnp.bfloat16),
        generator_b=jnp.zeros((1, tgt_vocab_size), jnp.float32),
    )


@functools.partial(jax.jit, static_argnames=("nhead",))
def seq2seq_transformer_forward(params, src, trg, src_mask, tgt_mask,
                                src_padding_mask, tgt_padding_mask,
                                memory_key_padding_mask, *, nhead):
    E = params["src_tok_emb"].shape[1]
    pe = params["pos_embedding"]

    src_emb = token_embed(src, params["src_tok_emb"], E) + pe[: src.shape[0]]
    tgt_emb = token_embed(trg, params["tgt_tok_emb"], E) + pe[: trg.shape[0]]

    x = src_emb
    for lp in params["encoder_layers"]:
        x = encoder_layer(x, lp, src_mask, src_padding_mask, nhead)
    S, N, _ = x.shape
    memory = layer_norm(x.reshape(S * N, E), params["encoder_norm"]).reshape(S, N, E)

    y = tgt_emb
    for lp in params["decoder_layers"]:
        y = decoder_layer(y, memory, lp, tgt_mask, tgt_padding_mask,
                          memory_key_padding_mask, nhead)
    T, N2, _ = y.shape
    y2d = layer_norm(y.reshape(T * N2, E), params["decoder_norm"])
    logits = linear(y2d, params["generator_w_t"], params["generator_b"])
    return logits.reshape(T, N2, -1)


# ----------------------------------------------------------------------------
# Demo
# ----------------------------------------------------------------------------

if __name__ == "__main__":
    # Small config: 2 encoder / 2 decoder layers, emb=32, heads=4, ffn=64.
    NUM_ENC, NUM_DEC = 2, 2
    EMB, NHEAD, FFN = 32, 4, 64
    SRC_VOCAB, TGT_VOCAB = 16, 16
    S, T, N = 8, 6, 2                       # src len, tgt len, batch

    root = jax.random.PRNGKey(0)
    k_param, k_src, k_trg = jax.random.split(root, 3)

    params = init_params(k_param, NUM_ENC, NUM_DEC, EMB, NHEAD,
                         SRC_VOCAB, TGT_VOCAB, FFN)

    src = jax.random.randint(k_src, (S, N), 0, SRC_VOCAB, dtype=jnp.int32)
    trg = jax.random.randint(k_trg, (T, N), 0, TGT_VOCAB, dtype=jnp.int32)

    src_mask = jnp.zeros((S, S), jnp.float32)
    tgt_mask = jnp.where(jnp.triu(jnp.ones((T, T), bool), k=1),
                         NEG_INF, 0.0).astype(jnp.float32)        # causal (finite -inf)
    src_padding_mask = jnp.zeros((N, S), bool).at[1, 6:].set(True)
    tgt_padding_mask = jnp.zeros((N, T), bool).at[1, 5:].set(True)
    memory_key_padding_mask = src_padding_mask

    logits = seq2seq_transformer_forward(
        params, src, trg, src_mask, tgt_mask,
        src_padding_mask, tgt_padding_mask, memory_key_padding_mask, nhead=NHEAD)
    logits = jax.block_until_ready(logits)

    assert logits.shape == (T, N, TGT_VOCAB)
    assert bool(jnp.all(jnp.isfinite(logits)))
    print("KERNEL_OK")
</pallas_src>

<mosaic_0001>
module attributes {stable_mosaic.version = 11 : i64} {
  func.func @_linear_kernel(%arg0: i32, %arg1: i32, %arg2: i32, %arg3: memref<12x32xf32, #tpu.memory_space<vmem>>, %arg4: memref<32x96xbf16, #tpu.memory_space<vmem>>, %arg5: memref<1x96xf32, #tpu.memory_space<vmem>>, %arg6: memref<12x96xf32, #tpu.memory_space<vmem>>, %arg7: memref<12x96xf32, #tpu.memory_space<vmem>>) attributes {dimension_semantics = [#tpu.dimension_semantics<parallel>, #tpu.dimension_semantics<parallel>, #tpu.dimension_semantics<arbitrary>], iteration_bounds = array<i64: 1, 1, 1>, scalar_prefetch = 0 : i64, scratch_operands = 1 : i64, tpu.core_type = #tpu.core_type<tc>, window_params = [{transform_indices = @transform_0, window_bounds = array<i64: 12, 32>}, {transform_indices = @transform_1, window_bounds = array<i64: 32, 96>}, {transform_indices = @transform_2, window_bounds = array<i64: 1, 96>}, {transform_indices = @transform_3, window_bounds = array<i64: 12, 96>}]} {
    %c0_i32 = arith.constant 0 : i32
    %0 = arith.cmpi eq, %arg2, %c0_i32 : i32
    %1 = arith.extui %0 : i1 to i32
    %c0_i32_0 = arith.constant 0 : i32
    %2 = arith.cmpi ne, %1, %c0_i32_0 : i32
    scf.if %2 {
      %cst_10 = arith.constant 0.000000e+00 : f32
      %13 = vector.broadcast %cst_10 : f32 to vector<12x96xf32>
      %c0_11 = arith.constant 0 : index
      %c0_12 = arith.constant 0 : index
      %14 = vector.load %arg7[%c0_11, %c0_12] : memref<12x96xf32, #tpu.memory_space<vmem>>, vector<12x96xf32>
      tpu.vector_store %arg7[%c0_11, %c0_12], %13 {strides = array<i32>} : memref<12x96xf32, #tpu.memory_space<vmem>>, vector<12x96xf32>,
    } else {
    }
    %c0 = arith.constant 0 : index
    %c0_1 = arith.constant 0 : index
    %3 = vector.load %arg7[%c0, %c0_1] : memref<12x96xf32, #tpu.memory_space<vmem>>, vector<12x96xf32>
    %c0_2 = arith.constant 0 : index
    %c0_3 = arith.constant 0 : index
    %4 = vector.load %arg3[%c0_2, %c0_3] : memref<12x32xf32, #tpu.memory_space<vmem>>, vector<12x32xf32>
    %5 = arith.truncf %4 : vector<12x32xf32> to vector<12x32xbf16>
    %c0_4 = arith.constant 0 : index
    %c0_5 = arith.constant 0 : index
    %6 = vector.load %arg4[%c0_4, %c0_5] : memref<32x96xbf16, #tpu.memory_space<vmem>>, vector<32x96xbf16>
    %cst = arith.constant dense<0.000000e+00> : vector<12x96xf32>
    %7 = tpu.matmul %5, %6, %cst {dimension_numbers = #tpu.dot_dimension_numbers<[1], [0], [0], [1], [0, 0, 1, 1], [], []>} : vector<12x32xbf16>, vector<32x96xbf16>, vector<12x96xf32> -> vector<12x96xf32>
    %8 = arith.addf %3, %7 : vector<12x96xf32>
    %c0_6 = arith.constant 0 : index
    %c0_7 = arith.constant 0 : index
    %9 = vector.load %arg7[%c0_6, %c0_7] : memref<12x96xf32, #tpu.memory_space<vmem>>, vector<12x96xf32>
    tpu.vector_store %arg7[%c0_6, %c0_7], %8 {strides = array<i32>} : memref<12x96xf32, #tpu.memory_space<vmem>>, vector<12x96xf32>,
    %c0_i32_8 = arith.constant 0 : i32
    %10 = arith.cmpi eq, %arg2, %c0_i32_8 : i32
    %11 = arith.extui %10 : i1 to i32
    %c0_i32_9 = arith.constant 0 : i32
    %12 = arith.cmpi ne, %11, %c0_i32_9 : i32
    scf.if %12 {
      %c0_10 = arith.constant 0 : index
      %c0_11 = arith.constant 0 : index
      %13 = vector.load %arg7[%c0_10, %c0_11] : memref<12x96xf32, #tpu.memory_space<vmem>>, vector<12x96xf32>
      %c0_12 = arith.constant 0 : index
      %c0_13 = arith.constant 0 : index
      %14 = vector.load %arg5[%c0_12, %c0_13] : memref<1x96xf32, #tpu.memory_space<vmem>>, vector<1x96xf32>
      %15 = vector.broadcast %14 : vector<1x96xf32> to vector<12x96xf32>
      %16 = arith.addf %13, %15 : vector<12x96xf32>
      %c0_14 = arith.constant 0 : index
      %c0_15 = arith.constant 0 : index
      %17 = vector.load %arg6[%c0_14, %c0_15] : memref<12x96xf32, #tpu.memory_space<vmem>>, vector<12x96xf32>
      tpu.vector_store %arg6[%c0_14, %c0_15], %16 {strides = array<i32>} : memref<12x96xf32, #tpu.memory_space<vmem>>, vector<12x96xf32>,
    } else {
    }
    return
  }
  func.func @transform_0(%arg0: i32, %arg1: i32, %arg2: i32) -> (i32, i32) {
    %c0_i32 = arith.constant 0 : i32
    return %arg0, %arg2 : i32, i32
  }
  func.func @transform_1(%arg0: i32, %arg1: i32, %arg2: i32) -> (i32, i32) {
    %c0_i32 = arith.constant 0 : i32
    return %arg2, %arg1 : i32, i32
  }
  func.func @transform_2(%arg0: i32, %arg1: i32, %arg2: i32) -> (i32, i32) {
    %c0_i32 = arith.constant 0 : i32
    %c0_i32_0 = arith.constant 0 : i32
    return %c0_i32, %arg1 : i32, i32
  }
  func.func @transform_3(%arg0: i32, %arg1: i32, %arg2: i32) -> (i32, i32) {
    %c0_i32 = arith.constant 0 : i32
    return %arg0, %arg1 : i32, i32
  }
}

module attributes {stable_mosaic.version = 11 : i64} {
  func.func @_add_ln_kernel(%arg0: i32, %arg1: memref<12x32xf32, #tpu.memory_space<vmem>>, %arg2: memref<12x32xf32, #tpu.memory_space<vmem>>, %arg3: memref<1x32xf32, #tpu.memory_space<vmem>>, %arg4: memref<1x32xf32, #tpu.memory_space<vmem>>, %arg5: memref<12x32xf32, #tpu.memory_space<vmem>>) attributes {dimension_semantics = [#tpu.dimension_semantics<parallel>], iteration_bounds = array<i64: 1>, scalar_prefetch = 0 : i64, scratch_operands = 0 : i64, tpu.core_type = #tpu.core_type<tc>, window_params = [{transform_indices = @transform_0, window_bounds = array<i64: 12, 32>}, {transform_indices = @transform_1, window_bounds = array<i64: 12, 32>}, {pipeline_mode = #tpu.pipeline_mode<synchronous>, transform_indices = @transform_2, window_bounds = array<i64: 1, 32>}, {pipeline_mode = #tpu.pipeline_mode<synchronous>, transform_indices = @transform_3, window_bounds = array<i64: 1, 32>}, {transform_indices = @transform_4, window_bounds = array<i64: 12, 32>}]} {
    %c0 = arith.constant 0 : index
    %c0_0 = arith.constant 0 : index
    %0 = vector.load %arg1[%c0, %c0_0] : memref<12x32xf32, #tpu.memory_space<vmem>>, vector<12x32xf32>
    %c0_1 = arith.constant 0 : index
    %c0_2 = arith.constant 0 : index
    %1 = vector.load %arg2[%c0_1, %c0_2] : memref<12x32xf32, #tpu.memory_space<vmem>>, vector<12x32xf32>
    %2 = arith.addf %0, %1 : vector<12x32xf32>
    %cst = arith.constant dense<0.000000e+00> : vector<12xf32>
    %3 = vector.multi_reduction <add>, %2, %cst [1] : vector<12x32xf32> to vector<12xf32>
    %4 = vector.shape_cast %3 : vector<12xf32> to vector<12x1xf32>
    %cst_3 = arith.constant 3.200000e+01 : f32
    %5 = vector.broadcast %cst_3 : f32 to vector<12x1xf32>
    %6 = arith.divf %4, %5 : vector<12x1xf32>
    %7 = vector.broadcast %6 : vector<12x1xf32> to vector<12x32xf32>
    %8 = arith.subf %2, %7 : vector<12x32xf32>
    %9 = arith.mulf %8, %8 : vector<12x32xf32>
    %cst_4 = arith.constant dense<0.000000e+00> : vector<12xf32>
    %10 = vector.multi_reduction <add>, %9, %cst_4 [1] : vector<12x32xf32> to vector<12xf32>
    %11 = vector.shape_cast %10 : vector<12xf32> to vector<12x1xf32>
    %cst_5 = arith.constant 3.200000e+01 : f32
    %12 = vector.broadcast %cst_5 : f32 to vector<12x1xf32>
    %13 = arith.divf %11, %12 : vector<12x1xf32>
    %14 = vector.broadcast %6 : vector<12x1xf32> to vector<12x32xf32>
    %15 = arith.subf %2, %14 : vector<12x32xf32>
    %cst_6 = arith.constant 9.99999974E-6 : f32
    %16 = vector.broadcast %cst_6 : f32 to vector<12x1xf32>
    %17 = arith.addf %13, %16 : vector<12x1xf32>
    %18 = math.rsqrt %17 : vector<12x1xf32>
    %19 = vector.broadcast %18 : vector<12x1xf32> to vector<12x32xf32>
    %20 = arith.mulf %15, %19 : vector<12x32xf32>
    %c0_7 = arith.constant 0 : index
    %c0_8 = arith.constant 0 : index
    %21 = vector.load %arg3[%c0_7, %c0_8] : memref<1x32xf32, #tpu.memory_space<vmem>>, vector<1x32xf32>
    %22 = vector.broadcast %21 : vector<1x32xf32> to vector<12x32xf32>
    %23 = arith.mulf %20, %22 : vector<12x32xf32>
    %c0_9 = arith.constant 0 : index
    %c0_10 = arith.constant 0 : index
    %24 = vector.load %arg4[%c0_9, %c0_10] : memref<1x32xf32, #tpu.memory_space<vmem>>, vector<1x32xf32>
    %25 = vector.broadcast %24 : vector<1x32xf32> to vector<12x32xf32>
    %26 = arith.addf %23, %25 : vector<12x32xf32>
    %c0_11 = arith.constant 0 : index
    %c0_12 = arith.constant 0 : index
    %27 = vector.load %arg5[%c0_11, %c0_12] : memref<12x32xf32, #tpu.memory_space<vmem>>, vector<12x32xf32>
    tpu.vector_store %arg5[%c0_11, %c0_12], %26 {strides = array<i32>} : memref<12x32xf32, #tpu.memory_space<vmem>>, vector<12x32xf32>,
    return
  }
  func.func @transform_0(%arg0: i32) -> (i32, i32) {
    %c0_i32 = arith.constant 0 : i32
    %c0_i32_0 = arith.constant 0 : i32
    return %arg0, %c0_i32 : i32, i32
  }
  func.func @transform_1(%arg0: i32) -> (i32, i32) {
    %c0_i32 = arith.constant 0 : i32
    %c0_i32_0 = arith.constant 0 : i32
    return %arg0, %c0_i32 : i32, i32
  }
  func.func @transform_2(%arg0: i32) -> (i32, i32) {
    %c0_i32 = arith.constant 0 : i32
    %c0_i32_0 = arith.constant 0 : i32
    %c0_i32_1 = arith.constant 0 : i32
    return %c0_i32, %c0_i32_0 : i32, i32
  }
  func.func @transform_3(%arg0: i32) -> (i32, i32) {
    %c0_i32 = arith.constant 0 : i32
    %c0_i32_0 = arith.constant 0 : i32
    %c0_i32_1 = arith.constant 0 : i32
    return %c0_i32, %c0_i32_0 : i32, i32
  }
  func.func @transform_4(%arg0: i32) -> (i32, i32) {
    %c0_i32 = arith.constant 0 : i32
    %c0_i32_0 = arith.constant 0 : i32
    return %arg0, %c0_i32 : i32, i32
  }
}

module attributes {stable_mosaic.version = 11 : i64} {
  func.func @_linear_kernel(%arg0: i32, %arg1: i32, %arg2: i32, %arg3: memref<12x32xf32, #tpu.memory_space<vmem>>, %arg4: memref<32x32xbf16, #tpu.memory_space<vmem>>, %arg5: memref<1x32xf32, #tpu.memory_space<vmem>>, %arg6: memref<12x32xf32, #tpu.memory_space<vmem>>, %arg7: memref<12x32xf32, #tpu.memory_space<vmem>>) attributes {dimension_semantics = [#tpu.dimension_semantics<parallel>, #tpu.dimension_semantics<parallel>, #tpu.dimension_semantics<arbitrary>], iteration_bounds = array<i64: 1, 1, 1>, scalar_prefetch = 0 : i64, scratch_operands = 1 : i64, tpu.core_type = #tpu.core_type<tc>, window_params = [{transform_indices = @transform_0, window_bounds = array<i64: 12, 32>}, {transform_indices = @transform_1, window_bounds = array<i64: 32, 32>}, {transform_indices = @transform_2, window_bounds = array<i64: 1, 32>}, {transform_indices = @transform_3, window_bounds = array<i64: 12, 32>}]} {
    %c0_i32 = arith.constant 0 : i32
    %0 = arith.cmpi eq, %arg2, %c0_i32 : i32
    %1 = arith.extui %0 : i1 to i32
    %c0_i32_0 = arith.constant 0 : i32
    %2 = arith.cmpi ne, %1, %c0_i32_0 : i32
    scf.if %2 {
      %cst_10 = arith.constant 0.000000e+00 : f32
      %13 = vector.broadcast %cst_10 : f32 to vector<12x32xf32>
      %c0_11 = arith.constant 0 : index
      %c0_12 = arith.constant 0 : index
      %14 = vector.load %arg7[%c0_11, %c0_12] : memref<12x32xf32, #tpu.memory_space<vmem>>, vector<12x32xf32>
      tpu.vector_store %arg7[%c0_11, %c0_12], %13 {strides = array<i32>} : memref<12x32xf32, #tpu.memory_space<vmem>>, vector<12x32xf32>,
    } else {
    }
    %c0 = arith.constant 0 : index
    %c0_1 = arith.constant 0 : index
    %3 = vector.load %arg7[%c0, %c0_1] : memref<12x32xf32, #tpu.memory_space<vmem>>, vector<12x32xf32>
    %c0_2 = arith.constant 0 : index
    %c0_3 = arith.constant 0 : index
    %4 = vector.load %arg3[%c0_2, %c0_3] : memref<12x32xf32, #tpu.memory_space<vmem>>, vector<12x32xf32>
    %5 = arith.truncf %4 : vector<12x32xf32> to vector<12x32xbf16>
    %c0_4 = arith.constant 0 : index
    %c0_5 = arith.constant 0 : index
    %6 = vector.load %arg4[%c0_4, %c0_5] : memref<32x32xbf16, #tpu.memory_space<vmem>>, vector<32x32xbf16>
    %cst = arith.constant dense<0.000000e+00> : vector<12x32xf32>
    %7 = tpu.matmul %5, %6, %cst {dimension_numbers = #tpu.dot_dimension_numbers<[1], [0], [0], [1], [0, 0, 1, 1], [], []>} : vector<12x32xbf16>, vector<32x32xbf16>, vector<12x32xf32> -> vector<12x32xf32>
    %8 = arith.addf %3, %7 : vector<12x32xf32>
    %c0_6 = arith.constant 0 : index
    %c0_7 = arith.constant 0 : index
    %9 = vector.load %arg7[%c0_6, %c0_7] : memref<12x32xf32, #tpu.memory_space<vmem>>, vector<12x32xf32>
    tpu.vector_store %arg7[%c0_6, %c0_7], %8 {strides = array<i32>} : memref<12x32xf32, #tpu.memory_space<vmem>>, vector<12x32xf32>,
    %c0_i32_8 = arith.constant 0 : i32
    %10 = arith.cmpi eq, %arg2, %c0_i32_8 : i32
    %11 = arith.extui %10 : i1 to i32
    %c0_i32_9 = arith.constant 0 : i32
    %12 = arith.cmpi ne, %11, %c0_i32_9 : i32
    scf.if %12 {
      %c0_10 = arith.constant 0 : index
      %c0_11 = arith.constant 0 : index
      %13 = vector.load %arg7[%c0_10, %c0_11] : memref<12x32xf32, #tpu.memory_space<vmem>>, vector<12x32xf32>
      %c0_12 = arith.constant 0 : index
      %c0_13 = arith.constant 0 : index
      %14 = vector.load %arg5[%c0_12, %c0_13] : memref<1x32xf32, #tpu.memory_space<vmem>>, vector<1x32xf32>
      %15 = vector.broadcast %14 : vector<1x32xf32> to vector<12x32xf32>
      %16 = arith.addf %13, %15 : vector<12x32xf32>
      %c0_14 = arith.constant 0 : index
      %c0_15 = arith.constant 0 : index
      %17 = vector.load %arg6[%c0_14, %c0_15] : memref<12x32xf32, #tpu.memory_space<vmem>>, vector<12x32xf32>
      tpu.vector_store %arg6[%c0_14, %c0_15], %16 {strides = array<i32>} : memref<12x32xf32, #tpu.memory_space<vmem>>, vector<12x32xf32>,
    } else {
    }
    return
  }
  func.func @transform_0(%arg0: i32, %arg1: i32, %arg2: i32) -> (i32, i32) {
    %c0_i32 = arith.constant 0 : i32
    return %arg0, %arg2 : i32, i32
  }
  func.func @transform_1(%arg0: i32, %arg1: i32, %arg2: i32) -> (i32, i32) {
    %c0_i32 = arith.constant 0 : i32
    return %arg2, %arg1 : i32, i32
  }
  func.func @transform_2(%arg0: i32, %arg1: i32, %arg2: i32) -> (i32, i32) {
    %c0_i32 = arith.constant 0 : i32
    %c0_i32_0 = arith.constant 0 : i32
    return %c0_i32, %arg1 : i32, i32
  }
  func.func @transform_3(%arg0: i32, %arg1: i32, %arg2: i32) -> (i32, i32) {
    %c0_i32 = arith.constant 0 : i32
    return %arg0, %arg1 : i32, i32
  }
}

module attributes {stable_mosaic.version = 11 : i64} {
  func.func @_sdpa_kernel(%arg0: i32, %arg1: memref<1x4x6x8xf32, #tpu.memory_space<vmem>>, %arg2: memref<1x4x6x8xf32, #tpu.memory_space<vmem>>, %arg3: memref<1x4x6x8xf32, #tpu.memory_space<vmem>>, %arg4: memref<6x6xf32, #tpu.memory_space<vmem>>, %arg5: memref<1x1x6xf32, #tpu.memory_space<vmem>>, %arg6: memref<1x4x6x8xf32, #tpu.memory_space<vmem>>) attributes {dimension_semantics = [#tpu.dimension_semantics<parallel>], iteration_bounds = array<i64: 2>, scalar_prefetch = 0 : i64, scratch_operands = 0 : i64, tpu.core_type = #tpu.core_type<tc>, window_params = [{transform_indices = @transform_0, window_bounds = array<i64: 1, 4, 6, 8>}, {transform_indices = @transform_1, window_bounds = array<i64: 1, 4, 6, 8>}, {transform_indices = @transform_2, window_bounds = array<i64: 1, 4, 6, 8>}, {pipeline_mode = #tpu.pipeline_mode<synchronous>, transform_indices = @transform_3, window_bounds = array<i64: 6, 6>}, {transform_indices = @transform_4, window_bounds = array<i64: 1, 1, 6>}, {transform_indices = @transform_5, window_bounds = array<i64: 1, 4, 6, 8>}]} {
    %c0 = arith.constant 0 : index
    %c0_0 = arith.constant 0 : index
    %c0_1 = arith.constant 0 : index
    %c0_2 = arith.constant 0 : index
    %0 = vector.load %arg1[%c0, %c0_0, %c0_1, %c0_2] : memref<1x4x6x8xf32, #tpu.memory_space<vmem>>, vector<1x4x6x8xf32>
    %1 = vector.shape_cast %0 : vector<1x4x6x8xf32> to vector<4x6x8xf32>
    %2 = arith.truncf %1 : vector<4x6x8xf32> to vector<4x6x8xbf16>
    %c0_3 = arith.constant 0 : index
    %c0_4 = arith.constant 0 : index
    %c0_5 = arith.constant 0 : index
    %c0_6 = arith.constant 0 : index
    %3 = vector.load %arg2[%c0_3, %c0_4, %c0_5, %c0_6] : memref<1x4x6x8xf32, #tpu.memory_space<vmem>>, vector<1x4x6x8xf32>
    %4 = vector.shape_cast %3 : vector<1x4x6x8xf32> to vector<4x6x8xf32>
    %5 = arith.truncf %4 : vector<4x6x8xf32> to vector<4x6x8xbf16>
    "tpu.trace_start"() <{level = 10 : i32, message = "hqd,hkd->hqk"}> : () -> ()
    %cst = arith.constant dense<0.000000e+00> : vector<4x6x6xf32>
    %6 = tpu.matmul %2, %5, %cst {dimension_numbers = #tpu.dot_dimension_numbers<[2], [2], [1], [1], [0, 0, 0, 1, 1, 1], [0], [0]>} : vector<4x6x8xbf16>, vector<4x6x8xbf16>, vector<4x6x6xf32> -> vector<4x6x6xf32>
    "tpu.trace_stop"() : () -> ()
    %c0_7 = arith.constant 0 : index
    %c0_8 = arith.constant 0 : index
    %7 = vector.load %arg4[%c0_7, %c0_8] : memref<6x6xf32, #tpu.memory_space<vmem>>, vector<6x6xf32>
    %8 = vector.shape_cast %7 : vector<6x6xf32> to vector<1x6x6xf32>
    %9 = vector.broadcast %8 : vector<1x6x6xf32> to vector<4x6x6xf32>
    %10 = arith.addf %6, %9 : vector<4x6x6xf32>
    %c0_9 = arith.constant 0 : index
    %c0_10 = arith.constant 0 : index
    %c0_11 = arith.constant 0 : index
    %11 = vector.load %arg5[%c0_9, %c0_10, %c0_11] : memref<1x1x6xf32, #tpu.memory_space<vmem>>, vector<1x1x6xf32>
    %12 = vector.shape_cast %11 : vector<1x1x6xf32> to vector<1x6xf32>
    %13 = vector.shape_cast %12 : vector<1x6xf32> to vector<1x1x6xf32>
    %14 = vector.broadcast %13 : vector<1x1x6xf32> to vector<4x6x6xf32>
    %15 = arith.addf %10, %14 : vector<4x6x6xf32>
    %cst_12 = arith.constant dense<0xFF800000> : vector<4x6xf32>
    %16 = vector.multi_reduction <maximumf>, %15, %cst_12 [2] : vector<4x6x6xf32> to vector<4x6xf32>
    %17 = vector.shape_cast %16 : vector<4x6xf32> to vector<4x6x1xf32>
    %18 = vector.broadcast %17 : vector<4x6x1xf32> to vector<4x6x6xf32>
    %19 = arith.subf %15, %18 : vector<4x6x6xf32>
    %20 = math.exp %19 : vector<4x6x6xf32>
    %cst_13 = arith.constant dense<0.000000e+00> : vector<4x6xf32>
    %21 = vector.multi_reduction <add>, %20, %cst_13 [2] : vector<4x6x6xf32> to vector<4x6xf32>
    %22 = vector.shape_cast %21 : vector<4x6xf32> to vector<4x6x1xf32>
    %23 = arith.truncf %20 : vector<4x6x6xf32> to vector<4x6x6xbf16>
    %c0_14 = arith.constant 0 : index
    %c0_15 = arith.constant 0 : index
    %c0_16 = arith.constant 0 : index
    %c0_17 = arith.constant 0 : index
    %24 = vector.load %arg3[%c0_14, %c0_15, %c0_16, %c0_17] : memref<1x4x6x8xf32, #tpu.memory_space<vmem>>, vector<1x4x6x8xf32>
    %25 = vector.shape_cast %24 : vector<1x4x6x8xf32> to vector<4x6x8xf32>
    %26 = arith.truncf %25 : vector<4x6x8xf32> to vector<4x6x8xbf16>
    "tpu.trace_start"() <{level = 10 : i32, message = "hqk,hkd->hqd"}> : () -> ()
    %cst_18 = arith.constant dense<0.000000e+00> : vector<4x6x8xf32>
    %27 = tpu.matmul %23, %26, %cst_18 {dimension_numbers = #tpu.dot_dimension_numbers<[2], [1], [1], [2], [0, 0, 0, 1, 1, 2], [0], [0]>} : vector<4x6x6xbf16>, vector<4x6x8xbf16>, vector<4x6x8xf32> -> vector<4x6x8xf32>
    "tpu.trace_stop"() : () -> ()
    %28 = tpu.reciprocal %22 {approx = true} : vector<4x6x1xf32> -> vector<4x6x1xf32>
    %29 = vector.broadcast %28 : vector<4x6x1xf32> to vector<4x6x8xf32>
    %30 = arith.mulf %27, %29 : vector<4x6x8xf32>
    %c0_19 = arith.constant 0 : index
    %c0_20 = arith.constant 0 : index
    %c0_21 = arith.constant 0 : index
    %c0_22 = arith.constant 0 : index
    %31 = vector.load %arg6[%c0_19, %c0_20, %c0_21, %c0_22] : memref<1x4x6x8xf32, #tpu.memory_space<vmem>>, vector<1x4x6x8xf32>
    %32 = vector.shape_cast %31 : vector<1x4x6x8xf32> to vector<4x6x8xf32>
    %33 = vector.shape_cast %30 : vector<4x6x8xf32> to vector<1x4x6x8xf32>
    tpu.vector_store %arg6[%c0_19, %c0_20, %c0_21, %c0_22], %33 {strides = array<i32>} : memref<1x4x6x8xf32, #tpu.memory_space<vmem>>, vector<1x4x6x8xf32>,
    return
  }
  func.func @transform_0(%arg0: i32) -> (i32, i32, i32, i32) {
    %c0_i32 = arith.constant 0 : i32
    %c0_i32_0 = arith.constant 0 : i32
    %c0_i32_1 = arith.constant 0 : i32
    %c0_i32_2 = arith.constant 0 : i32
    return %arg0, %c0_i32, %c0_i32_0, %c0_i32_1 : i32, i32, i32, i32
  }
  func.func @transform_1(%arg0: i32) -> (i32, i32, i32, i32) {
    %c0_i32 = arith.constant 0 : i32
    %c0_i32_0 = arith.constant 0 : i32
    %c0_i32_1 = arith.constant 0 : i32
    %c0_i32_2 = arith.constant 0 : i32
    return %arg0, %c0_i32, %c0_i32_0, %c0_i32_1 : i32, i32, i32, i32
  }
  func.func @transform_2(%arg0: i32) -> (i32, i32, i32, i32) {
    %c0_i32 = arith.constant 0 : i32
    %c0_i32_0 = arith.constant 0 : i32
    %c0_i32_1 = arith.constant 0 : i32
    %c0_i32_2 = arith.constant 0 : i32
    return %arg0, %c0_i32, %c0_i32_0, %c0_i32_1 : i32, i32, i32, i32
  }
  func.func @transform_3(%arg0: i32) -> (i32, i32) {
    %c0_i32 = arith.constant 0 : i32
    %c0_i32_0 = arith.constant 0 : i32
    %c0_i32_1 = arith.constant 0 : i32
    return %c0_i32, %c0_i32_0 : i32, i32
  }
  func.func @transform_4(%arg0: i32) -> (i32, i32, i32) {
    %c0_i32 = arith.constant 0 : i32
    %c0_i32_0 = arith.constant 0 : i32
    %c0_i32_1 = arith.constant 0 : i32
    return %arg0, %c0_i32, %c0_i32_0 : i32, i32, i32
  }
  func.func @transform_5(%arg0: i32) -> (i32, i32, i32, i32) {
    %c0_i32 = arith.constant 0 : i32
    %c0_i32_0 = arith.constant 0 : i32
    %c0_i32_1 = arith.constant 0 : i32
    %c0_i32_2 = arith.constant 0 : i32
    return %arg0, %c0_i32, %c0_i32_0, %c0_i32_1 : i32, i32, i32, i32
  }
}

module attributes {stable_mosaic.version = 11 : i64} {
  func.func @_linear_kernel(%arg0: i32, %arg1: i32, %arg2: i32, %arg3: memref<16x32xf32, #tpu.memory_space<vmem>>, %arg4: memref<32x96xbf16, #tpu.memory_space<vmem>>, %arg5: memref<1x96xf32, #tpu.memory_space<vmem>>, %arg6: memref<16x96xf32, #tpu.memory_space<vmem>>, %arg7: memref<16x96xf32, #tpu.memory_space<vmem>>) attributes {dimension_semantics = [#tpu.dimension_semantics<parallel>, #tpu.dimension_semantics<parallel>, #tpu.dimension_semantics<arbitrary>], iteration_bounds = array<i64: 1, 1, 1>, scalar_prefetch = 0 : i64, scratch_operands = 1 : i64, tpu.core_type = #tpu.core_type<tc>, window_params = [{transform_indices = @transform_0, window_bounds = array<i64: 16, 32>}, {transform_indices = @transform_1, window_bounds = array<i64: 32, 96>}, {transform_indices = @transform_2, window_bounds = array<i64: 1, 96>}, {transform_indices = @transform_3, window_bounds = array<i64: 16, 96>}]} {
    %c0_i32 = arith.constant 0 : i32
    %0 = arith.cmpi eq, %arg2, %c0_i32 : i32
    %1 = arith.extui %0 : i1 to i32
    %c0_i32_0 = arith.constant 0 : i32
    %2 = arith.cmpi ne, %1, %c0_i32_0 : i32
    scf.if %2 {
      %cst_10 = arith.constant 0.000000e+00 : f32
      %13 = vector.broadcast %cst_10 : f32 to vector<16x96xf32>
      %c0_11 = arith.constant 0 : index
      %c0_12 = arith.constant 0 : index
      %14 = vector.load %arg7[%c0_11, %c0_12] : memref<16x96xf32, #tpu.memory_space<vmem>>, vector<16x96xf32>
      tpu.vector_store %arg7[%c0_11, %c0_12], %13 {strides = array<i32>} : memref<16x96xf32, #tpu.memory_space<vmem>>, vector<16x96xf32>,
    } else {
    }
    %c0 = arith.constant 0 : index
    %c0_1 = arith.constant 0 : index
    %3 = vector.load %arg7[%c0, %c0_1] : memref<16x96xf32, #tpu.memory_space<vmem>>, vector<16x96xf32>
    %c0_2 = arith.constant 0 : index
    %c0_3 = arith.constant 0 : index
    %4 = vector.load %arg3[%c0_2, %c0_3] : memref<16x32xf32, #tpu.memory_space<vmem>>, vector<16x32xf32>
    %5 = arith.truncf %4 : vector<16x32xf32> to vector<16x32xbf16>
    %c0_4 = arith.constant 0 : index
    %c0_5 = arith.constant 0 : index
    %6 = vector.load %arg4[%c0_4, %c0_5] : memref<32x96xbf16, #tpu.memory_space<vmem>>, vector<32x96xbf16>
    %cst = arith.constant dense<0.000000e+00> : vector<16x96xf32>
    %7 = tpu.matmul %5, %6, %cst {dimension_numbers = #tpu.dot_dimension_numbers<[1], [0], [0], [1], [0, 0, 1, 1], [], []>} : vector<16x32xbf16>, vector<32x96xbf16>, vector<16x96xf32> -> vector<16x96xf32>
    %8 = arith.addf %3, %7 : vector<16x96xf32>
    %c0_6 = arith.constant 0 : index
    %c0_7 = arith.constant 0 : index
    %9 = vector.load %arg7[%c0_6, %c0_7] : memref<16x96xf32, #tpu.memory_space<vmem>>, vector<16x96xf32>
    tpu.vector_store %arg7[%c0_6, %c0_7], %8 {strides = array<i32>} : memref<16x96xf32, #tpu.memory_space<vmem>>, vector<16x96xf32>,
    %c0_i32_8 = arith.constant 0 : i32
    %10 = arith.cmpi eq, %arg2, %c0_i32_8 : i32
    %11 = arith.extui %10 : i1 to i32
    %c0_i32_9 = arith.constant 0 : i32
    %12 = arith.cmpi ne, %11, %c0_i32_9 : i32
    scf.if %12 {
      %c0_10 = arith.constant 0 : index
      %c0_11 = arith.constant 0 : index
      %13 = vector.load %arg7[%c0_10, %c0_11] : memref<16x96xf32, #tpu.memory_space<vmem>>, vector<16x96xf32>
      %c0_12 = arith.constant 0 : index
      %c0_13 = arith.constant 0 : index
      %14 = vector.load %arg5[%c0_12, %c0_13] : memref<1x96xf32, #tpu.memory_space<vmem>>, vector<1x96xf32>
      %15 = vector.broadcast %14 : vector<1x96xf32> to vector<16x96xf32>
      %16 = arith.addf %13, %15 : vector<16x96xf32>
      %c0_14 = arith.constant 0 : index
      %c0_15 = arith.constant 0 : index
      %17 = vector.load %arg6[%c0_14, %c0_15] : memref<16x96xf32, #tpu.memory_space<vmem>>, vector<16x96xf32>
      tpu.vector_store %arg6[%c0_14, %c0_15], %16 {strides = array<i32>} : memref<16x96xf32, #tpu.memory_space<vmem>>, vector<16x96xf32>,
    } else {
    }
    return
  }
  func.func @transform_0(%arg0: i32, %arg1: i32, %arg2: i32) -> (i32, i32) {
    %c0_i32 = arith.constant 0 : i32
    return %arg0, %arg2 : i32, i32
  }
  func.func @transform_1(%arg0: i32, %arg1: i32, %arg2: i32) -> (i32, i32) {
    %c0_i32 = arith.constant 0 : i32
    return %arg2, %arg1 : i32, i32
  }
  func.func @transform_2(%arg0: i32, %arg1: i32, %arg2: i32) -> (i32, i32) {
    %c0_i32 = arith.constant 0 : i32
    %c0_i32_0 = arith.constant 0 : i32
    return %c0_i32, %arg1 : i32, i32
  }
  func.func @transform_3(%arg0: i32, %arg1: i32, %arg2: i32) -> (i32, i32) {
    %c0_i32 = arith.constant 0 : i32
    return %arg0, %arg1 : i32, i32
  }
}

module attributes {stable_mosaic.version = 11 : i64} {
  func.func @_sdpa_kernel(%arg0: i32, %arg1: memref<1x4x8x8xf32, #tpu.memory_space<vmem>>, %arg2: memref<1x4x8x8xf32, #tpu.memory_space<vmem>>, %arg3: memref<1x4x8x8xf32, #tpu.memory_space<vmem>>, %arg4: memref<8x8xf32, #tpu.memory_space<vmem>>, %arg5: memref<1x1x8xf32, #tpu.memory_space<vmem>>, %arg6: memref<1x4x8x8xf32, #tpu.memory_space<vmem>>) attributes {dimension_semantics = [#tpu.dimension_semantics<parallel>], iteration_bounds = array<i64: 2>, scalar_prefetch = 0 : i64, scratch_operands = 0 : i64, tpu.core_type = #tpu.core_type<tc>, window_params = [{transform_indices = @transform_0, window_bounds = array<i64: 1, 4, 8, 8>}, {transform_indices = @transform_1, window_bounds = array<i64: 1, 4, 8, 8>}, {transform_indices = @transform_2, window_bounds = array<i64: 1, 4, 8, 8>}, {pipeline_mode = #tpu.pipeline_mode<synchronous>, transform_indices = @transform_3, window_bounds = array<i64: 8, 8>}, {transform_indices = @transform_4, window_bounds = array<i64: 1, 1, 8>}, {transform_indices = @transform_5, window_bounds = array<i64: 1, 4, 8, 8>}]} {
    %c0 = arith.constant 0 : index
    %c0_0 = arith.constant 0 : index
    %c0_1 = arith.constant 0 : index
    %c0_2 = arith.constant 0 : index
    %0 = vector.load %arg1[%c0, %c0_0, %c0_1, %c0_2] : memref<1x4x8x8xf32, #tpu.memory_space<vmem>>, vector<1x4x8x8xf32>
    %1 = vector.shape_cast %0 : vector<1x4x8x8xf32> to vector<4x8x8xf32>
    %2 = arith.truncf %1 : vector<4x8x8xf32> to vector<4x8x8xbf16>
    %c0_3 = arith.constant 0 : index
    %c0_4 = arith.constant 0 : index
    %c0_5 = arith.constant 0 : index
    %c0_6 = arith.constant 0 : index
    %3 = vector.load %arg2[%c0_3, %c0_4, %c0_5, %c0_6] : memref<1x4x8x8xf32, #tpu.memory_space<vmem>>, vector<1x4x8x8xf32>
    %4 = vector.shape_cast %3 : vector<1x4x8x8xf32> to vector<4x8x8xf32>
    %5 = arith.truncf %4 : vector<4x8x8xf32> to vector<4x8x8xbf16>
    "tpu.trace_start"() <{level = 10 : i32, message = "hqd,hkd->hqk"}> : () -> ()
    %cst = arith.constant dense<0.000000e+00> : vector<4x8x8xf32>
    %6 = tpu.matmul %2, %5, %cst {dimension_numbers = #tpu.dot_dimension_numbers<[2], [2], [1], [1], [0, 0, 0, 1, 1, 1], [0], [0]>} : vector<4x8x8xbf16>, vector<4x8x8xbf16>, vector<4x8x8xf32> -> vector<4x8x8xf32>
    "tpu.trace_stop"() : () -> ()
    %c0_7 = arith.constant 0 : index
    %c0_8 = arith.constant 0 : index
    %7 = vector.load %arg4[%c0_7, %c0_8] : memref<8x8xf32, #tpu.memory_space<vmem>>, vector<8x8xf32>
    %8 = vector.shape_cast %7 : vector<8x8xf32> to vector<1x8x8xf32>
    %9 = vector.broadcast %8 : vector<1x8x8xf32> to vector<4x8x8xf32>
    %10 = arith.addf %6, %9 : vector<4x8x8xf32>
    %c0_9 = arith.constant 0 : index
    %c0_10 = arith.constant 0 : index
    %c0_11 = arith.constant 0 : index
    %11 = vector.load %arg5[%c0_9, %c0_10, %c0_11] : memref<1x1x8xf32, #tpu.memory_space<vmem>>, vector<1x1x8xf32>
    %12 = vector.shape_cast %11 : vector<1x1x8xf32> to vector<1x8xf32>
    %13 = vector.shape_cast %12 : vector<1x8xf32> to vector<1x1x8xf32>
    %14 = vector.broadcast %13 : vector<1x1x8xf32> to vector<4x8x8xf32>
    %15 = arith.addf %10, %14 : vector<4x8x8xf32>
    %cst_12 = arith.constant dense<0xFF800000> : vector<4x8xf32>
    %16 = vector.multi_reduction <maximumf>, %15, %cst_12 [2] : vector<4x8x8xf32> to vector<4x8xf32>
    %17 = vector.shape_cast %16 : vector<4x8xf32> to vector<4x8x1xf32>
    %18 = vector.broadcast %17 : vector<4x8x1xf32> to vector<4x8x8xf32>
    %19 = arith.subf %15, %18 : vector<4x8x8xf32>
    %20 = math.exp %19 : vector<4x8x8xf32>
    %cst_13 = arith.constant dense<0.000000e+00> : vector<4x8xf32>
    %21 = vector.multi_reduction <add>, %20, %cst_13 [2] : vector<4x8x8xf32> to vector<4x8xf32>
    %22 = vector.shape_cast %21 : vector<4x8xf32> to vector<4x8x1xf32>
    %23 = arith.truncf %20 : vector<4x8x8xf32> to vector<4x8x8xbf16>
    %c0_14 = arith.constant 0 : index
    %c0_15 = arith.constant 0 : index
    %c0_16 = arith.constant 0 : index
    %c0_17 = arith.constant 0 : index
    %24 = vector.load %arg3[%c0_14, %c0_15, %c0_16, %c0_17] : memref<1x4x8x8xf32, #tpu.memory_space<vmem>>, vector<1x4x8x8xf32>
    %25 = vector.shape_cast %24 : vector<1x4x8x8xf32> to vector<4x8x8xf32>
    %26 = arith.truncf %25 : vector<4x8x8xf32> to vector<4x8x8xbf16>
    "tpu.trace_start"() <{level = 10 : i32, message = "hqk,hkd->hqd"}> : () -> ()
    %cst_18 = arith.constant dense<0.000000e+00> : vector<4x8x8xf32>
    %27 = tpu.matmul %23, %26, %cst_18 {dimension_numbers = #tpu.dot_dimension_numbers<[2], [1], [1], [2], [0, 0, 0, 1, 1, 2], [0], [0]>} : vector<4x8x8xbf16>, vector<4x8x8xbf16>, vector<4x8x8xf32> -> vector<4x8x8xf32>
    "tpu.trace_stop"() : () -> ()
    %28 = tpu.reciprocal %22 {approx = true} : vector<4x8x1xf32> -> vector<4x8x1xf32>
    %29 = vector.broadcast %28 : vector<4x8x1xf32> to vector<4x8x8xf32>
    %30 = arith.mulf %27, %29 : vector<4x8x8xf32>
    %c0_19 = arith.constant 0 : index
    %c0_20 = arith.constant 0 : index
    %c0_21 = arith.constant 0 : index
    %c0_22 = arith.constant 0 : index
    %31 = vector.load %arg6[%c0_19, %c0_20, %c0_21, %c0_22] : memref<1x4x8x8xf32, #tpu.memory_space<vmem>>, vector<1x4x8x8xf32>
    %32 = vector.shape_cast %31 : vector<1x4x8x8xf32> to vector<4x8x8xf32>
    %33 = vector.shape_cast %30 : vector<4x8x8xf32> to vector<1x4x8x8xf32>
    tpu.vector_store %arg6[%c0_19, %c0_20, %c0_21, %c0_22], %33 {strides = array<i32>} : memref<1x4x8x8xf32, #tpu.memory_space<vmem>>, vector<1x4x8x8xf32>,
    return
  }
  func.func @transform_0(%arg0: i32) -> (i32, i32, i32, i32) {
    %c0_i32 = arith.constant 0 : i32
    %c0_i32_0 = arith.constant 0 : i32
    %c0_i32_1 = arith.constant 0 : i32
    %c0_i32_2 = arith.constant 0 : i32
    return %arg0, %c0_i32, %c0_i32_0, %c0_i32_1 : i32, i32, i32, i32
  }
  func.func @transform_1(%arg0: i32) -> (i32, i32, i32, i32) {
    %c0_i32 = arith.constant 0 : i32
    %c0_i32_0 = arith.constant 0 : i32
    %c0_i32_1 = arith.constant 0 : i32
    %c0_i32_2 = arith.constant 0 : i32
    return %arg0, %c0_i32, %c0_i32_0, %c0_i32_1 : i32, i32, i32, i32
  }
  func.func @transform_2(%arg0: i32) -> (i32, i32, i32, i32) {
    %c0_i32 = arith.constant 0 : i32
    %c0_i32_0 = arith.constant 0 : i32
    %c0_i32_1 = arith.constant 0 : i32
    %c0_i32_2 = arith.constant 0 : i32
    return %arg0, %c0_i32, %c0_i32_0, %c0_i32_1 : i32, i32, i32, i32
  }
  func.func @transform_3(%arg0: i32) -> (i32, i32) {
    %c0_i32 = arith.constant 0 : i32
    %c0_i32_0 = arith.constant 0 : i32
    %c0_i32_1 = arith.constant 0 : i32
    return %c0_i32, %c0_i32_0 : i32, i32
  }
  func.func @transform_4(%arg0: i32) -> (i32, i32, i32) {
    %c0_i32 = arith.constant 0 : i32
    %c0_i32_0 = arith.constant 0 : i32
    %c0_i32_1 = arith.constant 0 : i32
    return %arg0, %c0_i32, %c0_i32_0 : i32, i32, i32
  }
  func.func @transform_5(%arg0: i32) -> (i32, i32, i32, i32) {
    %c0_i32 = arith.constant 0 : i32
    %c0_i32_0 = arith.constant 0 : i32
    %c0_i32_1 = arith.constant 0 : i32
    %c0_i32_2 = arith.constant 0 : i32
    return %arg0, %c0_i32, %c0_i32_0, %c0_i32_1 : i32, i32, i32, i32
  }
}

module attributes {stable_mosaic.version = 11 : i64} {
  func.func @_linear_kernel(%arg0: i32, %arg1: i32, %arg2: i32, %arg3: memref<16x32xf32, #tpu.memory_space<vmem>>, %arg4: memref<32x32xbf16, #tpu.memory_space<vmem>>, %arg5: memref<1x32xf32, #tpu.memory_space<vmem>>, %arg6: memref<16x32xf32, #tpu.memory_space<vmem>>, %arg7: memref<16x32xf32, #tpu.memory_space<vmem>>) attributes {dimension_semantics = [#tpu.dimension_semantics<parallel>, #tpu.dimension_semantics<parallel>, #tpu.dimension_semantics<arbitrary>], iteration_bounds = array<i64: 1, 1, 1>, scalar_prefetch = 0 : i64, scratch_operands = 1 : i64, tpu.core_type = #tpu.core_type<tc>, window_params = [{transform_indices = @transform_0, window_bounds = array<i64: 16, 32>}, {transform_indices = @transform_1, window_bounds = array<i64: 32, 32>}, {transform_indices = @transform_2, window_bounds = array<i64: 1, 32>}, {transform_indices = @transform_3, window_bounds = array<i64: 16, 32>}]} {
    %c0_i32 = arith.constant 0 : i32
    %0 = arith.cmpi eq, %arg2, %c0_i32 : i32
    %1 = arith.extui %0 : i1 to i32
    %c0_i32_0 = arith.constant 0 : i32
    %2 = arith.cmpi ne, %1, %c0_i32_0 : i32
    scf.if %2 {
      %cst_10 = arith.constant 0.000000e+00 : f32
      %13 = vector.broadcast %cst_10 : f32 to vector<16x32xf32>
      %c0_11 = arith.constant 0 : index
      %c0_12 = arith.constant 0 : index
      %14 = vector.load %arg7[%c0_11, %c0_12] : memref<16x32xf32, #tpu.memory_space<vmem>>, vector<16x32xf32>
      tpu.vector_store %arg7[%c0_11, %c0_12], %13 {strides = array<i32>} : memref<16x32xf32, #tpu.memory_space<vmem>>, vector<16x32xf32>,
    } else {
    }
    %c0 = arith.constant 0 : index
    %c0_1 = arith.constant 0 : index
    %3 = vector.load %arg7[%c0, %c0_1] : memref<16x32xf32, #tpu.memory_space<vmem>>, vector<16x32xf32>
    %c0_2 = arith.constant 0 : index
    %c0_3 = arith.constant 0 : index
    %4 = vector.load %arg3[%c0_2, %c0_3] : memref<16x32xf32, #tpu.memory_space<vmem>>, vector<16x32xf32>
    %5 = arith.truncf %4 : vector<16x32xf32> to vector<16x32xbf16>
    %c0_4 = arith.constant 0 : index
    %c0_5 = arith.constant 0 : index
    %6 = vector.load %arg4[%c0_4, %c0_5] : memref<32x32xbf16, #tpu.memory_space<vmem>>, vector<32x32xbf16>
    %cst = arith.constant dense<0.000000e+00> : vector<16x32xf32>
    %7 = tpu.matmul %5, %6, %cst {dimension_numbers = #tpu.dot_dimension_numbers<[1], [0], [0], [1], [0, 0, 1, 1], [], []>} : vector<16x32xbf16>, vector<32x32xbf16>, vector<16x32xf32> -> vector<16x32xf32>
    %8 = arith.addf %3, %7 : vector<16x32xf32>
    %c0_6 = arith.constant 0 : index
    %c0_7 = arith.constant 0 : index
    %9 = vector.load %arg7[%c0_6, %c0_7] : memref<16x32xf32, #tpu.memory_space<vmem>>, vector<16x32xf32>
    tpu.vector_store %arg7[%c0_6, %c0_7], %8 {strides = array<i32>} : memref<16x32xf32, #tpu.memory_space<vmem>>, vector<16x32xf32>,
    %c0_i32_8 = arith.constant 0 : i32
    %10 = arith.cmpi eq, %arg2, %c0_i32_8 : i32
    %11 = arith.extui %10 : i1 to i32
    %c0_i32_9 = arith.constant 0 : i32
    %12 = arith.cmpi ne, %11, %c0_i32_9 : i32
    scf.if %12 {
      %c0_10 = arith.constant 0 : index
      %c0_11 = arith.constant 0 : index
      %13 = vector.load %arg7[%c0_10, %c0_11] : memref<16x32xf32, #tpu.memory_space<vmem>>, vector<16x32xf32>
      %c0_12 = arith.constant 0 : index
      %c0_13 = arith.constant 0 : index
      %14 = vector.load %arg5[%c0_12, %c0_13] : memref<1x32xf32, #tpu.memory_space<vmem>>, vector<1x32xf32>
      %15 = vector.broadcast %14 : vector<1x32xf32> to vector<16x32xf32>
      %16 = arith.addf %13, %15 : vector<16x32xf32>
      %c0_14 = arith.constant 0 : index
      %c0_15 = arith.constant 0 : index
      %17 = vector.load %arg6[%c0_14, %c0_15] : memref<16x32xf32, #tpu.memory_space<vmem>>, vector<16x32xf32>
      tpu.vector_store %arg6[%c0_14, %c0_15], %16 {strides = array<i32>} : memref<16x32xf32, #tpu.memory_space<vmem>>, vector<16x32xf32>,
    } else {
    }
    return
  }
  func.func @transform_0(%arg0: i32, %arg1: i32, %arg2: i32) -> (i32, i32) {
    %c0_i32 = arith.constant 0 : i32
    return %arg0, %arg2 : i32, i32
  }
  func.func @transform_1(%arg0: i32, %arg1: i32, %arg2: i32) -> (i32, i32) {
    %c0_i32 = arith.constant 0 : i32
    return %arg2, %arg1 : i32, i32
  }
  func.func @transform_2(%arg0: i32, %arg1: i32, %arg2: i32) -> (i32, i32) {
    %c0_i32 = arith.constant 0 : i32
    %c0_i32_0 = arith.constant 0 : i32
    return %c0_i32, %arg1 : i32, i32
  }
  func.func @transform_3(%arg0: i32, %arg1: i32, %arg2: i32) -> (i32, i32) {
    %c0_i32 = arith.constant 0 : i32
    return %arg0, %arg1 : i32, i32
  }
}

module attributes {stable_mosaic.version = 11 : i64} {
  func.func @_add_ln_kernel(%arg0: i32, %arg1: memref<16x32xf32, #tpu.memory_space<vmem>>, %arg2: memref<16x32xf32, #tpu.memory_space<vmem>>, %arg3: memref<1x32xf32, #tpu.memory_space<vmem>>, %arg4: memref<1x32xf32, #tpu.memory_space<vmem>>, %arg5: memref<16x32xf32, #tpu.memory_space<vmem>>) attributes {dimension_semantics = [#tpu.dimension_semantics<parallel>], iteration_bounds = array<i64: 1>, scalar_prefetch = 0 : i64, scratch_operands = 0 : i64, tpu.core_type = #tpu.core_type<tc>, window_params = [{transform_indices = @transform_0, window_bounds = array<i64: 16, 32>}, {transform_indices = @transform_1, window_bounds = array<i64: 16, 32>}, {pipeline_mode = #tpu.pipeline_mode<synchronous>, transform_indices = @transform_2, window_bounds = array<i64: 1, 32>}, {pipeline_mode = #tpu.pipeline_mode<synchronous>, transform_indices = @transform_3, window_bounds = array<i64: 1, 32>}, {transform_indices = @transform_4, window_bounds = array<i64: 16, 32>}]} {
    %c0 = arith.constant 0 : index
    %c0_0 = arith.constant 0 : index
    %0 = vector.load %arg1[%c0, %c0_0] : memref<16x32xf32, #tpu.memory_space<vmem>>, vector<16x32xf32>
    %c0_1 = arith.constant 0 : index
    %c0_2 = arith.constant 0 : index
    %1 = vector.load %arg2[%c0_1, %c0_2] : memref<16x32xf32, #tpu.memory_space<vmem>>, vector<16x32xf32>
    %2 = arith.addf %0, %1 : vector<16x32xf32>
    %cst = arith.constant dense<0.000000e+00> : vector<16xf32>
    %3 = vector.multi_reduction <add>, %2, %cst [1] : vector<16x32xf32> to vector<16xf32>
    %4 = vector.shape_cast %3 : vector<16xf32> to vector<16x1xf32>
    %cst_3 = arith.constant 3.200000e+01 : f32
    %5 = vector.broadcast %cst_3 : f32 to vector<16x1xf32>
    %6 = arith.divf %4, %5 : vector<16x1xf32>
    %7 = vector.broadcast %6 : vector<16x1xf32> to vector<16x32xf32>
    %8 = arith.subf %2, %7 : vector<16x32xf32>
    %9 = arith.mulf %8, %8 : vector<16x32xf32>
    %cst_4 = arith.constant dense<0.000000e+00> : vector<16xf32>
    %10 = vector.multi_reduction <add>, %9, %cst_4 [1] : vector<16x32xf32> to vector<16xf32>
    %11 = vector.shape_cast %10 : vector<16xf32> to vector<16x1xf32>
    %cst_5 = arith.constant 3.200000e+01 : f32
    %12 = vector.broadcast %cst_5 : f32 to vector<16x1xf32>
    %13 = arith.divf %11, %12 : vector<16x1xf32>
    %14 = vector.broadcast %6 : vector<16x1xf32> to vector<16x32xf32>
    %15 = arith.subf %2, %14 : vector<16x32xf32>
    %cst_6 = arith.constant 9.99999974E-6 : f32
    %16 = vector.broadcast %cst_6 : f32 to vector<16x1xf32>
    %17 = arith.addf %13, %16 : vector<16x1xf32>
    %18 = math.rsqrt %17 : vector<16x1xf32>
    %19 = vector.broadcast %18 : vector<16x1xf32> to vector<16x32xf32>
    %20 = arith.mulf %15, %19 : vector<16x32xf32>
    %c0_7 = arith.constant 0 : index
    %c0_8 = arith.constant 0 : index
    %21 = vector.load %arg3[%c0_7, %c0_8] : memref<1x32xf32, #tpu.memory_space<vmem>>, vector<1x32xf32>
    %22 = vector.broadcast %21 : vector<1x32xf32> to vector<16x32xf32>
    %23 = arith.mulf %20, %22 : vector<16x32xf32>
    %c0_9 = arith.constant 0 : index
    %c0_10 = arith.constant 0 : index
    %24 = vector.load %arg4[%c0_9, %c0_10] : memref<1x32xf32, #tpu.memory_space<vmem>>, vector<1x32xf32>
    %25 = vector.broadcast %24 : vector<1x32xf32> to vector<16x32xf32>
    %26 = arith.addf %23, %25 : vector<16x32xf32>
    %c0_11 = arith.constant 0 : index
    %c0_12 = arith.constant 0 : index
    %27 = vector.load %arg5[%c0_11, %c0_12] : memref<16x32xf32, #tpu.memory_space<vmem>>, vector<16x32xf32>
    tpu.vector_store %arg5[%c0_11, %c0_12], %26 {strides = array<i32>} : memref<16x32xf32, #tpu.memory_space<vmem>>, vector<16x32xf32>,
    return
  }
  func.func @transform_0(%arg0: i32) -> (i32, i32) {
    %c0_i32 = arith.constant 0 : i32
    %c0_i32_0 = arith.constant 0 : i32
    return %arg0, %c0_i32 : i32, i32
  }
  func.func @transform_1(%arg0: i32) -> (i32, i32) {
    %c0_i32 = arith.constant 0 : i32
    %c0_i32_0 = arith.constant 0 : i32
    return %arg0, %c0_i32 : i32, i32
  }
  func.func @transform_2(%arg0: i32) -> (i32, i32) {
    %c0_i32 = arith.constant 0 : i32
    %c0_i32_0 = arith.constant 0 : i32
    %c0_i32_1 = arith.constant 0 : i32
    return %c0_i32, %c0_i32_0 : i32, i32
  }
  func.func @transform_3(%arg0: i32) -> (i32, i32) {
    %c0_i32 = arith.constant 0 : i32
    %c0_i32_0 = arith.constant 0 : i32
    %c0_i32_1 = arith.constant 0 : i32
    return %c0_i32, %c0_i32_0 : i32, i32
  }
  func.func @transform_4(%arg0: i32) -> (i32, i32) {
    %c0_i32 = arith.constant 0 : i32
    %c0_i32_0 = arith.constant 0 : i32
    return %arg0, %c0_i32 : i32, i32
  }
}

module attributes {stable_mosaic.version = 11 : i64} {
  func.func @_ffn_kernel(%arg0: i32, %arg1: memref<16x32xf32, #tpu.memory_space<vmem>>, %arg2: memref<32x64xbf16, #tpu.memory_space<vmem>>, %arg3: memref<1x64xf32, #tpu.memory_space<vmem>>, %arg4: memref<64x32xbf16, #tpu.memory_space<vmem>>, %arg5: memref<1x32xf32, #tpu.memory_space<vmem>>, %arg6: memref<16x32xf32, #tpu.memory_space<vmem>>) attributes {dimension_semantics = [#tpu.dimension_semantics<parallel>], iteration_bounds = array<i64: 1>, scalar_prefetch = 0 : i64, scratch_operands = 0 : i64, tpu.core_type = #tpu.core_type<tc>, window_params = [{transform_indices = @transform_0, window_bounds = array<i64: 16, 32>}, {pipeline_mode = #tpu.pipeline_mode<synchronous>, transform_indices = @transform_1, window_bounds = array<i64: 32, 64>}, {pipeline_mode = #tpu.pipeline_mode<synchronous>, transform_indices = @transform_2, window_bounds = array<i64: 1, 64>}, {pipeline_mode = #tpu.pipeline_mode<synchronous>, transform_indices = @transform_3, window_bounds = array<i64: 64, 32>}, {pipeline_mode = #tpu.pipeline_mode<synchronous>, transform_indices = @transform_4, window_bounds = array<i64: 1, 32>}, {transform_indices = @transform_5, window_bounds = array<i64: 16, 32>}]} {
    %c0 = arith.constant 0 : index
    %c0_0 = arith.constant 0 : index
    %0 = vector.load %arg1[%c0, %c0_0] : memref<16x32xf32, #tpu.memory_space<vmem>>, vector<16x32xf32>
    %1 = arith.truncf %0 : vector<16x32xf32> to vector<16x32xbf16>
    %c0_1 = arith.constant 0 : index
    %c0_2 = arith.constant 0 : index
    %2 = vector.load %arg2[%c0_1, %c0_2] : memref<32x64xbf16, #tpu.memory_space<vmem>>, vector<32x64xbf16>
    %cst = arith.constant dense<0.000000e+00> : vector<16x64xf32>
    %3 = tpu.matmul %1, %2, %cst {dimension_numbers = #tpu.dot_dimension_numbers<[1], [0], [0], [1], [0, 0, 1, 1], [], []>} : vector<16x32xbf16>, vector<32x64xbf16>, vector<16x64xf32> -> vector<16x64xf32>
    %c0_3 = arith.constant 0 : index
    %c0_4 = arith.constant 0 : index
    %4 = vector.load %arg3[%c0_3, %c0_4] : memref<1x64xf32, #tpu.memory_space<vmem>>, vector<1x64xf32>
    %5 = vector.broadcast %4 : vector<1x64xf32> to vector<16x64xf32>
    %6 = arith.addf %3, %5 : vector<16x64xf32>
    %cst_5 = arith.constant 0.000000e+00 : f32
    %7 = vector.broadcast %cst_5 : f32 to vector<16x64xf32>
    %8 = arith.maximumf %6, %7 : vector<16x64xf32>
    %9 = arith.truncf %8 : vector<16x64xf32> to vector<16x64xbf16>
    %c0_6 = arith.constant 0 : index
    %c0_7 = arith.constant 0 : index
    %10 = vector.load %arg4[%c0_6, %c0_7] : memref<64x32xbf16, #tpu.memory_space<vmem>>, vector<64x32xbf16>
    %cst_8 = arith.constant dense<0.000000e+00> : vector<16x32xf32>
    %11 = tpu.matmul %9, %10, %cst_8 {dimension_numbers = #tpu.dot_dimension_numbers<[1], [0], [0], [1], [0, 0, 1, 1], [], []>} : vector<16x64xbf16>, vector<64x32xbf16>, vector<16x32xf32> -> vector<16x32xf32>
    %c0_9 = arith.constant 0 : index
    %c0_10 = arith.constant 0 : index
    %12 = vector.load %arg5[%c0_9, %c0_10] : memref<1x32xf32, #tpu.memory_space<vmem>>, vector<1x32xf32>
    %13 = vector.broadcast %12 : vector<1x32xf32> to vector<16x32xf32>
    %14 = arith.addf %11, %13 : vector<16x32xf32>
    %c0_11 = arith.constant 0 : index
    %c0_12 = arith.constant 0 : index
    %15 = vector.load %arg6[%c0_11, %c0_12] : memref<16x32xf32, #tpu.memory_space<vmem>>, vector<16x32xf32>
    tpu.vector_store %arg6[%c0_11, %c0_12], %14 {strides = array<i32>} : memref<16x32xf32, #tpu.memory_space<vmem>>, vector<16x32xf32>,
    return
  }
  func.func @transform_0(%arg0: i32) -> (i32, i32) {
    %c0_i32 = arith.constant 0 : i32
    %c0_i32_0 = arith.constant 0 : i32
    return %arg0, %c0_i32 : i32, i32
  }
  func.func @transform_1(%arg0: i32) -> (i32, i32) {
    %c0_i32 = arith.constant 0 : i32
    %c0_i32_0 = arith.constant 0 : i32
    %c0_i32_1 = arith.constant 0 : i32
    return %c0_i32, %c0_i32_0 : i32, i32
  }
  func.func @transform_2(%arg0: i32) -> (i32, i32) {
    %c0_i32 = arith.constant 0 : i32
    %c0_i32_0 = arith.constant 0 : i32
    %c0_i32_1 = arith.constant 0 : i32
    return %c0_i32, %c0_i32_0 : i32, i32
  }
  func.func @transform_3(%arg0: i32) -> (i32, i32) {
    %c0_i32 = arith.constant 0 : i32
    %c0_i32_0 = arith.constant 0 : i32
    %c0_i32_1 = arith.constant 0 : i32
    return %c0_i32, %c0_i32_0 : i32, i32
  }
  func.func @transform_4(%arg0: i32) -> (i32, i32) {
    %c0_i32 = arith.constant 0 : i32
    %c0_i32_0 = arith.constant 0 : i32
    %c0_i32_1 = arith.constant 0 : i32
    return %c0_i32, %c0_i32_0 : i32, i32
  }
  func.func @transform_5(%arg0: i32) -> (i32, i32) {
    %c0_i32 = arith.constant 0 : i32
    %c0_i32_0 = arith.constant 0 : i32
    return %arg0, %c0_i32 : i32, i32
  }
}

module attributes {stable_mosaic.version = 11 : i64} {
  func.func @_ln_kernel(%arg0: i32, %arg1: memref<16x32xf32, #tpu.memory_space<vmem>>, %arg2: memref<1x32xf32, #tpu.memory_space<vmem>>, %arg3: memref<1x32xf32, #tpu.memory_space<vmem>>, %arg4: memref<16x32xf32, #tpu.memory_space<vmem>>) attributes {dimension_semantics = [#tpu.dimension_semantics<parallel>], iteration_bounds = array<i64: 1>, scalar_prefetch = 0 : i64, scratch_operands = 0 : i64, tpu.core_type = #tpu.core_type<tc>, window_params = [{transform_indices = @transform_0, window_bounds = array<i64: 16, 32>}, {pipeline_mode = #tpu.pipeline_mode<synchronous>, transform_indices = @transform_1, window_bounds = array<i64: 1, 32>}, {pipeline_mode = #tpu.pipeline_mode<synchronous>, transform_indices = @transform_2, window_bounds = array<i64: 1, 32>}, {transform_indices = @transform_3, window_bounds = array<i64: 16, 32>}]} {
    %c0 = arith.constant 0 : index
    %c0_0 = arith.constant 0 : index
    %0 = vector.load %arg1[%c0, %c0_0] : memref<16x32xf32, #tpu.memory_space<vmem>>, vector<16x32xf32>
    %cst = arith.constant dense<0.000000e+00> : vector<16xf32>
    %1 = vector.multi_reduction <add>, %0, %cst [1] : vector<16x32xf32> to vector<16xf32>
    %2 = vector.shape_cast %1 : vector<16xf32> to vector<16x1xf32>
    %cst_1 = arith.constant 3.200000e+01 : f32
    %3 = vector.broadcast %cst_1 : f32 to vector<16x1xf32>
    %4 = arith.divf %2, %3 : vector<16x1xf32>
    %5 = vector.broadcast %4 : vector<16x1xf32> to vector<16x32xf32>
    %6 = arith.subf %0, %5 : vector<16x32xf32>
    %7 = arith.mulf %6, %6 : vector<16x32xf32>
    %cst_2 = arith.constant dense<0.000000e+00> : vector<16xf32>
    %8 = vector.multi_reduction <add>, %7, %cst_2 [1] : vector<16x32xf32> to vector<16xf32>
    %9 = vector.shape_cast %8 : vector<16xf32> to vector<16x1xf32>
    %cst_3 = arith.constant 3.200000e+01 : f32
    %10 = vector.broadcast %cst_3 : f32 to vector<16x1xf32>
    %11 = arith.divf %9, %10 : vector<16x1xf32>
    %12 = vector.broadcast %4 : vector<16x1xf32> to vector<16x32xf32>
    %13 = arith.subf %0, %12 : vector<16x32xf32>
    %cst_4 = arith.constant 9.99999974E-6 : f32
    %14 = vector.broadcast %cst_4 : f32 to vector<16x1xf32>
    %15 = arith.addf %11, %14 : vector<16x1xf32>
    %16 = math.rsqrt %15 : vector<16x1xf32>
    %17 = vector.broadcast %16 : vector<16x1xf32> to vector<16x32xf32>
    %18 = arith.mulf %13, %17 : vector<16x32xf32>
    %c0_5 = arith.constant 0 : index
    %c0_6 = arith.constant 0 : index
    %19 = vector.load %arg2[%c0_5, %c0_6] : memref<1x32xf32, #tpu.memory_space<vmem>>, vector<1x32xf32>
    %20 = vector.broadcast %19 : vector<1x32xf32> to vector<16x32xf32>
    %21 = arith.mulf %18, %20 : vector<16x32xf32>
    %c0_7 = arith.constant 0 : index
    %c0_8 = arith.constant 0 : index
    %22 = vector.load %arg3[%c0_7, %c0_8] : memref<1x32xf32, #tpu.memory_space<vmem>>, vector<1x32xf32>
    %23 = vector.broadcast %22 : vector<1x32xf32> to vector<16x32xf32>
    %24 = arith.addf %21, %23 : vector<16x32xf32>
    %c0_9 = arith.constant 0 : index
    %c0_10 = arith.constant 0 : index
    %25 = vector.load %arg4[%c0_9, %c0_10] : memref<16x32xf32, #tpu.memory_space<vmem>>, vector<16x32xf32>
    tpu.vector_store %arg4[%c0_9, %c0_10], %24 {strides = array<i32>} : memref<16x32xf32, #tpu.memory_space<vmem>>, vector<16x32xf32>,
    return
  }
  func.func @transform_0(%arg0: i32) -> (i32, i32) {
    %c0_i32 = arith.constant 0 : i32
    %c0_i32_0 = arith.constant 0 : i32
    return %arg0, %c0_i32 : i32, i32
  }
  func.func @transform_1(%arg0: i32) -> (i32, i32) {
    %c0_i32 = arith.constant 0 : i32
    %c0_i32_0 = arith.constant 0 : i32
    %c0_i32_1 = arith.constant 0 : i32
    return %c0_i32, %c0_i32_0 : i32, i32
  }
  func.func @transform_2(%arg0: i32) -> (i32, i32) {
    %c0_i32 = arith.constant 0 : i32
    %c0_i32_0 = arith.constant 0 : i32
    %c0_i32_1 = arith.constant 0 : i32
    return %c0_i32, %c0_i32_0 : i32, i32
  }
  func.func @transform_3(%arg0: i32) -> (i32, i32) {
    %c0_i32 = arith.constant 0 : i32
    %c0_i32_0 = arith.constant 0 : i32
    return %arg0, %c0_i32 : i32, i32
  }
}

module attributes {stable_mosaic.version = 11 : i64} {
  func.func @_linear_kernel(%arg0: i32, %arg1: i32, %arg2: i32, %arg3: memref<16x32xf32, #tpu.memory_space<vmem>>, %arg4: memref<32x64xbf16, #tpu.memory_space<vmem>>, %arg5: memref<1x64xf32, #tpu.memory_space<vmem>>, %arg6: memref<16x64xf32, #tpu.memory_space<vmem>>, %arg7: memref<16x64xf32, #tpu.memory_space<vmem>>) attributes {dimension_semantics = [#tpu.dimension_semantics<parallel>, #tpu.dimension_semantics<parallel>, #tpu.dimension_semantics<arbitrary>], iteration_bounds = array<i64: 1, 1, 1>, scalar_prefetch = 0 : i64, scratch_operands = 1 : i64, tpu.core_type = #tpu.core_type<tc>, window_params = [{transform_indices = @transform_0, window_bounds = array<i64: 16, 32>}, {transform_indices = @transform_1, window_bounds = array<i64: 32, 64>}, {transform_indices = @transform_2, window_bounds = array<i64: 1, 64>}, {transform_indices = @transform_3, window_bounds = array<i64: 16, 64>}]} {
    %c0_i32 = arith.constant 0 : i32
    %0 = arith.cmpi eq, %arg2, %c0_i32 : i32
    %1 = arith.extui %0 : i1 to i32
    %c0_i32_0 = arith.constant 0 : i32
    %2 = arith.cmpi ne, %1, %c0_i32_0 : i32
    scf.if %2 {
      %cst_10 = arith.constant 0.000000e+00 : f32
      %13 = vector.broadcast %cst_10 : f32 to vector<16x64xf32>
      %c0_11 = arith.constant 0 : index
      %c0_12 = arith.constant 0 : index
      %14 = vector.load %arg7[%c0_11, %c0_12] : memref<16x64xf32, #tpu.memory_space<vmem>>, vector<16x64xf32>
      tpu.vector_store %arg7[%c0_11, %c0_12], %13 {strides = array<i32>} : memref<16x64xf32, #tpu.memory_space<vmem>>, vector<16x64xf32>,
    } else {
    }
    %c0 = arith.constant 0 : index
    %c0_1 = arith.constant 0 : index
    %3 = vector.load %arg7[%c0, %c0_1] : memref<16x64xf32, #tpu.memory_space<vmem>>, vector<16x64xf32>
    %c0_2 = arith.constant 0 : index
    %c0_3 = arith.constant 0 : index
    %4 = vector.load %arg3[%c0_2, %c0_3] : memref<16x32xf32, #tpu.memory_space<vmem>>, vector<16x32xf32>
    %5 = arith.truncf %4 : vector<16x32xf32> to vector<16x32xbf16>
    %c0_4 = arith.constant 0 : index
    %c0_5 = arith.constant 0 : index
    %6 = vector.load %arg4[%c0_4, %c0_5] : memref<32x64xbf16, #tpu.memory_space<vmem>>, vector<32x64xbf16>
    %cst = arith.constant dense<0.000000e+00> : vector<16x64xf32>
    %7 = tpu.matmul %5, %6, %cst {dimension_numbers = #tpu.dot_dimension_numbers<[1], [0], [0], [1], [0, 0, 1, 1], [], []>} : vector<16x32xbf16>, vector<32x64xbf16>, vector<16x64xf32> -> vector<16x64xf32>
    %8 = arith.addf %3, %7 : vector<16x64xf32>
    %c0_6 = arith.constant 0 : index
    %c0_7 = arith.constant 0 : index
    %9 = vector.load %arg7[%c0_6, %c0_7] : memref<16x64xf32, #tpu.memory_space<vmem>>, vector<16x64xf32>
    tpu.vector_store %arg7[%c0_6, %c0_7], %8 {strides = array<i32>} : memref<16x64xf32, #tpu.memory_space<vmem>>, vector<16x64xf32>,
    %c0_i32_8 = arith.constant 0 : i32
    %10 = arith.cmpi eq, %arg2, %c0_i32_8 : i32
    %11 = arith.extui %10 : i1 to i32
    %c0_i32_9 = arith.constant 0 : i32
    %12 = arith.cmpi ne, %11, %c0_i32_9 : i32
    scf.if %12 {
      %c0_10 = arith.constant 0 : index
      %c0_11 = arith.constant 0 : index
      %13 = vector.load %arg7[%c0_10, %c0_11] : memref<16x64xf32, #tpu.memory_space<vmem>>, vector<16x64xf32>
      %c0_12 = arith.constant 0 : index
      %c0_13 = arith.constant 0 : index
      %14 = vector.load %arg5[%c0_12, %c0_13] : memref<1x64xf32, #tpu.memory_space<vmem>>, vector<1x64xf32>
      %15 = vector.broadcast %14 : vector<1x64xf32> to vector<16x64xf32>
      %16 = arith.addf %13, %15 : vector<16x64xf32>
      %c0_14 = arith.constant 0 : index
      %c0_15 = arith.constant 0 : index
      %17 = vector.load %arg6[%c0_14, %c0_15] : memref<16x64xf32, #tpu.memory_space<vmem>>, vector<16x64xf32>
      tpu.vector_store %arg6[%c0_14, %c0_15], %16 {strides = array<i32>} : memref<16x64xf32, #tpu.memory_space<vmem>>, vector<16x64xf32>,
    } else {
    }
    return
  }
  func.func @transform_0(%arg0: i32, %arg1: i32, %arg2: i32) -> (i32, i32) {
    %c0_i32 = arith.constant 0 : i32
    return %arg0, %arg2 : i32, i32
  }
  func.func @transform_1(%arg0: i32, %arg1: i32, %arg2: i32) -> (i32, i32) {
    %c0_i32 = arith.constant 0 : i32
    return %arg2, %arg1 : i32, i32
  }
  func.func @transform_2(%arg0: i32, %arg1: i32, %arg2: i32) -> (i32, i32) {
    %c0_i32 = arith.constant 0 : i32
    %c0_i32_0 = arith.constant 0 : i32
    return %c0_i32, %arg1 : i32, i32
  }
  func.func @transform_3(%arg0: i32, %arg1: i32, %arg2: i32) -> (i32, i32) {
    %c0_i32 = arith.constant 0 : i32
    return %arg0, %arg1 : i32, i32
  }
}

module attributes {stable_mosaic.version = 11 : i64} {
  func.func @_sdpa_kernel(%arg0: i32, %arg1: memref<1x4x6x8xf32, #tpu.memory_space<vmem>>, %arg2: memref<1x4x8x8xf32, #tpu.memory_space<vmem>>, %arg3: memref<1x4x8x8xf32, #tpu.memory_space<vmem>>, %arg4: memref<6x8xf32, #tpu.memory_space<vmem>>, %arg5: memref<1x1x8xf32, #tpu.memory_space<vmem>>, %arg6: memref<1x4x6x8xf32, #tpu.memory_space<vmem>>) attributes {dimension_semantics = [#tpu.dimension_semantics<parallel>], iteration_bounds = array<i64: 2>, scalar_prefetch = 0 : i64, scratch_operands = 0 : i64, tpu.core_type = #tpu.core_type<tc>, window_params = [{transform_indices = @transform_0, window_bounds = array<i64: 1, 4, 6, 8>}, {transform_indices = @transform_1, window_bounds = array<i64: 1, 4, 8, 8>}, {transform_indices = @transform_2, window_bounds = array<i64: 1, 4, 8, 8>}, {pipeline_mode = #tpu.pipeline_mode<synchronous>, transform_indices = @transform_3, window_bounds = array<i64: 6, 8>}, {transform_indices = @transform_4, window_bounds = array<i64: 1, 1, 8>}, {transform_indices = @transform_5, window_bounds = array<i64: 1, 4, 6, 8>}]} {
    %c0 = arith.constant 0 : index
    %c0_0 = arith.constant 0 : index
    %c0_1 = arith.constant 0 : index
    %c0_2 = arith.constant 0 : index
    %0 = vector.load %arg1[%c0, %c0_0, %c0_1, %c0_2] : memref<1x4x6x8xf32, #tpu.memory_space<vmem>>, vector<1x4x6x8xf32>
    %1 = vector.shape_cast %0 : vector<1x4x6x8xf32> to vector<4x6x8xf32>
    %2 = arith.truncf %1 : vector<4x6x8xf32> to vector<4x6x8xbf16>
    %c0_3 = arith.constant 0 : index
    %c0_4 = arith.constant 0 : index
    %c0_5 = arith.constant 0 : index
    %c0_6 = arith.constant 0 : index
    %3 = vector.load %arg2[%c0_3, %c0_4, %c0_5, %c0_6] : memref<1x4x8x8xf32, #tpu.memory_space<vmem>>, vector<1x4x8x8xf32>
    %4 = vector.shape_cast %3 : vector<1x4x8x8xf32> to vector<4x8x8xf32>
    %5 = arith.truncf %4 : vector<4x8x8xf32> to vector<4x8x8xbf16>
    "tpu.trace_start"() <{level = 10 : i32, message = "hqd,hkd->hqk"}> : () -> ()
    %cst = arith.constant dense<0.000000e+00> : vector<4x6x8xf32>
    %6 = tpu.matmul %2, %5, %cst {dimension_numbers = #tpu.dot_dimension_numbers<[2], [2], [1], [1], [0, 0, 0, 1, 1, 1], [0], [0]>} : vector<4x6x8xbf16>, vector<4x8x8xbf16>, vector<4x6x8xf32> -> vector<4x6x8xf32>
    "tpu.trace_stop"() : () -> ()
    %c0_7 = arith.constant 0 : index
    %c0_8 = arith.constant 0 : index
    %7 = vector.load %arg4[%c0_7, %c0_8] : memref<6x8xf32, #tpu.memory_space<vmem>>, vector<6x8xf32>
    %8 = vector.shape_cast %7 : vector<6x8xf32> to vector<1x6x8xf32>
    %9 = vector.broadcast %8 : vector<1x6x8xf32> to vector<4x6x8xf32>
    %10 = arith.addf %6, %9 : vector<4x6x8xf32>
    %c0_9 = arith.constant 0 : index
    %c0_10 = arith.constant 0 : index
    %c0_11 = arith.constant 0 : index
    %11 = vector.load %arg5[%c0_9, %c0_10, %c0_11] : memref<1x1x8xf32, #tpu.memory_space<vmem>>, vector<1x1x8xf32>
    %12 = vector.shape_cast %11 : vector<1x1x8xf32> to vector<1x8xf32>
    %13 = vector.shape_cast %12 : vector<1x8xf32> to vector<1x1x8xf32>
    %14 = vector.broadcast %13 : vector<1x1x8xf32> to vector<4x6x8xf32>
    %15 = arith.addf %10, %14 : vector<4x6x8xf32>
    %cst_12 = arith.constant dense<0xFF800000> : vector<4x6xf32>
    %16 = vector.multi_reduction <maximumf>, %15, %cst_12 [2] : vector<4x6x8xf32> to vector<4x6xf32>
    %17 = vector.shape_cast %16 : vector<4x6xf32> to vector<4x6x1xf32>
    %18 = vector.broadcast %17 : vector<4x6x1xf32> to vector<4x6x8xf32>
    %19 = arith.subf %15, %18 : vector<4x6x8xf32>
    %20 = math.exp %19 : vector<4x6x8xf32>
    %cst_13 = arith.constant dense<0.000000e+00> : vector<4x6xf32>
    %21 = vector.multi_reduction <add>, %20, %cst_13 [2] : vector<4x6x8xf32> to vector<4x6xf32>
    %22 = vector.shape_cast %21 : vector<4x6xf32> to vector<4x6x1xf32>
    %23 = arith.truncf %20 : vector<4x6x8xf32> to vector<4x6x8xbf16>
    %c0_14 = arith.constant 0 : index
    %c0_15 = arith.constant 0 : index
    %c0_16 = arith.constant 0 : index
    %c0_17 = arith.constant 0 : index
    %24 = vector.load %arg3[%c0_14, %c0_15, %c0_16, %c0_17] : memref<1x4x8x8xf32, #tpu.memory_space<vmem>>, vector<1x4x8x8xf32>
    %25 = vector.shape_cast %24 : vector<1x4x8x8xf32> to vector<4x8x8xf32>
    %26 = arith.truncf %25 : vector<4x8x8xf32> to vector<4x8x8xbf16>
    "tpu.trace_start"() <{level = 10 : i32, message = "hqk,hkd->hqd"}> : () -> ()
    %cst_18 = arith.constant dense<0.000000e+00> : vector<4x6x8xf32>
    %27 = tpu.matmul %23, %26, %cst_18 {dimension_numbers = #tpu.dot_dimension_numbers<[2], [1], [1], [2], [0, 0, 0, 1, 1, 2], [0], [0]>} : vector<4x6x8xbf16>, vector<4x8x8xbf16>, vector<4x6x8xf32> -> vector<4x6x8xf32>
    "tpu.trace_stop"() : () -> ()
    %28 = tpu.reciprocal %22 {approx = true} : vector<4x6x1xf32> -> vector<4x6x1xf32>
    %29 = vector.broadcast %28 : vector<4x6x1xf32> to vector<4x6x8xf32>
    %30 = arith.mulf %27, %29 : vector<4x6x8xf32>
    %c0_19 = arith.constant 0 : index
    %c0_20 = arith.constant 0 : index
    %c0_21 = arith.constant 0 : index
    %c0_22 = arith.constant 0 : index
    %31 = vector.load %arg6[%c0_19, %c0_20, %c0_21, %c0_22] : memref<1x4x6x8xf32, #tpu.memory_space<vmem>>, vector<1x4x6x8xf32>
    %32 = vector.shape_cast %31 : vector<1x4x6x8xf32> to vector<4x6x8xf32>
    %33 = vector.shape_cast %30 : vector<4x6x8xf32> to vector<1x4x6x8xf32>
    tpu.vector_store %arg6[%c0_19, %c0_20, %c0_21, %c0_22], %33 {strides = array<i32>} : memref<1x4x6x8xf32, #tpu.memory_space<vmem>>, vector<1x4x6x8xf32>,
    return
  }
  func.func @transform_0(%arg0: i32) -> (i32, i32, i32, i32) {
    %c0_i32 = arith.constant 0 : i32
    %c0_i32_0 = arith.constant 0 : i32
    %c0_i32_1 = arith.constant 0 : i32
    %c0_i32_2 = arith.constant 0 : i32
    return %arg0, %c0_i32, %c0_i32_0, %c0_i32_1 : i32, i32, i32, i32
  }
  func.func @transform_1(%arg0: i32) -> (i32, i32, i32, i32) {
    %c0_i32 = arith.constant 0 : i32
    %c0_i32_0 = arith.constant 0 : i32
    %c0_i32_1 = arith.constant 0 : i32
    %c0_i32_2 = arith.constant 0 : i32
    return %arg0, %c0_i32, %c0_i32_0, %c0_i32_1 : i32, i32, i32, i32
  }
  func.func @transform_2(%arg0: i32) -> (i32, i32, i32, i32) {
    %c0_i32 = arith.constant 0 : i32
    %c0_i32_0 = arith.constant 0 : i32
    %c0_i32_1 = arith.constant 0 : i32
    %c0_i32_2 = arith.constant 0 : i32
    return %arg0, %c0_i32, %c0_i32_0, %c0_i32_1 : i32, i32, i32, i32
  }
  func.func @transform_3(%arg0: i32) -> (i32, i32) {
    %c0_i32 = arith.constant 0 : i32
    %c0_i32_0 = arith.constant 0 : i32
    %c0_i32_1 = arith.constant 0 : i32
    return %c0_i32, %c0_i32_0 : i32, i32
  }
  func.func @transform_4(%arg0: i32) -> (i32, i32, i32) {
    %c0_i32 = arith.constant 0 : i32
    %c0_i32_0 = arith.constant 0 : i32
    %c0_i32_1 = arith.constant 0 : i32
    return %arg0, %c0_i32, %c0_i32_0 : i32, i32, i32
  }
  func.func @transform_5(%arg0: i32) -> (i32, i32, i32, i32) {
    %c0_i32 = arith.constant 0 : i32
    %c0_i32_0 = arith.constant 0 : i32
    %c0_i32_1 = arith.constant 0 : i32
    %c0_i32_2 = arith.constant 0 : i32
    return %arg0, %c0_i32, %c0_i32_0, %c0_i32_1 : i32, i32, i32, i32
  }
}

module attributes {stable_mosaic.version = 11 : i64} {
  func.func @_ffn_kernel(%arg0: i32, %arg1: memref<12x32xf32, #tpu.memory_space<vmem>>, %arg2: memref<32x64xbf16, #tpu.memory_space<vmem>>, %arg3: memref<1x64xf32, #tpu.memory_space<vmem>>, %arg4: memref<64x32xbf16, #tpu.memory_space<vmem>>, %arg5: memref<1x32xf32, #tpu.memory_space<vmem>>, %arg6: memref<12x32xf32, #tpu.memory_space<vmem>>) attributes {dimension_semantics = [#tpu.dimension_semantics<parallel>], iteration_bounds = array<i64: 1>, scalar_prefetch = 0 : i64, scratch_operands = 0 : i64, tpu.core_type = #tpu.core_type<tc>, window_params = [{transform_indices = @transform_0, window_bounds = array<i64: 12, 32>}, {pipeline_mode = #tpu.pipeline_mode<synchronous>, transform_indices = @transform_1, window_bounds = array<i64: 32, 64>}, {pipeline_mode = #tpu.pipeline_mode<synchronous>, transform_indices = @transform_2, window_bounds = array<i64: 1, 64>}, {pipeline_mode = #tpu.pipeline_mode<synchronous>, transform_indices = @transform_3, window_bounds = array<i64: 64, 32>}, {pipeline_mode = #tpu.pipeline_mode<synchronous>, transform_indices = @transform_4, window_bounds = array<i64: 1, 32>}, {transform_indices = @transform_5, window_bounds = array<i64: 12, 32>}]} {
    %c0 = arith.constant 0 : index
    %c0_0 = arith.constant 0 : index
    %0 = vector.load %arg1[%c0, %c0_0] : memref<12x32xf32, #tpu.memory_space<vmem>>, vector<12x32xf32>
    %1 = arith.truncf %0 : vector<12x32xf32> to vector<12x32xbf16>
    %c0_1 = arith.constant 0 : index
    %c0_2 = arith.constant 0 : index
    %2 = vector.load %arg2[%c0_1, %c0_2] : memref<32x64xbf16, #tpu.memory_space<vmem>>, vector<32x64xbf16>
    %cst = arith.constant dense<0.000000e+00> : vector<12x64xf32>
    %3 = tpu.matmul %1, %2, %cst {dimension_numbers = #tpu.dot_dimension_numbers<[1], [0], [0], [1], [0, 0, 1, 1], [], []>} : vector<12x32xbf16>, vector<32x64xbf16>, vector<12x64xf32> -> vector<12x64xf32>
    %c0_3 = arith.constant 0 : index
    %c0_4 = arith.constant 0 : index
    %4 = vector.load %arg3[%c0_3, %c0_4] : memref<1x64xf32, #tpu.memory_space<vmem>>, vector<1x64xf32>
    %5 = vector.broadcast %4 : vector<1x64xf32> to vector<12x64xf32>
    %6 = arith.addf %3, %5 : vector<12x64xf32>
    %cst_5 = arith.constant 0.000000e+00 : f32
    %7 = vector.broadcast %cst_5 : f32 to vector<12x64xf32>
    %8 = arith.maximumf %6, %7 : vector<12x64xf32>
    %9 = arith.truncf %8 : vector<12x64xf32> to vector<12x64xbf16>
    %c0_6 = arith.constant 0 : index
    %c0_7 = arith.constant 0 : index
    %10 = vector.load %arg4[%c0_6, %c0_7] : memref<64x32xbf16, #tpu.memory_space<vmem>>, vector<64x32xbf16>
    %cst_8 = arith.constant dense<0.000000e+00> : vector<12x32xf32>
    %11 = tpu.matmul %9, %10, %cst_8 {dimension_numbers = #tpu.dot_dimension_numbers<[1], [0], [0], [1], [0, 0, 1, 1], [], []>} : vector<12x64xbf16>, vector<64x32xbf16>, vector<12x32xf32> -> vector<12x32xf32>
    %c0_9 = arith.constant 0 : index
    %c0_10 = arith.constant 0 : index
    %12 = vector.load %arg5[%c0_9, %c0_10] : memref<1x32xf32, #tpu.memory_space<vmem>>, vector<1x32xf32>
    %13 = vector.broadcast %12 : vector<1x32xf32> to vector<12x32xf32>
    %14 = arith.addf %11, %13 : vector<12x32xf32>
    %c0_11 = arith.constant 0 : index
    %c0_12 = arith.constant 0 : index
    %15 = vector.load %arg6[%c0_11, %c0_12] : memref<12x32xf32, #tpu.memory_space<vmem>>, vector<12x32xf32>
    tpu.vector_store %arg6[%c0_11, %c0_12], %14 {strides = array<i32>} : memref<12x32xf32, #tpu.memory_space<vmem>>, vector<12x32xf32>,
    return
  }
  func.func @transform_0(%arg0: i32) -> (i32, i32) {
    %c0_i32 = arith.constant 0 : i32
    %c0_i32_0 = arith.constant 0 : i32
    return %arg0, %c0_i32 : i32, i32
  }
  func.func @transform_1(%arg0: i32) -> (i32, i32) {
    %c0_i32 = arith.constant 0 : i32
    %c0_i32_0 = arith.constant 0 : i32
    %c0_i32_1 = arith.constant 0 : i32
    return %c0_i32, %c0_i32_0 : i32, i32
  }
  func.func @transform_2(%arg0: i32) -> (i32, i32) {
    %c0_i32 = arith.constant 0 : i32
    %c0_i32_0 = arith.constant 0 : i32
    %c0_i32_1 = arith.constant 0 : i32
    return %c0_i32, %c0_i32_0 : i32, i32
  }
  func.func @transform_3(%arg0: i32) -> (i32, i32) {
    %c0_i32 = arith.constant 0 : i32
    %c0_i32_0 = arith.constant 0 : i32
    %c0_i32_1 = arith.constant 0 : i32
    return %c0_i32, %c0_i32_0 : i32, i32
  }
  func.func @transform_4(%arg0: i32) -> (i32, i32) {
    %c0_i32 = arith.constant 0 : i32
    %c0_i32_0 = arith.constant 0 : i32
    %c0_i32_1 = arith.constant 0 : i32
    return %c0_i32, %c0_i32_0 : i32, i32
  }
  func.func @transform_5(%arg0: i32) -> (i32, i32) {
    %c0_i32 = arith.constant 0 : i32
    %c0_i32_0 = arith.constant 0 : i32
    return %arg0, %c0_i32 : i32, i32
  }
}

module attributes {stable_mosaic.version = 11 : i64} {
  func.func @_ln_kernel(%arg0: i32, %arg1: memref<12x32xf32, #tpu.memory_space<vmem>>, %arg2: memref<1x32xf32, #tpu.memory_space<vmem>>, %arg3: memref<1x32xf32, #tpu.memory_space<vmem>>, %arg4: memref<12x32xf32, #tpu.memory_space<vmem>>) attributes {dimension_semantics = [#tpu.dimension_semantics<parallel>], iteration_bounds = array<i64: 1>, scalar_prefetch = 0 : i64, scratch_operands = 0 : i64, tpu.core_type = #tpu.core_type<tc>, window_params = [{transform_indices = @transform_0, window_bounds = array<i64: 12, 32>}, {pipeline_mode = #tpu.pipeline_mode<synchronous>, transform_indices = @transform_1, window_bounds = array<i64: 1, 32>}, {pipeline_mode = #tpu.pipeline_mode<synchronous>, transform_indices = @transform_2, window_bounds = array<i64: 1, 32>}, {transform_indices = @transform_3, window_bounds = array<i64: 12, 32>}]} {
    %c0 = arith.constant 0 : index
    %c0_0 = arith.constant 0 : index
    %0 = vector.load %arg1[%c0, %c0_0] : memref<12x32xf32, #tpu.memory_space<vmem>>, vector<12x32xf32>
    %cst = arith.constant dense<0.000000e+00> : vector<12xf32>
    %1 = vector.multi_reduction <add>, %0, %cst [1] : vector<12x32xf32> to vector<12xf32>
    %2 = vector.shape_cast %1 : vector<12xf32> to vector<12x1xf32>
    %cst_1 = arith.constant 3.200000e+01 : f32
    %3 = vector.broadcast %cst_1 : f32 to vector<12x1xf32>
    %4 = arith.divf %2, %3 : vector<12x1xf32>
    %5 = vector.broadcast %4 : vector<12x1xf32> to vector<12x32xf32>
    %6 = arith.subf %0, %5 : vector<12x32xf32>
    %7 = arith.mulf %6, %6 : vector<12x32xf32>
    %cst_2 = arith.constant dense<0.000000e+00> : vector<12xf32>
    %8 = vector.multi_reduction <add>, %7, %cst_2 [1] : vector<12x32xf32> to vector<12xf32>
    %9 = vector.shape_cast %8 : vector<12xf32> to vector<12x1xf32>
    %cst_3 = arith.constant 3.200000e+01 : f32
    %10 = vector.broadcast %cst_3 : f32 to vector<12x1xf32>
    %11 = arith.divf %9, %10 : vector<12x1xf32>
    %12 = vector.broadcast %4 : vector<12x1xf32> to vector<12x32xf32>
    %13 = arith.subf %0, %12 : vector<12x32xf32>
    %cst_4 = arith.constant 9.99999974E-6 : f32
    %14 = vector.broadcast %cst_4 : f32 to vector<12x1xf32>
    %15 = arith.addf %11, %14 : vector<12x1xf32>
    %16 = math.rsqrt %15 : vector<12x1xf32>
    %17 = vector.broadcast %16 : vector<12x1xf32> to vector<12x32xf32>
    %18 = arith.mulf %13, %17 : vector<12x32xf32>
    %c0_5 = arith.constant 0 : index
    %c0_6 = arith.constant 0 : index
    %19 = vector.load %arg2[%c0_5, %c0_6] : memref<1x32xf32, #tpu.memory_space<vmem>>, vector<1x32xf32>
    %20 = vector.broadcast %19 : vector<1x32xf32> to vector<12x32xf32>
    %21 = arith.mulf %18, %20 : vector<12x32xf32>
    %c0_7 = arith.constant 0 : index
    %c0_8 = arith.constant 0 : index
    %22 = vector.load %arg3[%c0_7, %c0_8] : memref<1x32xf32, #tpu.memory_space<vmem>>, vector<1x32xf32>
    %23 = vector.broadcast %22 : vector<1x32xf32> to vector<12x32xf32>
    %24 = arith.addf %21, %23 : vector<12x32xf32>
    %c0_9 = arith.constant 0 : index
    %c0_10 = arith.constant 0 : index
    %25 = vector.load %arg4[%c0_9, %c0_10] : memref<12x32xf32, #tpu.memory_space<vmem>>, vector<12x32xf32>
    tpu.vector_store %arg4[%c0_9, %c0_10], %24 {strides = array<i32>} : memref<12x32xf32, #tpu.memory_space<vmem>>, vector<12x32xf32>,
    return
  }
  func.func @transform_0(%arg0: i32) -> (i32, i32) {
    %c0_i32 = arith.constant 0 : i32
    %c0_i32_0 = arith.constant 0 : i32
    return %arg0, %c0_i32 : i32, i32
  }
  func.func @transform_1(%arg0: i32) -> (i32, i32) {
    %c0_i32 = arith.constant 0 : i32
    %c0_i32_0 = arith.constant 0 : i32
    %c0_i32_1 = arith.constant 0 : i32
    return %c0_i32, %c0_i32_0 : i32, i32
  }
  func.func @transform_2(%arg0: i32) -> (i32, i32) {
    %c0_i32 = arith.constant 0 : i32
    %c0_i32_0 = arith.constant 0 : i32
    %c0_i32_1 = arith.constant 0 : i32
    return %c0_i32, %c0_i32_0 : i32, i32
  }
  func.func @transform_3(%arg0: i32) -> (i32, i32) {
    %c0_i32 = arith.constant 0 : i32
    %c0_i32_0 = arith.constant 0 : i32
    return %arg0, %c0_i32 : i32, i32
  }
}

module attributes {stable_mosaic.version = 11 : i64} {
  func.func @_linear_kernel(%arg0: i32, %arg1: i32, %arg2: i32, %arg3: memref<12x32xf32, #tpu.memory_space<vmem>>, %arg4: memref<32x16xbf16, #tpu.memory_space<vmem>>, %arg5: memref<1x16xf32, #tpu.memory_space<vmem>>, %arg6: memref<12x16xf32, #tpu.memory_space<vmem>>, %arg7: memref<12x16xf32, #tpu.memory_space<vmem>>) attributes {dimension_semantics = [#tpu.dimension_semantics<parallel>, #tpu.dimension_semantics<parallel>, #tpu.dimension_semantics<arbitrary>], iteration_bounds = array<i64: 1, 1, 1>, scalar_prefetch = 0 : i64, scratch_operands = 1 : i64, tpu.core_type = #tpu.core_type<tc>, window_params = [{transform_indices = @transform_0, window_bounds = array<i64: 12, 32>}, {transform_indices = @transform_1, window_bounds = array<i64: 32, 16>}, {transform_indices = @transform_2, window_bounds = array<i64: 1, 16>}, {transform_indices = @transform_3, window_bounds = array<i64: 12, 16>}]} {
    %c0_i32 = arith.constant 0 : i32
    %0 = arith.cmpi eq, %arg2, %c0_i32 : i32
    %1 = arith.extui %0 : i1 to i32
    %c0_i32_0 = arith.constant 0 : i32
    %2 = arith.cmpi ne, %1, %c0_i32_0 : i32
    scf.if %2 {
      %cst_10 = arith.constant 0.000000e+00 : f32
      %13 = vector.broadcast %cst_10 : f32 to vector<12x16xf32>
      %c0_11 = arith.constant 0 : index
      %c0_12 = arith.constant 0 : index
      %14 = vector.load %arg7[%c0_11, %c0_12] : memref<12x16xf32, #tpu.memory_space<vmem>>, vector<12x16xf32>
      tpu.vector_store %arg7[%c0_11, %c0_12], %13 {strides = array<i32>} : memref<12x16xf32, #tpu.memory_space<vmem>>, vector<12x16xf32>,
    } else {
    }
    %c0 = arith.constant 0 : index
    %c0_1 = arith.constant 0 : index
    %3 = vector.load %arg7[%c0, %c0_1] : memref<12x16xf32, #tpu.memory_space<vmem>>, vector<12x16xf32>
    %c0_2 = arith.constant 0 : index
    %c0_3 = arith.constant 0 : index
    %4 = vector.load %arg3[%c0_2, %c0_3] : memref<12x32xf32, #tpu.memory_space<vmem>>, vector<12x32xf32>
    %5 = arith.truncf %4 : vector<12x32xf32> to vector<12x32xbf16>
    %c0_4 = arith.constant 0 : index
    %c0_5 = arith.constant 0 : index
    %6 = vector.load %arg4[%c0_4, %c0_5] : memref<32x16xbf16, #tpu.memory_space<vmem>>, vector<32x16xbf16>
    %cst = arith.constant dense<0.000000e+00> : vector<12x16xf32>
    %7 = tpu.matmul %5, %6, %cst {dimension_numbers = #tpu.dot_dimension_numbers<[1], [0], [0], [1], [0, 0, 1, 1], [], []>} : vector<12x32xbf16>, vector<32x16xbf16>, vector<12x16xf32> -> vector<12x16xf32>
    %8 = arith.addf %3, %7 : vector<12x16xf32>
    %c0_6 = arith.constant 0 : index
    %c0_7 = arith.constant 0 : index
    %9 = vector.load %arg7[%c0_6, %c0_7] : memref<12x16xf32, #tpu.memory_space<vmem>>, vector<12x16xf32>
    tpu.vector_store %arg7[%c0_6, %c0_7], %8 {strides = array<i32>} : memref<12x16xf32, #tpu.memory_space<vmem>>, vector<12x16xf32>,
    %c0_i32_8 = arith.constant 0 : i32
    %10 = arith.cmpi eq, %arg2, %c0_i32_8 : i32
    %11 = arith.extui %10 : i1 to i32
    %c0_i32_9 = arith.constant 0 : i32
    %12 = arith.cmpi ne, %11, %c0_i32_9 : i32
    scf.if %12 {
      %c0_10 = arith.constant 0 : index
      %c0_11 = arith.constant 0 : index
      %13 = vector.load %arg7[%c0_10, %c0_11] : memref<12x16xf32, #tpu.memory_space<vmem>>, vector<12x16xf32>
      %c0_12 = arith.constant 0 : index
      %c0_13 = arith.constant 0 : index
      %14 = vector.load %arg5[%c0_12, %c0_13] : memref<1x16xf32, #tpu.memory_space<vmem>>, vector<1x16xf32>
      %15 = vector.broadcast %14 : vector<1x16xf32> to vector<12x16xf32>
      %16 = arith.addf %13, %15 : vector<12x16xf32>
      %c0_14 = arith.constant 0 : index
      %c0_15 = arith.constant 0 : index
      %17 = vector.load %arg6[%c0_14, %c0_15] : memref<12x16xf32, #tpu.memory_space<vmem>>, vector<12x16xf32>
      tpu.vector_store %arg6[%c0_14, %c0_15], %16 {strides = array<i32>} : memref<12x16xf32, #tpu.memory_space<vmem>>, vector<12x16xf32>,
    } else {
    }
    return
  }
  func.func @transform_0(%arg0: i32, %arg1: i32, %arg2: i32) -> (i32, i32) {
    %c0_i32 = arith.constant 0 : i32
    return %arg0, %arg2 : i32, i32
  }
  func.func @transform_1(%arg0: i32, %arg1: i32, %arg2: i32) -> (i32, i32) {
    %c0_i32 = arith.constant 0 : i32
    return %arg2, %arg1 : i32, i32
  }
  func.func @transform_2(%arg0: i32, %arg1: i32, %arg2: i32) -> (i32, i32) {
    %c0_i32 = arith.constant 0 : i32
    %c0_i32_0 = arith.constant 0 : i32
    return %c0_i32, %arg1 : i32, i32
  }
  func.func @transform_3(%arg0: i32, %arg1: i32, %arg2: i32) -> (i32, i32) {
    %c0_i32 = arith.constant 0 : i32
    return %arg0, %arg1 : i32, i32
  }
}

</mosaic_0001>

<llo_original>
// kernel: seq2seq_transformer_forward.53
$region0: #{seq2seq_transformer_forward.53}
  #allocation0 [shape = 'u32[]', space=smem, size = 0x4, offset = 0x4, fixed_abs, tag = 'smem constant byte address 0x4 - core index']
  #allocation1 [shape = 'u32[72,128]{1,0:T(1,128)}', space=vmem, size = 0x9000, scoped, tag = 'internal scratch']
  %s0 = inlined_call_operand.vmem [shape: f32[12,32], index: 0, kind: input, shape index: {}]
  %s1 = inlined_call_operand.vmem [shape: f32[12,32], index: 1, kind: input, shape index: {}]
  %s2 = inlined_call_operand.vmem [shape: f32[1,32], index: 2, kind: input, shape index: {}]
  %s3 = inlined_call_operand.vmem [shape: f32[1,32], index: 3, kind: input, shape index: {}]
  %s4 = inlined_call_operand.vmem [shape: f32[12,32], index: 4, kind: output, shape index: {}]
  %s5 = sld [smem:[#allocation0]]
  $region26: #{seq2seq_transformer_forward.53} parent=0
    _
  %s7 = ssub.s32 1, %s5
  %s8 = scalar_select 0, %s7, %s5
  // Predicated region
  $region2: #{seq2seq_transformer_forward.53} parent=0 // pred_check
    _
  $region3: #{seq2seq_transformer_forward.53} parent=0 // pred_check_branch
    %10 = sbr.rel (0) target = $region5
  $region4: #{seq2seq_transformer_forward.53} parent=0 // pred_region
    _
  $region5: #{seq2seq_transformer_forward.53} parent=0 // pred_fallthru
    _
  // Predicated region
  $region6: #{seq2seq_transformer_forward.53} parent=0 // pred_check
    _
  $region7: #{seq2seq_transformer_forward.53} parent=0 // pred_check_branch
    %12 = sbr.rel (0) target = $region9
  $region8: #{seq2seq_transformer_forward.53} parent=0 // pred_region
    _
  $region9: #{seq2seq_transformer_forward.53} parent=0 // pred_fallthru
    _
  // Predicated region
  $region10: #{seq2seq_transformer_forward.53} parent=0 // pred_check
    _
  $region11: #{seq2seq_transformer_forward.53} parent=0 // pred_check_branch
    %14 = sbr.rel (0) target = $region13
  $region12: #{seq2seq_transformer_forward.53} parent=0 // pred_region
    _
  $region13: #{seq2seq_transformer_forward.53} parent=0 // pred_fallthru
    _
  // Predicated region
  $region14: #{seq2seq_transformer_forward.53} parent=0 // pred_check
    _
  $region15: #{seq2seq_transformer_forward.53} parent=0 // pred_check_branch
    %16 = sbr.rel (0) target = $region17
  $region16: #{seq2seq_transformer_forward.53} parent=0 // pred_region
    _
  $region17: #{seq2seq_transformer_forward.53} parent=0 // pred_fallthru
    _
  %v17 = vld [vmem:[%s0] sm:$0xff]
  %v18 = vld [vmem:[%s0 + $0x8] sm:$0xf]
  %v19 = vld [vmem:[%s1] sm:$0xff]
  %v20 = vld [vmem:[%s1 + $0x8] sm:$0xf]
  %v21 = vadd.f32 %v17, %v19
  %v22 = vadd.f32 %v18, %v20
  %vm23 = vcmask 261120
  %v24 = vsel %vm23, %v21, 0.0
  %25 = vadd.xlane.f32.xlu0 %v24
  %v26 = vpop.xlane.xlu0 %25
  %vm27 = vcmask 257024
  %v28 = vsel %vm27, %v22, 0.0
  %29 = vadd.xlane.f32.xlu0 %v28
  %v30 = vpop.xlane.xlu0 %29
  %v31 = vrcp.pop 32.0
  %v32 = vmul.f32 32.0, %v31
  %v33 = vsub.f32 1.0, %v32
  %v34 = vmul.f32 %v31, %v33
  %v35 = vadd.f32 %v31, %v34
  %vm36 = vweird.f32 %v31
  %v37 = vsel %vm36, %v31, %v35
  %v38 = vmul.f32 %v26, %v37
  %v39 = vmul.f32 %v30, %v37
  %v40 = vsub.f32 %v21, %v38
  %v41 = vsub.f32 %v22, %v39
  %v42 = vmul.f32 %v40, %v40
  %v43 = vmul.f32 %v41, %v41
  %v44 = vsel %vm23, %v42, 0.0
  %45 = vadd.xlane.f32.xlu0 %v44
  %v46 = vpop.xlane.xlu0 %45
  %v47 = vsel %vm27, %v43, 0.0
  %48 = vadd.xlane.f32.xlu0 %v47
  %v49 = vpop.xlane.xlu0 %48
  %v50 = vmul.f32 %v46, %v37
  %v51 = vmul.f32 %v49, %v37
  %v52 = vadd.f32 %v50, 1e-05
  %v53 = vadd.f32 %v51, 1e-05
  %v54 = vrsqrt.pop %v52
  %v55 = vmul.f32 %v54, %v52
  %v56 = vmul.f32 %v55, %v54
  %v57 = vmul.f32 0.5, %v56
  %v58 = vsub.f32 1.5, %v57
  %v59 = vmul.f32 %v54, %v58
  %vm60 = vweird.f32 %v52
  %vm61 = vweird.f32 %v54
  %vm62 = vmor %vm60, %vm61
  %v63 = vsel %vm62, %v54, %v59
  %v64 = vrsqrt.pop %v53
  %v65 = vmul.f32 %v64, %v53
  %v66 = vmul.f32 %v65, %v64
  %v67 = vmul.f32 0.5, %v66
  %v68 = vsub.f32 1.5, %v67
  %v69 = vmul.f32 %v64, %v68
  %vm70 = vweird.f32 %v53
  %vm71 = vweird.f32 %v64
  %vm72 = vmor %vm70, %vm71
  %v73 = vsel %vm72, %v64, %v69
  %v74 = vmul.f32 %v40, %v63
  %v75 = vmul.f32 %v41, %v73
  %v76 = vld [vmem:[%s2] sm:$0x1]
  %v78 = vperm.slane %v76, 0
  %v80 = vmul.f32 %v74, %v78
  %v81 = vmul.f32 %v75, %v78
  %v82 = vld [vmem:[%s3] sm:$0x1]
  %v84 = vperm.slane %v82, 0
  %v86 = vadd.f32 %v80, %v84
  %v87 = vadd.f32 %v81, %v84
  %88 = vst.msk [vmem:[%s4] sm:$0xff] %vm23, %v86
  %89 = vst.msk [vmem:[%s4 + $0x8] sm:$0xf] %vm27, %v87
  // Predicated region
  $region18: #{seq2seq_transformer_forward.53} parent=0 // pred_check
    _
  $region19: #{seq2seq_transformer_forward.53} parent=0 // pred_check_branch
    %91 = sbr.rel (0) target = $region21
  $region20: #{seq2seq_transformer_forward.53} parent=0 // pred_region
    _
  $region21: #{seq2seq_transformer_forward.53} parent=0 // pred_fallthru
    _
  // Predicated region
  $region22: #{seq2seq_transformer_forward.53} parent=0 // pred_check
    _
  $region23: #{seq2seq_transformer_forward.53} parent=0 // pred_check_branch
    %93 = sbr.rel (0) target = $region25
  $region24: #{seq2seq_transformer_forward.53} parent=0 // pred_region
    _
  $region25: #{seq2seq_transformer_forward.53} parent=0 // pred_fallthru
    _

// kernel: seq2seq_transformer_forward.50
$region0: #{seq2seq_transformer_forward.50}
  #allocation0 [shape = 'u32[]', space=smem, size = 0x4, offset = 0x4, fixed_abs, tag = 'smem constant byte address 0x4 - core index']
  #allocation1 [shape = 'u32[72,128]{1,0:T(1,128)}', space=vmem, size = 0x9000, scoped, tag = 'internal scratch']
  #allocation2 [shape = 'f32[12,96]{1,0:T(8,128)}', space=vmem, size = 0x2000, scoped, tag = 'scratch operand']
  %s0 = inlined_call_operand.vmem [shape: f32[12,32], index: 0, kind: input, shape index: {}]
  %s1 = inlined_call_operand.vmem [shape: bf16[32,96], index: 1, kind: input, shape index: {}]
  %s2 = inlined_call_operand.vmem [shape: f32[1,96], index: 2, kind: input, shape index: {}]
  %s3 = inlined_call_operand.vmem [shape: f32[12,96], index: 3, kind: output, shape index: {}]
  %s4 = sld [smem:[#allocation0]]
  $region30: #{seq2seq_transformer_forward.50} parent=0
    _
  %s6 = ssub.s32 1, %s4
  %s7 = scalar_select 0, %s6, %s4
  // Predicated region
  $region2: #{seq2seq_transformer_forward.50} parent=0 // pred_check
    _
  $region3: #{seq2seq_transformer_forward.50} parent=0 // pred_check_branch
    %9 = sbr.rel (0) target = $region5
  $region4: #{seq2seq_transformer_forward.50} parent=0 // pred_region
    _
  $region5: #{seq2seq_transformer_forward.50} parent=0 // pred_fallthru
    _
  // Predicated region
  $region6: #{seq2seq_transformer_forward.50} parent=0 // pred_check
    _
  $region7: #{seq2seq_transformer_forward.50} parent=0 // pred_check_branch
    %11 = sbr.rel (0) target = $region9
  $region8: #{seq2seq_transformer_forward.50} parent=0 // pred_region
    _
  $region9: #{seq2seq_transformer_forward.50} parent=0 // pred_fallthru
    _
  // Predicated region
  $region10: #{seq2seq_transformer_forward.50} parent=0 // pred_check
    _
  $region11: #{seq2seq_transformer_forward.50} parent=0 // pred_check_branch
    %13 = sbr.rel (0) target = $region13
  $region12: #{seq2seq_transformer_forward.50} parent=0 // pred_region
    _
  $region13: #{seq2seq_transformer_forward.50} parent=0 // pred_fallthru
    _
  %p15 = scmp.eq.s32.totalorder 0, 0
  // Predicated region
  $region14: #{seq2seq_transformer_forward.50} parent=0 // pred_check
    %p16 = pneg %p15
  $region15: #{seq2seq_transformer_forward.50} parent=0 // pred_check_branch
    %18 = sbr.rel (%p16) target = $region17
  $region16: #{seq2seq_transformer_forward.50} parent=0 // pred_region
    %vm19 = vcmask 785408
    %20 = vst.msk [vmem:[#allocation2] sm:$0xff] %vm19, 0.0
    %vm21 = vcmask 781312
    %22 = vst.msk [vmem:[#allocation2 + $0x8] sm:$0xf] %vm21, 0.0
  $region17: #{seq2seq_transformer_forward.50} parent=0 // pred_fallthru
    _
  %v23 = vld [vmem:[#allocation2] sm:$0xff]
  %v24 = vld [vmem:[#allocation2 + $0x8] sm:$0xf]
  %v25 = vld [vmem:[%s0] sm:$0xff]
  %v26 = vld [vmem:[%s0 + $0x8] sm:$0xf]
  %v27 = vpack.c.bf16 %v26, %v25
  %v28 = vld [vmem:[%s1] sm:$0xf]
  %v29 = vld [vmem:[%s1 + $0x4] sm:$0xf]
  %v30 = vld [vmem:[%s1 + $0x8] sm:$0xf]
  %v31 = vld [vmem:[%s1 + $0xc] sm:$0xf]
  %v36 = vunpack.c.l.b16 %v28
  %v37 = vunpack.c.l.b16 %v29
  %v38 = vunpack.c.l.b16 %v30
  %v39 = vunpack.c.l.b16 %v31
  %v40 = vpack.c.b16 %v37, %v36
  %v41 = vpack.c.b16 %v39, %v38
  %vm44 = vcmask 261120
  %v46 = vsel %vm44, %v27, 0
  %48 = vmatpush.bf16.msra.mxu0 0
  %49 = vmatpush.bf16.msra.mxu0 0
  %50 = vmatpush.bf16.msra.mxu0 0
  %51 = vmatpush.bf16.msra.mxu0 0
  %52 = vmatpush.bf16.msra.mxu0 0
  %53 = vmatpush.bf16.msra.mxu0 0
  %54 = vmatpush.bf16.msra.mxu0 %v41
  %55 = vmatpush.bf16.msra.mxu0 %v40
  %56 = vmatmul.bf16.gmra.mxu0 %v46
  %v57 = vpop.f32.mrf.mxu0
  %v58 = vadd.f32 0.0, %v57
  %v59 = vpop.f32.mrf.mxu0
  %v60 = vadd.f32 0.0, %v59
  %61 = vdwg.mxu0
  %v62 = vadd.f32 %v23, %v58
  %v63 = vadd.f32 %v24, %v60
  %vm64 = vcmask 785408
  %65 = vst.msk [vmem:[#allocation2] sm:$0xff] %vm64, %v62
  %vm66 = vcmask 781312
  %67 = vst.msk [vmem:[#allocation2 + $0x8] sm:$0xf] %vm66, %v63
  // Predicated region
  $region18: #{seq2seq_transformer_forward.50} parent=0 // pred_check
    %p68 = pneg %p15
  $region19: #{seq2seq_transformer_forward.50} parent=0 // pred_check_branch
    %70 = sbr.rel (%p68) target = $region21
  $region20: #{seq2seq_transformer_forward.50} parent=0 // pred_region
    %v71 = vld [vmem:[#allocation2] sm:$0xff]
    %v72 = vld [vmem:[#allocation2 + $0x8] sm:$0xf]
    %v73 = vld [vmem:[%s2] sm:$0x1]
    %v75 = vperm.slane %v73, 0
    %v77 = vadd.f32 %v71, %v75
    %v78 = vadd.f32 %v72, %v75
    %79 = vst.msk [vmem:[%s3] sm:$0xff] %vm64, %v77
    %80 = vst.msk [vmem:[%s3 + $0x8] sm:$0xf] %vm66, %v78
  $region21: #{seq2seq_transformer_forward.50} parent=0 // pred_fallthru
    _
  // Predicated region
  $region22: #{seq2seq_transformer_forward.50} parent=0 // pred_check
    _
  $region23: #{seq2seq_transformer_forward.50} parent=0 // pred_check_branch
    %82 = sbr.rel (0) target = $region25
  $region24: #{seq2seq_transformer_forward.50} parent=0 // pred_region
    _
  $region25: #{seq2seq_transformer_forward.50} parent=0 // pred_fallthru
    _
  // Predicated region
  $region26: #{seq2seq_transformer_forward.50} parent=0 // pred_check
    _
  $region27: #{seq2seq_transformer_forward.50} parent=0 // pred_check_branch
    %84 = sbr.rel (0) target = $region29
  $region28: #{seq2seq_transformer_forward.50} parent=0 // pred_region
    _
  $region29: #{seq2seq_transformer_forward.50} parent=0 // pred_fallthru
    _

// kernel: seq2seq_transformer_forward.52
$region0: #{seq2seq_transformer_forward.52}
  #allocation0 [shape = 'u32[]', space=smem, size = 0x4, offset = 0x4, fixed_abs, tag = 'smem constant byte address 0x4 - core index']
  #allocation1 [shape = 'u32[72,128]{1,0:T(1,128)}', space=vmem, size = 0x9000, scoped, tag = 'internal scratch']
  #allocation2 [shape = 'f32[12,32]{1,0:T(8,128)}', space=vmem, size = 0x2000, scoped, tag = 'scratch operand']
  %s0 = inlined_call_operand.vmem [shape: f32[12,32], index: 0, kind: input, shape index: {}]
  %s1 = inlined_call_operand.vmem [shape: bf16[32,32], index: 1, kind: input, shape index: {}]
  %s2 = inlined_call_operand.vmem [shape: f32[1,32], index: 2, kind: input, shape index: {}]
  %s3 = inlined_call_operand.vmem [shape: f32[12,32], index: 3, kind: output, shape index: {}]
  %s4 = sld [smem:[#allocation0]]
  $region30: #{seq2seq_transformer_forward.52} parent=0
    _
  %s6 = ssub.s32 1, %s4
  %s7 = scalar_select 0, %s6, %s4
  // Predicated region
  $region2: #{seq2seq_transformer_forward.52} parent=0 // pred_check
    _
  $region3: #{seq2seq_transformer_forward.52} parent=0 // pred_check_branch
    %9 = sbr.rel (0) target = $region5
  $region4: #{seq2seq_transformer_forward.52} parent=0 // pred_region
    _
  $region5: #{seq2seq_transformer_forward.52} parent=0 // pred_fallthru
    _
  // Predicated region
  $region6: #{seq2seq_transformer_forward.52} parent=0 // pred_check
    _
  $region7: #{seq2seq_transformer_forward.52} parent=0 // pred_check_branch
    %11 = sbr.rel (0) target = $region9
  $region8: #{seq2seq_transformer_forward.52} parent=0 // pred_region
    _
  $region9: #{seq2seq_transformer_forward.52} parent=0 // pred_fallthru
    _
  // Predicated region
  $region10: #{seq2seq_transformer_forward.52} parent=0 // pred_check
    _
  $region11: #{seq2seq_transformer_forward.52} parent=0 // pred_check_branch
    %13 = sbr.rel (0) target = $region13
  $region12: #{seq2seq_transformer_forward.52} parent=0 // pred_region
    _
  $region13: #{seq2seq_transformer_forward.52} parent=0 // pred_fallthru
    _
  %p15 = scmp.eq.s32.totalorder 0, 0
  // Predicated region
  $region14: #{seq2seq_transformer_forward.52} parent=0 // pred_check
    %p16 = pneg %p15
  $region15: #{seq2seq_transformer_forward.52} parent=0 // pred_check_branch
    %18 = sbr.rel (%p16) target = $region17
  $region16: #{seq2seq_transformer_forward.52} parent=0 // pred_region
    %vm19 = vcmask 261120
    %20 = vst.msk [vmem:[#allocation2] sm:$0xff] %vm19, 0.0
    %vm21 = vcmask 257024
    %22 = vst.msk [vmem:[#allocation2 + $0x8] sm:$0xf] %vm21, 0.0
  $region17: #{seq2seq_transformer_forward.52} parent=0 // pred_fallthru
    _
  %v23 = vld [vmem:[#allocation2] sm:$0xff]
  %v24 = vld [vmem:[#allocation2 + $0x8] sm:$0xf]
  %v25 = vld [vmem:[%s0] sm:$0xff]
  %v26 = vld [vmem:[%s0 + $0x8] sm:$0xf]
  %v27 = vpack.c.bf16 %v26, %v25
  %v28 = vld [vmem:[%s1] sm:$0xf]
  %v29 = vld [vmem:[%s1 + $0x4] sm:$0xf]
  %v30 = vld [vmem:[%s1 + $0x8] sm:$0xf]
  %v31 = vld [vmem:[%s1 + $0xc] sm:$0xf]
  %v36 = vunpack.c.l.b16 %v28
  %v37 = vunpack.c.l.b16 %v29
  %v38 = vunpack.c.l.b16 %v30
  %v39 = vunpack.c.l.b16 %v31
  %v40 = vpack.c.b16 %v37, %v36
  %v41 = vpack.c.b16 %v39, %v38
  %vm44 = vcmask 261120
  %v46 = vsel %vm44, %v27, 0
  %48 = vmatpush.bf16.msra.mxu0 0
  %49 = vmatpush.bf16.msra.mxu0 0
  %50 = vmatpush.bf16.msra.mxu0 0
  %51 = vmatpush.bf16.msra.mxu0 0
  %52 = vmatpush.bf16.msra.mxu0 0
  %53 = vmatpush.bf16.msra.mxu0 0
  %54 = vmatpush.bf16.msra.mxu0 %v41
  %55 = vmatpush.bf16.msra.mxu0 %v40
  %56 = vmatmul.bf16.gmra.mxu0 %v46
  %v57 = vpop.f32.mrf.mxu0
  %v58 = vadd.f32 0.0, %v57
  %v59 = vpop.f32.mrf.mxu0
  %v60 = vadd.f32 0.0, %v59
  %61 = vdwg.mxu0
  %v62 = vadd.f32 %v23, %v58
  %v63 = vadd.f32 %v24, %v60
  %64 = vst.msk [vmem:[#allocation2] sm:$0xff] %vm44, %v62
  %vm65 = vcmask 257024
  %66 = vst.msk [vmem:[#allocation2 + $0x8] sm:$0xf] %vm65, %v63
  // Predicated region
  $region18: #{seq2seq_transformer_forward.52} parent=0 // pred_check
    %p67 = pneg %p15
  $region19: #{seq2seq_transformer_forward.52} parent=0 // pred_check_branch
    %69 = sbr.rel (%p67) target = $region21
  $region20: #{seq2seq_transformer_forward.52} parent=0 // pred_region
    %v70 = vld [vmem:[#allocation2] sm:$0xff]
    %v71 = vld [vmem:[#allocation2 + $0x8] sm:$0xf]
    %v72 = vld [vmem:[%s2] sm:$0x1]
    %v74 = vperm.slane %v72, 0
    %v76 = vadd.f32 %v70, %v74
    %v77 = vadd.f32 %v71, %v74
    %78 = vst.msk [vmem:[%s3] sm:$0xff] %vm44, %v76
    %79 = vst.msk [vmem:[%s3 + $0x8] sm:$0xf] %vm65, %v77
  $region21: #{seq2seq_transformer_forward.52} parent=0 // pred_fallthru
    _
  // Predicated region
  $region22: #{seq2seq_transformer_forward.52} parent=0 // pred_check
    _
  $region23: #{seq2seq_transformer_forward.52} parent=0 // pred_check_branch
    %81 = sbr.rel (0) target = $region25
  $region24: #{seq2seq_transformer_forward.52} parent=0 // pred_region
    _
  $region25: #{seq2seq_transformer_forward.52} parent=0 // pred_fallthru
    _
  // Predicated region
  $region26: #{seq2seq_transformer_forward.52} parent=0 // pred_check
    _
  $region27: #{seq2seq_transformer_forward.52} parent=0 // pred_check_branch
    %83 = sbr.rel (0) target = $region29
  $region28: #{seq2seq_transformer_forward.52} parent=0 // pred_region
    _
  $region29: #{seq2seq_transformer_forward.52} parent=0 // pred_fallthru
    _

// kernel: seq2seq_transformer_forward.51
$region0: #{seq2seq_transformer_forward.51}
  #allocation0 [shape = 'u32[]', space=smem, size = 0x4, offset = 0x4, fixed_abs, tag = 'smem constant byte address 0x4 - core index']
  #allocation1 [shape = 'u32[72,128]{1,0:T(1,128)}', space=vmem, size = 0x9000, scoped, tag = 'internal scratch']
  %s0 = inlined_call_operand.vmem [shape: f32[2,4,6,8], index: 0, kind: input, shape index: {}]
  %s1 = inlined_call_operand.vmem [shape: f32[2,4,6,8], index: 1, kind: input, shape index: {}]
  %s2 = inlined_call_operand.vmem [shape: f32[2,4,6,8], index: 2, kind: input, shape index: {}]
  %s3 = inlined_call_operand.vmem [shape: f32[6,6], index: 3, kind: input, shape index: {}]
  %s4 = inlined_call_operand.vmem [shape: f32[2,1,6], index: 4, kind: input, shape index: {}]
  %s5 = inlined_call_operand.vmem [shape: f32[2,4,6,8], index: 5, kind: output, shape index: {}]
  %s6 = sld [smem:[#allocation0]]
  $region53: #{seq2seq_transformer_forward.51} parent=0
    _
  %s8 = ssub.s32 1, %s6
  %s9 = scalar_select 0, %s8, %s6
  loop: start=0, step=1, limit=4
  $region2: #{seq2seq_transformer_forward.51} parent=0 // loop_pre_header
    _
  $region3: #{seq2seq_transformer_forward.51} parent=0 // loop_header
    %s11 = sphi 0, %s15
    %p12 = scmp.ge.s32.totalorder %s11, 4
    %s21 = sphi 0, %s23
    %s24 = sphi 0, %s21
    %s25 = sphi 0, %s24
    %s41 = sphi 0, %s25
    %s47 = sphi 0, %s49
    %s50 = sphi 0, %s47
    %s51 = sphi 0, %s50
    %s67 = sphi 0, %s51
    %s73 = sphi 0, %s75
    %s76 = sphi 0, %s73
    %s77 = sphi 0, %s76
    %s93 = sphi 0, %s77
    %s97 = sphi 0, %s97
    %s99 = sphi 0, %s97
    %s100 = sphi 0, %s99
    %s114 = sphi 0, %s100
    %s120 = sphi 0, %s122
    %s123 = sphi 0, %s120
    %s124 = sphi 0, %s123
    %s140 = sphi 0, %s124
    %s146 = sphi 0, %s148
    %s149 = sphi 0, %s146
    %s150 = sphi 0, %s149
    %s166 = sphi 0, %s150
  $region4: #{seq2seq_transformer_forward.51} parent=0 // loop_header_branch
    %14 = sbr.rel (%p12) target = $region8
  $region5: #{seq2seq_transformer_forward.51} parent=0 // loop_body
    %s16 = ssub.s32 %s11, 1
    %s17 = ssub.s32 %s11, 2
    %s18 = sadd.s32 %s11, 1
    %s19 = ssub.s32 %s11, %s18
    %p20 = scmp.eq.s32.totalorder %s19, 0
    %s22 = sadd.s32 %s21, 1
    %s23 = scalar_select %p20, %s21, %s22
    %p26 = pneg %p20
    %p27 = scmp.eq.s32.totalorder %s11, 1
    %p28 = por %p26, %p27
    %p29 = scmp.ne.s32.totalorder %s21, %s24
    %p30 = scmp.eq.s32.totalorder %s11, 0
    %p31 = por %p29, %p30
    %p32 = scmp.ne.s32.totalorder %s21, %s24
    %p33 = scmp.eq.s32.totalorder %s16, 1
    %p34 = por %p32, %p33
    %p35 = scmp.ne.s32.totalorder %s24, %s25
    %p36 = scmp.eq.s32.totalorder %s16, 0
    %p37 = por %p35, %p36
    %p38 = scmp.ne.s32.totalorder %s24, %s25
    %p39 = scmp.eq.s32.totalorder %s17, 1
    %p40 = por %p38, %p39
    %p42 = scmp.ne.s32.totalorder %s25, %s41
    %p43 = scmp.eq.s32.totalorder %s17, 0
    %p44 = por %p42, %p43
    %s45 = ssub.s32 %s11, %s18
    %p46 = scmp.eq.s32.totalorder %s45, 0
    %s48 = sadd.s32 %s47, 1
    %s49 = scalar_select %p46, %s47, %s48
    %p52 = pneg %p46
    %p53 = scmp.eq.s32.totalorder %s11, 1
    %p54 = por %p52, %p53
    %p55 = scmp.ne.s32.totalorder %s47, %s50
    %p56 = scmp.eq.s32.totalorder %s11, 0
    %p57 = por %p55, %p56
    %p58 = scmp.ne.s32.totalorder %s47, %s50
    %p59 = scmp.eq.s32.totalorder %s16, 1
    %p60 = por %p58, %p59
    %p61 = scmp.ne.s32.totalorder %s50, %s51
    %p62 = scmp.eq.s32.totalorder %s16, 0
    %p63 = por %p61, %p62
    %p64 = scmp.ne.s32.totalorder %s50, %s51
    %p65 = scmp.eq.s32.totalorder %s17, 1
    %p66 = por %p64, %p65
    %p68 = scmp.ne.s32.totalorder %s51, %s67
    %p69 = scmp.eq.s32.totalorder %s17, 0
    %p70 = por %p68, %p69
    %s71 = ssub.s32 %s11, %s18
    %p72 = scmp.eq.s32.totalorder %s71, 0
    %s74 = sadd.s32 %s73, 1
    %s75 = scalar_select %p72, %s73, %s74
    %p78 = pneg %p72
    %p79 = scmp.eq.s32.totalorder %s11, 1
    %p80 = por %p78, %p79
    %p81 = scmp.ne.s32.totalorder %s73, %s76
    %p82 = scmp.eq.s32.totalorder %s11, 0
    %p83 = por %p81, %p82
    %p84 = scmp.ne.s32.totalorder %s73, %s76
    %p85 = scmp.eq.s32.totalorder %s16, 1
    %p86 = por %p84, %p85
    %p87 = scmp.ne.s32.totalorder %s76, %s77
    %p88 = scmp.eq.s32.totalorder %s16, 0
    %p89 = por %p87, %p88
    %p90 = scmp.ne.s32.totalorder %s76, %s77
    %p91 = scmp.eq.s32.totalorder %s17, 1
    %p92 = por %p90, %p91
    %p94 = scmp.ne.s32.totalorder %s77, %s93
    %p95 = scmp.eq.s32.totalorder %s17, 0
    %p96 = por %p94, %p95
    %s98 = sadd.s32 %s97, 1
    %p101 = scmp.eq.s32.totalorder %s11, 1
    %p102 = scmp.ne.s32.totalorder %s97, %s99
    %p103 = scmp.eq.s32.totalorder %s11, 0
    %p104 = por %p102, %p103
    %p105 = scmp.ne.s32.totalorder %s97, %s99
    %p106 = scmp.eq.s32.totalorder %s16, 1
    %p107 = por %p105, %p106
    %p108 = scmp.ne.s32.totalorder %s99, %s100
    %p109 = scmp.eq.s32.totalorder %s16, 0
    %p110 = por %p108, %p109
    %p111 = scmp.ne.s32.totalorder %s99, %s100
    %p112 = scmp.eq.s32.totalorder %s17, 1
    %p113 = por %p111, %p112
    %p115 = scmp.ne.s32.totalorder %s100, %s114
    %p116 = scmp.eq.s32.totalorder %s17, 0
    %p117 = por %p115, %p116
    %s118 = ssub.s32 %s11, %s18
    %p119 = scmp.eq.s32.totalorder %s118, 0
    %s121 = sadd.s32 %s120, 1
    %s122 = scalar_select %p119, %s120, %s121
    %p125 = pneg %p119
    %p126 = scmp.eq.s32.totalorder %s11, 1
    %p127 = por %p125, %p126
    %p128 = scmp.ne.s32.totalorder %s120, %s123
    %p129 = scmp.eq.s32.totalorder %s11, 0
    %p130 = por %p128, %p129
    %p131 = scmp.ne.s32.totalorder %s120, %s123
    %p132 = scmp.eq.s32.totalorder %s16, 1
    %p133 = por %p131, %p132
    %p134 = scmp.ne.s32.totalorder %s123, %s124
    %p135 = scmp.eq.s32.totalorder %s16, 0
    %p136 = por %p134, %p135
    %p137 = scmp.ne.s32.totalorder %s123, %s124
    %p138 = scmp.eq.s32.totalorder %s17, 1
    %p139 = por %p137, %p138
    %p141 = scmp.ne.s32.totalorder %s124, %s140
    %p142 = scmp.eq.s32.totalorder %s17, 0
    %p143 = por %p141, %p142
    %s144 = ssub.s32 %s11, %s18
    %p145 = scmp.eq.s32.totalorder %s144, 0
    %s147 = sadd.s32 %s146, 1
    %s148 = scalar_select %p145, %s146, %s147
    %p151 = pneg %p145
    %p152 = scmp.eq.s32.totalorder %s11, 1
    %p153 = por %p151, %p152
    %p154 = scmp.ne.s32.totalorder %s146, %s149
    %p155 = scmp.eq.s32.totalorder %s11, 0
    %p156 = por %p154, %p155
    %p157 = scmp.ne.s32.totalorder %s146, %s149
    %p158 = scmp.eq.s32.totalorder %s16, 1
    %p159 = por %p157, %p158
    %p160 = scmp.ne.s32.totalorder %s149, %s150
    %p161 = scmp.eq.s32.totalorder %s16, 0
    %p162 = por %p160, %p161
    %p163 = scmp.ne.s32.totalorder %s149, %s150
    %p164 = scmp.eq.s32.totalorder %s17, 1
    %p165 = por %p163, %p164
    %p167 = scmp.ne.s32.totalorder %s150, %s166
    %p168 = scmp.eq.s32.totalorder %s17, 0
    %p169 = por %p167, %p168
    %p170 = scmp.le.s32.totalorder 1, %s11
    %p171 = scmp.lt.s32.totalorder %s11, 3
    %p172 = pnand %p170, %p171
    %p173 = pneg %p172
    // Predicated region
    $region9: #{seq2seq_transformer_forward.51} parent=5 // pred_check
      _
    $region10: #{seq2seq_transformer_forward.51} parent=5 // pred_check_branch
      %175 = sbr.rel (%p172) target = $region12
    $region11: #{seq2seq_transformer_forward.51} parent=5 // pred_region
      %s176 = ssub.s32 %s11, 1
      // Predicated region
      $region13: #{seq2seq_transformer_forward.51} parent=11 // pred_check
        %p177 = pneg %p110
      $region14: #{seq2seq_transformer_forward.51} parent=11 // pred_check_branch
        %179 = sbr.rel (%p177) target = $region16
      $region15: #{seq2seq_transformer_forward.51} parent=11 // pred_region
        _
      $region16: #{seq2seq_transformer_forward.51} parent=11 // pred_fallthru
        _
    $region12: #{seq2seq_transformer_forward.51} parent=5 // pred_fallthru
      _
    %p180 = scmp.lt.s32.totalorder %s11, 2
    // Predicated region
    $region17: #{seq2seq_transformer_forward.51} parent=5 // pred_check
      %p181 = pneg %p180
    $region18: #{seq2seq_transformer_forward.51} parent=5 // pred_check_branch
      %183 = sbr.rel (%p181) target = $region20
    $region19: #{seq2seq_transformer_forward.51} parent=5 // pred_region
      // Predicated region
      $region21: #{seq2seq_transformer_forward.51} parent=19 // pred_check
        %p184 = pneg %p31
      $region22: #{seq2seq_transformer_forward.51} parent=19 // pred_check_branch
        %186 = sbr.rel (%p184) target = $region24
      $region23: #{seq2seq_transformer_forward.51} parent=19 // pred_region
        %p187 = scmp.lt.s32.totalorder %s11, 1
        %s188 = scalar_select %p187, %s11, 1
        %s189 = smul.addr %s188, 4
        %s190 = smul.addr %s189, 8
        %s191 = scalar_lea.vmem %s0, %s190
      $region24: #{seq2seq_transformer_forward.51} parent=19 // pred_fallthru
        _
      // Predicated region
      $region25: #{seq2seq_transformer_forward.51} parent=19 // pred_check
        %p192 = pneg %p57
      $region26: #{seq2seq_transformer_forward.51} parent=19 // pred_check_branch
        %194 = sbr.rel (%p192) target = $region28
      $region27: #{seq2seq_transformer_forward.51} parent=19 // pred_region
        %p195 = scmp.lt.s32.totalorder %s11, 1
        %s196 = scalar_select %p195, %s11, 1
        %s197 = smul.addr %s196, 4
        %s198 = smul.addr %s197, 8
        %s199 = scalar_lea.vmem %s1, %s198
      $region28: #{seq2seq_transformer_forward.51} parent=19 // pred_fallthru
        _
      // Predicated region
      $region29: #{seq2seq_transformer_forward.51} parent=19 // pred_check
        %p200 = pneg %p83
      $region30: #{seq2seq_transformer_forward.51} parent=19 // pred_check_branch
        %202 = sbr.rel (%p200) target = $region32
      $region31: #{seq2seq_transformer_forward.51} parent=19 // pred_region
        %p203 = scmp.lt.s32.totalorder %s11, 1
        %s204 = scalar_select %p203, %s11, 1
        %s205 = smul.addr %s204, 4
        %s206 = smul.addr %s205, 8
        %s207 = scalar_lea.vmem %s2, %s206
      $region32: #{seq2seq_transformer_forward.51} parent=19 // pred_fallthru
        _
      // Predicated region
      $region33: #{seq2seq_transformer_forward.51} parent=19 // pred_check
        %p208 = pneg %p130
      $region34: #{seq2seq_transformer_forward.51} parent=19 // pred_check_branch
        %210 = sbr.rel (%p208) target = $region36
      $region35: #{seq2seq_transformer_forward.51} parent=19 // pred_region
        %p211 = scmp.lt.s32.totalorder %s11, 1
        %s212 = scalar_select %p211, %s11, 1
        %s213 = scalar_lea.vmem %s4, %s212
      $region36: #{seq2seq_transformer_forward.51} parent=19 // pred_fallthru
        _
    $region20: #{seq2seq_transformer_forward.51} parent=5 // pred_fallthru
      _
    %p214 = scmp.le.s32.totalorder 1, %s11
    %p215 = scmp.lt.s32.totalorder %s11, 3
    %p216 = pnand %p214, %p215
    %p217 = pneg %p216
    // Predicated region
    $region37: #{seq2seq_transformer_forward.51} parent=5 // pred_check
      _
    $region38: #{seq2seq_transformer_forward.51} parent=5 // pred_check_branch
      %219 = sbr.rel (%p216) target = $region40
    $region39: #{seq2seq_transformer_forward.51} parent=5 // pred_region
      %s220 = ssub.s32 %s11, 1
      %p221 = scmp.lt.s32.totalorder %s16, 1
      %s222 = scalar_select %p221, %s16, 1
      %s223 = smul.addr %s222, 4
      %s224 = smul.addr %s223, 8
      %s225 = scalar_lea.vmem %s0, %s224
      %p226 = pneg %p37
      %p227 = pneg %p34
      %p228 = scmp.lt.s32.totalorder %s16, 1
      %s229 = scalar_select %p228, %s16, 1
      %s230 = smul.addr %s229, 4
      %s231 = smul.addr %s230, 8
      %s232 = scalar_lea.vmem %s1, %s231
      %p233 = pneg %p63
      %p234 = pneg %p60
      %p235 = scmp.lt.s32.totalorder %s16, 1
      %s236 = scalar_select %p235, %s16, 1
      %s237 = smul.addr %s236, 4
      %s238 = smul.addr %s237, 8
      %s239 = scalar_lea.vmem %s2, %s238
      %p240 = pneg %p89
      %p241 = pneg %p86
      %p242 = pneg %p110
      %p243 = pneg %p107
      %p244 = scmp.lt.s32.totalorder %s16, 1
      %s245 = scalar_select %p244, %s16, 1
      %s246 = scalar_lea.vmem %s4, %s245
      %p247 = pneg %p136
      %p248 = pneg %p133
      %p249 = pneg %p162
      %p250 = pneg %p159
      %p251 = scmp.lt.s32.totalorder %s16, 1
      %s252 = scalar_select %p251, %s16, 1
      %s253 = smul.addr %s252, 4
      %s254 = smul.addr %s253, 8
      %s255 = scalar_lea.vmem %s5, %s254
      %p256 = scmp.lt.s32.totalorder %s16, 1
      %s257 = scalar_select %p256, %s16, 1
      %s258 = smul.addr %s257, 4
      %s259 = smul.addr %s258, 8
      %s260 = scalar_lea.vmem %s0, %s259
      %p261 = scmp.lt.s32.totalorder %s16, 1
      %s262 = scalar_select %p261, %s16, 1
      %s263 = smul.addr %s262, 4
      %s264 = smul.addr %s263, 8
      %s265 = scalar_lea.vmem %s1, %s264
      %p266 = scmp.lt.s32.totalorder %s16, 1
      %s267 = scalar_select %p266, %s16, 1
      %s268 = smul.addr %s267, 4
      %s269 = smul.addr %s268, 8
      %s270 = scalar_lea.vmem %s2, %s269
      %p271 = scmp.lt.s32.totalorder %s16, 1
      %s272 = scalar_select %p271, %s16, 1
      %s273 = scalar_lea.vmem %s4, %s272
      %p274 = scmp.lt.s32.totalorder %s16, 1
      %s275 = scalar_select %p274, %s16, 1
      %s276 = smul.addr %s275, 4
      %s277 = smul.addr %s276, 8
      %s278 = scalar_lea.vmem %s5, %s277
      %v280 = vld [vmem:[%s260] sm:$0x3f]
      %v281 = vld [vmem:[%s260 + $0x8] sm:$0x3f]
      %v282 = vld [vmem:[%s260 + $0x10] sm:$0x3f]
      %v283 = vld [vmem:[%s260 + $0x18] sm:$0x3f]
      %v284 = vpack.c.bf16 %v280, %v280
      %v285 = vpack.c.bf16 %v281, %v281
      %v286 = vpack.c.bf16 %v282, %v282
      %v287 = vpack.c.bf16 %v283, %v283
      %v288 = vld [vmem:[%s265] sm:$0x3f]
      %v289 = vld [vmem:[%s265 + $0x8] sm:$0x3f]
      %v290 = vld [vmem:[%s265 + $0x10] sm:$0x3f]
      %v291 = vld [vmem:[%s265 + $0x18] sm:$0x3f]
      %v292 = vpack.c.bf16 %v288, %v288
      %v293 = vpack.c.bf16 %v289, %v289
      %v294 = vpack.c.bf16 %v290, %v290
      %v295 = vpack.c.bf16 %v291, %v291
      %v296 = vld [vmem:[%s3] sm:$0x3f]
      %vm297 = vcmask 64512
      %v299 = vsel %vm297, %v284, 0
      %v302 = vsel %vm297, %v292, 0
      %304 = vmatpush.bf16.xpose.msra.mxu0 0
      %305 = vmatpush.bf16.xpose.msra.mxu0 0
      %306 = vmatpush.bf16.xpose.msra.mxu0 0
      %307 = vmatpush.bf16.xpose.msra.mxu0 0
      %308 = vmatpush.bf16.xpose.msra.mxu0 0
      %309 = vmatpush.bf16.xpose.msra.mxu0 0
      %310 = vmatpush.bf16.xpose.msra.mxu0 0
      %311 = vmatpush.bf16.xpose.msra.mxu0 %v302
      %312 = vmatmul.bf16.gmra.mxu0 %v299
      %v313 = vpop.f32.mrf.mxu0
      %v314 = vadd.f32 %v296, %v313
      %v315 = vpop.f32.mrf.mxu0
      %316 = vdwg.mxu0
      %v318 = vsel %vm297, %v285, 0
      %v321 = vsel %vm297, %v293, 0
      %323 = vmatpush.bf16.xpose.msra.mxu0 0
      %324 = vmatpush.bf16.xpose.msra.mxu0 0
      %325 = vmatpush.bf16.xpose.msra.mxu0 0
      %326 = vmatpush.bf16.xpose.msra.mxu0 0
      %327 = vmatpush.bf16.xpose.msra.mxu0 0
      %328 = vmatpush.bf16.xpose.msra.mxu0 0
      %329 = vmatpush.bf16.xpose.msra.mxu0 0
      %330 = vmatpush.bf16.xpose.msra.mxu0 %v321
      %331 = vmatmul.bf16.gmra.mxu0 %v318
      %v332 = vpop.f32.mrf.mxu0
      %v333 = vadd.f32 %v296, %v332
      %v334 = vpop.f32.mrf.mxu0
      %335 = vdwg.mxu0
      %v337 = vsel %vm297, %v286, 0
      %v340 = vsel %vm297, %v294, 0
      %342 = vmatpush.bf16.xpose.msra.mxu0 0
      %343 = vmatpush.bf16.xpose.msra.mxu0 0
      %344 = vmatpush.bf16.xpose.msra.mxu0 0
      %345 = vmatpush.bf16.xpose.msra.mxu0 0
      %346 = vmatpush.bf16.xpose.msra.mxu0 0
      %347 = vmatpush.bf16.xpose.msra.mxu0 0
      %348 = vmatpush.bf16.xpose.msra.mxu0 0
      %349 = vmatpush.bf16.xpose.msra.mxu0 %v340
      %350 = vmatmul.bf16.gmra.mxu0 %v337
      %v351 = vpop.f32.mrf.mxu0
      %v352 = vadd.f32 %v296, %v351
      %v353 = vpop.f32.mrf.mxu0
      %354 = vdwg.mxu0
      %v356 = vsel %vm297, %v287, 0
      %v359 = vsel %vm297, %v295, 0
      %361 = vmatpush.bf16.xpose.msra.mxu0 0
      %362 = vmatpush.bf16.xpose.msra.mxu0 0
      %363 = vmatpush.bf16.xpose.msra.mxu0 0
      %364 = vmatpush.bf16.xpose.msra.mxu0 0
      %365 = vmatpush.bf16.xpose.msra.mxu0 0
      %366 = vmatpush.bf16.xpose.msra.mxu0 0
      %367 = vmatpush.bf16.xpose.msra.mxu0 0
      %368 = vmatpush.bf16.xpose.msra.mxu0 %v359
      %369 = vmatmul.bf16.gmra.mxu0 %v356
      %v370 = vpop.f32.mrf.mxu0
      %v371 = vadd.f32 %v296, %v370
      %v372 = vpop.f32.mrf.mxu0
      %373 = vdwg.mxu0
      %v374 = vld [vmem:[%s273] sm:$0x1]
      %v376 = vperm.slane %v374, 0
      %v378 = vadd.f32 %v314, %v376
      %v379 = vadd.f32 %v333, %v376
      %v380 = vadd.f32 %v352, %v376
      %v381 = vadd.f32 %v371, %v376
      %vm382 = vcmask 46080
      %v383 = vsel %vm382, %v378, -inf
      %384 = vmax.xlane.f32.xlu0 %v383
      %v385 = vpop.xlane.xlu0 %384
      %v386 = vsel %vm382, %v379, -inf
      %387 = vmax.xlane.f32.xlu0 %v386
      %v388 = vpop.xlane.xlu0 %387
      %v389 = vsel %vm382, %v380, -inf
      %390 = vmax.xlane.f32.xlu0 %v389
      %v391 = vpop.xlane.xlu0 %390
      %v392 = vsel %vm382, %v381, -inf
      %393 = vmax.xlane.f32.xlu0 %v392
      %v394 = vpop.xlane.xlu0 %393
      %v395 = vsub.f32 %v378, %v385
      %v396 = vsub.f32 %v379, %v388
      %v397 = vsub.f32 %v380, %v391
      %v398 = vsub.f32 %v381, %v394
      %v399 = vmul.f32 %v395, 1.442695
      %v400 = vpow.pop %v399
      %v401 = vmul.f32 %v396, 1.442695
      %v402 = vpow.pop %v401
      %v403 = vmul.f32 %v397, 1.442695
      %v404 = vpow.pop %v403
      %v405 = vmul.f32 %v398, 1.442695
      %v406 = vpow.pop %v405
      %v407 = vsel %vm382, %v400, 0.0
      %408 = vadd.xlane.f32.xlu0 %v407
      %v409 = vpop.xlane.xlu0 %408
      %v410 = vsel %vm382, %v402, 0.0
      %411 = vadd.xlane.f32.xlu0 %v410
      %v412 = vpop.xlane.xlu0 %411
      %v413 = vsel %vm382, %v404, 0.0
      %414 = vadd.xlane.f32.xlu0 %v413
      %v415 = vpop.xlane.xlu0 %414
      %v416 = vsel %vm382, %v406, 0.0
      %417 = vadd.xlane.f32.xlu0 %v416
      %v418 = vpop.xlane.xlu0 %417
      %v419 = vpack.c.bf16 %v400, %v400
      %v420 = vpack.c.bf16 %v402, %v402
      %v421 = vpack.c.bf16 %v404, %v404
      %v422 = vpack.c.bf16 %v406, %v406
      %v423 = vld [vmem:[%s270] sm:$0x3f]
      %v424 = vld [vmem:[%s270 + $0x8] sm:$0x3f]
      %v425 = vld [vmem:[%s270 + $0x10] sm:$0x3f]
      %v426 = vld [vmem:[%s270 + $0x18] sm:$0x3f]
      %v427 = vpack.c.bf16 %v423, %v423
      %v428 = vpack.c.bf16 %v424, %v424
      %v429 = vpack.c.bf16 %v425, %v425
      %v430 = vpack.c.bf16 %v426, %v426
      %vm431 = vcmask 48128
      %v433 = vsel %vm431, %v419, 0
      %vm435 = vcmask 1042432
      %v437 = vsel %vm435, %v427, 0
      %439 = vmatpush.bf16.msra.mxu0 0
      %440 = vmatpush.bf16.msra.mxu0 0
      %441 = vmatpush.bf16.msra.mxu0 0
      %442 = vmatpush.bf16.msra.mxu0 0
      %443 = vmatpush.bf16.msra.mxu0 0
      %444 = vmatpush.bf16.msra.mxu0 0
      %445 = vmatpush.bf16.msra.mxu0 0
      %446 = vmatpush.bf16.msra.mxu0 %v437
      %447 = vmatmul.bf16.gmra.mxu0 %v433
      %v448 = vpop.f32.mrf.mxu0
      %v449 = vadd.f32 0.0, %v448
      %v450 = vpop.f32.mrf.mxu0
      %451 = vdwg.mxu0
      %v453 = vsel %vm431, %v420, 0
      %v456 = vsel %vm435, %v428, 0
      %458 = vmatpush.bf16.msra.mxu0 0
      %459 = vmatpush.bf16.msra.mxu0 0
      %460 = vmatpush.bf16.msra.mxu0 0
      %461 = vmatpush.bf16.msra.mxu0 0
      %462 = vmatpush.bf16.msra.mxu0 0
      %463 = vmatpush.bf16.msra.mxu0 0
      %464 = vmatpush.bf16.msra.mxu0 0
      %465 = vmatpush.bf16.msra.mxu0 %v456
      %466 = vmatmul.bf16.gmra.mxu0 %v453
      %v467 = vpop.f32.mrf.mxu0
      %v468 = vadd.f32 0.0, %v467
      %v469 = vpop.f32.mrf.mxu0
      %470 = vdwg.mxu0
      %v472 = vsel %vm431, %v421, 0
      %v475 = vsel %vm435, %v429, 0
      %477 = vmatpush.bf16.msra.mxu0 0
      %478 = vmatpush.bf16.msra.mxu0 0
      %479 = vmatpush.bf16.msra.mxu0 0
      %480 = vmatpush.bf16.msra.mxu0 0
      %481 = vmatpush.bf16.msra.mxu0 0
      %482 = vmatpush.bf16.msra.mxu0 0
      %483 = vmatpush.bf16.msra.mxu0 0
      %484 = vmatpush.bf16.msra.mxu0 %v475
      %485 = vmatmul.bf16.gmra.mxu0 %v472
      %v486 = vpop.f32.mrf.mxu0
      %v487 = vadd.f32 0.0, %v486
      %v488 = vpop.f32.mrf.mxu0
      %489 = vdwg.mxu0
      %v491 = vsel %vm431, %v422, 0
      %v494 = vsel %vm435, %v430, 0
      %496 = vmatpush.bf16.msra.mxu0 0
      %497 = vmatpush.bf16.msra.mxu0 0
      %498 = vmatpush.bf16.msra.mxu0 0
      %499 = vmatpush.bf16.msra.mxu0 0
      %500 = vmatpush.bf16.msra.mxu0 0
      %501 = vmatpush.bf16.msra.mxu0 0
      %502 = vmatpush.bf16.msra.mxu0 0
      %503 = vmatpush.bf16.msra.mxu0 %v494
      %504 = vmatmul.bf16.gmra.mxu0 %v491
      %v505 = vpop.f32.mrf.mxu0
      %v506 = vadd.f32 0.0, %v505
      %v507 = vpop.f32.mrf.mxu0
      %508 = vdwg.mxu0
      %v509 = vrcp.pop %v409
      %v510 = vrcp.pop %v412
      %v511 = vrcp.pop %v415
      %v512 = vrcp.pop %v418
      %v513 = vmul.f32 %v449, %v509
      %v514 = vmul.f32 %v468, %v510
      %v515 = vmul.f32 %v487, %v511
      %v516 = vmul.f32 %v506, %v512
      %vm517 = vcmask 62464
      %518 = vst.msk [vmem:[%s278] sm:$0x3f] %vm517, %v513
      %519 = vst.msk [vmem:[%s278 + $0x8] sm:$0x3f] %vm517, %v514
      %520 = vst.msk [vmem:[%s278 + $0x10] sm:$0x3f] %vm517, %v515
      %521 = vst.msk [vmem:[%s278 + $0x18] sm:$0x3f] %vm517, %v516
      %p522 = scmp.lt.s32.totalorder %s16, 1
      %s523 = scalar_select %p522, %s16, 1
      %s524 = smul.addr %s523, 4
      %s525 = smul.addr %s524, 8
      %s526 = scalar_lea.vmem %s5, %s525
      // Predicated region
      $region41: #{seq2seq_transformer_forward.51} parent=39 // pred_check
        %p527 = pneg %p159
      $region42: #{seq2seq_transformer_forward.51} parent=39 // pred_check_branch
        %529 = sbr.rel (%p527) target = $region44
      $region43: #{seq2seq_transformer_forward.51} parent=39 // pred_region
        _
      $region44: #{seq2seq_transformer_forward.51} parent=39 // pred_fallthru
        _
    $region40: #{seq2seq_transformer_forward.51} parent=5 // pred_fallthru
      _
    %p530 = scmp.le.s32.totalorder 2, %s11
    // Predicated region
    $region45: #{seq2seq_transformer_forward.51} parent=5 // pred_check
      %p531 = pneg %p530
    $region46: #{seq2seq_transformer_forward.51} parent=5 // pred_check_branch
      %533 = sbr.rel (%p531) target = $region48
    $region47: #{seq2seq_transformer_forward.51} parent=5 // pred_region
      %s534 = ssub.s32 %s11, 2
      // Predicated region
      $region49: #{seq2seq_transformer_forward.51} parent=47 // pred_check
        %p535 = pneg %p165
      $region50: #{seq2seq_transformer_forward.51} parent=47 // pred_check_branch
        %537 = sbr.rel (%p535) target = $region52
      $region51: #{seq2seq_transformer_forward.51} parent=47 // pred_region
        %p538 = scmp.lt.s32.totalorder %s17, 1
        %s539 = scalar_select %p538, %s17, 1
        %s540 = smul.addr %s539, 4
        %s541 = smul.addr %s540, 8
        %s542 = scalar_lea.vmem %s5, %s541
      $region52: #{seq2seq_transformer_forward.51} parent=47 // pred_fallthru
        _
    $region48: #{seq2seq_transformer_forward.51} parent=5 // pred_fallthru
      _
  $region6: #{seq2seq_transformer_forward.51} parent=0 // loop_footer
    %s15 = sadd.s32 1, %s11
  $region7: #{seq2seq_transformer_forward.51} parent=0 // loop_footer_branch
    %10 = sbr.rel target = $region3
  $region8: #{seq2seq_transformer_forward.51} parent=0 // loop_exit
    _

// kernel: seq2seq_transformer_forward.37
$region0: #{seq2seq_transformer_forward.37}
  #allocation0 [shape = 'u32[]', space=smem, size = 0x4, offset = 0x4, fixed_abs, tag = 'smem constant byte address 0x4 - core index']
  #allocation1 [shape = 'u32[72,128]{1,0:T(1,128)}', space=vmem, size = 0x9000, scoped, tag = 'internal scratch']
  #allocation2 [shape = 'f32[16,96]{1,0:T(8,128)}', space=vmem, size = 0x2000, scoped, tag = 'scratch operand']
  %s0 = inlined_call_operand.vmem [shape: f32[16,32], index: 0, kind: input, shape index: {}]
  %s1 = inlined_call_operand.vmem [shape: bf16[32,96], index: 1, kind: input, shape index: {}]
  %s2 = inlined_call_operand.vmem [shape: f32[1,96], index: 2, kind: input, shape index: {}]
  %s3 = inlined_call_operand.vmem [shape: f32[16,96], index: 3, kind: output, shape index: {}]
  %s4 = sld [smem:[#allocation0]]
  $region30: #{seq2seq_transformer_forward.37} parent=0
    _
  %s6 = ssub.s32 1, %s4
  %s7 = scalar_select 0, %s6, %s4
  // Predicated region
  $region2: #{seq2seq_transformer_forward.37} parent=0 // pred_check
    _
  $region3: #{seq2seq_transformer_forward.37} parent=0 // pred_check_branch
    %9 = sbr.rel (0) target = $region5
  $region4: #{seq2seq_transformer_forward.37} parent=0 // pred_region
    _
  $region5: #{seq2seq_transformer_forward.37} parent=0 // pred_fallthru
    _
  // Predicated region
  $region6: #{seq2seq_transformer_forward.37} parent=0 // pred_check
    _
  $region7: #{seq2seq_transformer_forward.37} parent=0 // pred_check_branch
    %11 = sbr.rel (0) target = $region9
  $region8: #{seq2seq_transformer_forward.37} parent=0 // pred_region
    _
  $region9: #{seq2seq_transformer_forward.37} parent=0 // pred_fallthru
    _
  // Predicated region
  $region10: #{seq2seq_transformer_forward.37} parent=0 // pred_check
    _
  $region11: #{seq2seq_transformer_forward.37} parent=0 // pred_check_branch
    %13 = sbr.rel (0) target = $region13
  $region12: #{seq2seq_transformer_forward.37} parent=0 // pred_region
    _
  $region13: #{seq2seq_transformer_forward.37} parent=0 // pred_fallthru
    _
  %p15 = scmp.eq.s32.totalorder 0, 0
  // Predicated region
  $region14: #{seq2seq_transformer_forward.37} parent=0 // pred_check
    %p16 = pneg %p15
  $region15: #{seq2seq_transformer_forward.37} parent=0 // pred_check_branch
    %18 = sbr.rel (%p16) target = $region17
  $region16: #{seq2seq_transformer_forward.37} parent=0 // pred_region
    %vm19 = vcmask 785408
    %20 = vst.msk [vmem:[#allocation2] sm:$0xff] %vm19, 0.0
    %21 = vst.msk [vmem:[#allocation2 + $0x8] sm:$0xff] %vm19, 0.0
  $region17: #{seq2seq_transformer_forward.37} parent=0 // pred_fallthru
    _
  %v22 = vld [vmem:[#allocation2] sm:$0xff]
  %v23 = vld [vmem:[#allocation2 + $0x8] sm:$0xff]
  %v24 = vld [vmem:[%s0] sm:$0xff]
  %v25 = vld [vmem:[%s0 + $0x8] sm:$0xff]
  %v26 = vpack.c.bf16 %v25, %v24
  %v27 = vld [vmem:[%s1] sm:$0xf]
  %v28 = vld [vmem:[%s1 + $0x4] sm:$0xf]
  %v29 = vld [vmem:[%s1 + $0x8] sm:$0xf]
  %v30 = vld [vmem:[%s1 + $0xc] sm:$0xf]
  %v35 = vunpack.c.l.b16 %v27
  %v36 = vunpack.c.l.b16 %v28
  %v37 = vunpack.c.l.b16 %v29
  %v38 = vunpack.c.l.b16 %v30
  %v39 = vpack.c.b16 %v36, %v35
  %v40 = vpack.c.b16 %v38, %v37
  %vm43 = vcmask 261120
  %v45 = vsel %vm43, %v26, 0
  %47 = vmatpush.bf16.msra.mxu0 0
  %48 = vmatpush.bf16.msra.mxu0 0
  %49 = vmatpush.bf16.msra.mxu0 0
  %50 = vmatpush.bf16.msra.mxu0 0
  %51 = vmatpush.bf16.msra.mxu0 0
  %52 = vmatpush.bf16.msra.mxu0 0
  %53 = vmatpush.bf16.msra.mxu0 %v40
  %54 = vmatpush.bf16.msra.mxu0 %v39
  %55 = vmatmul.bf16.gmra.mxu0 %v45
  %v56 = vpop.f32.mrf.mxu0
  %v57 = vadd.f32 0.0, %v56
  %v58 = vpop.f32.mrf.mxu0
  %v59 = vadd.f32 0.0, %v58
  %60 = vdwg.mxu0
  %v61 = vadd.f32 %v22, %v57
  %v62 = vadd.f32 %v23, %v59
  %vm63 = vcmask 785408
  %64 = vst.msk [vmem:[#allocation2] sm:$0xff] %vm63, %v61
  %65 = vst.msk [vmem:[#allocation2 + $0x8] sm:$0xff] %vm63, %v62
  // Predicated region
  $region18: #{seq2seq_transformer_forward.37} parent=0 // pred_check
    %p66 = pneg %p15
  $region19: #{seq2seq_transformer_forward.37} parent=0 // pred_check_branch
    %68 = sbr.rel (%p66) target = $region21
  $region20: #{seq2seq_transformer_forward.37} parent=0 // pred_region
    %v69 = vld [vmem:[#allocation2] sm:$0xff]
    %v70 = vld [vmem:[#allocation2 + $0x8] sm:$0xff]
    %v71 = vld [vmem:[%s2] sm:$0x1]
    %v73 = vperm.slane %v71, 0
    %v75 = vadd.f32 %v69, %v73
    %v76 = vadd.f32 %v70, %v73
    %77 = vst.msk [vmem:[%s3] sm:$0xff] %vm63, %v75
    %78 = vst.msk [vmem:[%s3 + $0x8] sm:$0xff] %vm63, %v76
  $region21: #{seq2seq_transformer_forward.37} parent=0 // pred_fallthru
    _
  // Predicated region
  $region22: #{seq2seq_transformer_forward.37} parent=0 // pred_check
    _
  $region23: #{seq2seq_transformer_forward.37} parent=0 // pred_check_branch
    %80 = sbr.rel (0) target = $region25
  $region24: #{seq2seq_transformer_forward.37} parent=0 // pred_region
    _
  $region25: #{seq2seq_transformer_forward.37} parent=0 // pred_fallthru
    _
  // Predicated region
  $region26: #{seq2seq_transformer_forward.37} parent=0 // pred_check
    _
  $region27: #{seq2seq_transformer_forward.37} parent=0 // pred_check_branch
    %82 = sbr.rel (0) target = $region29
  $region28: #{seq2seq_transformer_forward.37} parent=0 // pred_region
    _
  $region29: #{seq2seq_transformer_forward.37} parent=0 // pred_fallthru
    _

// kernel: seq2seq_transformer_forward.39
$region0: #{seq2seq_transformer_forward.39}
  #allocation0 [shape = 'u32[]', space=smem, size = 0x4, offset = 0x4, fixed_abs, tag = 'smem constant byte address 0x4 - core index']
  #allocation1 [shape = 'u32[72,128]{1,0:T(1,128)}', space=vmem, size = 0x9000, scoped, tag = 'internal scratch']
  #allocation2 [shape = 'f32[16,32]{1,0:T(8,128)}', space=vmem, size = 0x2000, scoped, tag = 'scratch operand']
  %s0 = inlined_call_operand.vmem [shape: f32[16,32], index: 0, kind: input, shape index: {}]
  %s1 = inlined_call_operand.vmem [shape: bf16[32,32], index: 1, kind: input, shape index: {}]
  %s2 = inlined_call_operand.vmem [shape: f32[1,32], index: 2, kind: input, shape index: {}]
  %s3 = inlined_call_operand.vmem [shape: f32[16,32], index: 3, kind: output, shape index: {}]
  %s4 = sld [smem:[#allocation0]]
  $region30: #{seq2seq_transformer_forward.39} parent=0
    _
  %s6 = ssub.s32 1, %s4
  %s7 = scalar_select 0, %s6, %s4
  // Predicated region
  $region2: #{seq2seq_transformer_forward.39} parent=0 // pred_check
    _
  $region3: #{seq2seq_transformer_forward.39} parent=0 // pred_check_branch
    %9 = sbr.rel (0) target = $region5
  $region4: #{seq2seq_transformer_forward.39} parent=0 // pred_region
    _
  $region5: #{seq2seq_transformer_forward.39} parent=0 // pred_fallthru
    _
  // Predicated region
  $region6: #{seq2seq_transformer_forward.39} parent=0 // pred_check
    _
  $region7: #{seq2seq_transformer_forward.39} parent=0 // pred_check_branch
    %11 = sbr.rel (0) target = $region9
  $region8: #{seq2seq_transformer_forward.39} parent=0 // pred_region
    _
  $region9: #{seq2seq_transformer_forward.39} parent=0 // pred_fallthru
    _
  // Predicated region
  $region10: #{seq2seq_transformer_forward.39} parent=0 // pred_check
    _
  $region11: #{seq2seq_transformer_forward.39} parent=0 // pred_check_branch
    %13 = sbr.rel (0) target = $region13
  $region12: #{seq2seq_transformer_forward.39} parent=0 // pred_region
    _
  $region13: #{seq2seq_transformer_forward.39} parent=0 // pred_fallthru
    _
  %p15 = scmp.eq.s32.totalorder 0, 0
  // Predicated region
  $region14: #{seq2seq_transformer_forward.39} parent=0 // pred_check
    %p16 = pneg %p15
  $region15: #{seq2seq_transformer_forward.39} parent=0 // pred_check_branch
    %18 = sbr.rel (%p16) target = $region17
  $region16: #{seq2seq_transformer_forward.39} parent=0 // pred_region
    %vm19 = vcmask 261120
    %20 = vst.msk [vmem:[#allocation2] sm:$0xff] %vm19, 0.0
    %21 = vst.msk [vmem:[#allocation2 + $0x8] sm:$0xff] %vm19, 0.0
  $region17: #{seq2seq_transformer_forward.39} parent=0 // pred_fallthru
    _
  %v22 = vld [vmem:[#allocation2] sm:$0xff]
  %v23 = vld [vmem:[#allocation2 + $0x8] sm:$0xff]
  %v24 = vld [vmem:[%s0] sm:$0xff]
  %v25 = vld [vmem:[%s0 + $0x8] sm:$0xff]
  %v26 = vpack.c.bf16 %v25, %v24
  %v27 = vld [vmem:[%s1] sm:$0xf]
  %v28 = vld [vmem:[%s1 + $0x4] sm:$0xf]
  %v29 = vld [vmem:[%s1 + $0x8] sm:$0xf]
  %v30 = vld [vmem:[%s1 + $0xc] sm:$0xf]
  %v35 = vunpack.c.l.b16 %v27
  %v36 = vunpack.c.l.b16 %v28
  %v37 = vunpack.c.l.b16 %v29
  %v38 = vunpack.c.l.b16 %v30
  %v39 = vpack.c.b16 %v36, %v35
  %v40 = vpack.c.b16 %v38, %v37
  %vm43 = vcmask 261120
  %v45 = vsel %vm43, %v26, 0
  %47 = vmatpush.bf16.msra.mxu0 0
  %48 = vmatpush.bf16.msra.mxu0 0
  %49 = vmatpush.bf16.msra.mxu0 0
  %50 = vmatpush.bf16.msra.mxu0 0
  %51 = vmatpush.bf16.msra.mxu0 0
  %52 = vmatpush.bf16.msra.mxu0 0
  %53 = vmatpush.bf16.msra.mxu0 %v40
  %54 = vmatpush.bf16.msra.mxu0 %v39
  %55 = vmatmul.bf16.gmra.mxu0 %v45
  %v56 = vpop.f32.mrf.mxu0
  %v57 = vadd.f32 0.0, %v56
  %v58 = vpop.f32.mrf.mxu0
  %v59 = vadd.f32 0.0, %v58
  %60 = vdwg.mxu0
  %v61 = vadd.f32 %v22, %v57
  %v62 = vadd.f32 %v23, %v59
  %63 = vst.msk [vmem:[#allocation2] sm:$0xff] %vm43, %v61
  %64 = vst.msk [vmem:[#allocation2 + $0x8] sm:$0xff] %vm43, %v62
  // Predicated region
  $region18: #{seq2seq_transformer_forward.39} parent=0 // pred_check
    %p65 = pneg %p15
  $region19: #{seq2seq_transformer_forward.39} parent=0 // pred_check_branch
    %67 = sbr.rel (%p65) target = $region21
  $region20: #{seq2seq_transformer_forward.39} parent=0 // pred_region
    %v68 = vld [vmem:[#allocation2] sm:$0xff]
    %v69 = vld [vmem:[#allocation2 + $0x8] sm:$0xff]
    %v70 = vld [vmem:[%s2] sm:$0x1]
    %v72 = vperm.slane %v70, 0
    %v74 = vadd.f32 %v68, %v72
    %v75 = vadd.f32 %v69, %v72
    %76 = vst.msk [vmem:[%s3] sm:$0xff] %vm43, %v74
    %77 = vst.msk [vmem:[%s3 + $0x8] sm:$0xff] %vm43, %v75
  $region21: #{seq2seq_transformer_forward.39} parent=0 // pred_fallthru
    _
  // Predicated region
  $region22: #{seq2seq_transformer_forward.39} parent=0 // pred_check
    _
  $region23: #{seq2seq_transformer_forward.39} parent=0 // pred_check_branch
    %79 = sbr.rel (0) target = $region25
  $region24: #{seq2seq_transformer_forward.39} parent=0 // pred_region
    _
  $region25: #{seq2seq_transformer_forward.39} parent=0 // pred_fallthru
    _
  // Predicated region
  $region26: #{seq2seq_transformer_forward.39} parent=0 // pred_check
    _
  $region27: #{seq2seq_transformer_forward.39} parent=0 // pred_check_branch
    %81 = sbr.rel (0) target = $region29
  $region28: #{seq2seq_transformer_forward.39} parent=0 // pred_region
    _
  $region29: #{seq2seq_transformer_forward.39} parent=0 // pred_fallthru
    _

// kernel: seq2seq_transformer_forward.38
$region0: #{seq2seq_transformer_forward.38}
  #allocation0 [shape = 'u32[]', space=smem, size = 0x4, offset = 0x4, fixed_abs, tag = 'smem constant byte address 0x4 - core index']
  #allocation1 [shape = 'u32[72,128]{1,0:T(1,128)}', space=vmem, size = 0x9000, scoped, tag = 'internal scratch']
  %s0 = inlined_call_operand.vmem [shape: f32[2,4,8,8], index: 0, kind: input, shape index: {}]
  %s1 = inlined_call_operand.vmem [shape: f32[2,4,8,8], index: 1, kind: input, shape index: {}]
  %s2 = inlined_call_operand.vmem [shape: f32[2,4,8,8], index: 2, kind: input, shape index: {}]
  %s3 = inlined_call_operand.vmem [shape: f32[8,8], index: 3, kind: input, shape index: {}]
  %s4 = inlined_call_operand.vmem [shape: f32[2,1,8], index: 4, kind: input, shape index: {}]
  %s5 = inlined_call_operand.vmem [shape: f32[2,4,8,8], index: 5, kind: output, shape index: {}]
  %s6 = sld [smem:[#allocation0]]
  $region53: #{seq2seq_transformer_forward.38} parent=0
    _
  %s8 = ssub.s32 1, %s6
  %s9 = scalar_select 0, %s8, %s6
  loop: start=0, step=1, limit=4
  $region2: #{seq2seq_transformer_forward.38} parent=0 // loop_pre_header
    _
  $region3: #{seq2seq_transformer_forward.38} parent=0 // loop_header
    %s11 = sphi 0, %s15
    %p12 = scmp.ge.s32.totalorder %s11, 4
    %s21 = sphi 0, %s23
    %s24 = sphi 0, %s21
    %s25 = sphi 0, %s24
    %s41 = sphi 0, %s25
    %s47 = sphi 0, %s49
    %s50 = sphi 0, %s47
    %s51 = sphi 0, %s50
    %s67 = sphi 0, %s51
    %s73 = sphi 0, %s75
    %s76 = sphi 0, %s73
    %s77 = sphi 0, %s76
    %s93 = sphi 0, %s77
    %s97 = sphi 0, %s97
    %s99 = sphi 0, %s97
    %s100 = sphi 0, %s99
    %s114 = sphi 0, %s100
    %s120 = sphi 0, %s122
    %s123 = sphi 0, %s120
    %s124 = sphi 0, %s123
    %s140 = sphi 0, %s124
    %s146 = sphi 0, %s148
    %s149 = sphi 0, %s146
    %s150 = sphi 0, %s149
    %s166 = sphi 0, %s150
  $region4: #{seq2seq_transformer_forward.38} parent=0 // loop_header_branch
    %14 = sbr.rel (%p12) target = $region8
  $region5: #{seq2seq_transformer_forward.38} parent=0 // loop_body
    %s16 = ssub.s32 %s11, 1
    %s17 = ssub.s32 %s11, 2
    %s18 = sadd.s32 %s11, 1
    %s19 = ssub.s32 %s11, %s18
    %p20 = scmp.eq.s32.totalorder %s19, 0
    %s22 = sadd.s32 %s21, 1
    %s23 = scalar_select %p20, %s21, %s22
    %p26 = pneg %p20
    %p27 = scmp.eq.s32.totalorder %s11, 1
    %p28 = por %p26, %p27
    %p29 = scmp.ne.s32.totalorder %s21, %s24
    %p30 = scmp.eq.s32.totalorder %s11, 0
    %p31 = por %p29, %p30
    %p32 = scmp.ne.s32.totalorder %s21, %s24
    %p33 = scmp.eq.s32.totalorder %s16, 1
    %p34 = por %p32, %p33
    %p35 = scmp.ne.s32.totalorder %s24, %s25
    %p36 = scmp.eq.s32.totalorder %s16, 0
    %p37 = por %p35, %p36
    %p38 = scmp.ne.s32.totalorder %s24, %s25
    %p39 = scmp.eq.s32.totalorder %s17, 1
    %p40 = por %p38, %p39
    %p42 = scmp.ne.s32.totalorder %s25, %s41
    %p43 = scmp.eq.s32.totalorder %s17, 0
    %p44 = por %p42, %p43
    %s45 = ssub.s32 %s11, %s18
    %p46 = scmp.eq.s32.totalorder %s45, 0
    %s48 = sadd.s32 %s47, 1
    %s49 = scalar_select %p46, %s47, %s48
    %p52 = pneg %p46
    %p53 = scmp.eq.s32.totalorder %s11, 1
    %p54 = por %p52, %p53
    %p55 = scmp.ne.s32.totalorder %s47, %s50
    %p56 = scmp.eq.s32.totalorder %s11, 0
    %p57 = por %p55, %p56
    %p58 = scmp.ne.s32.totalorder %s47, %s50
    %p59 = scmp.eq.s32.totalorder %s16, 1
    %p60 = por %p58, %p59
    %p61 = scmp.ne.s32.totalorder %s50, %s51
    %p62 = scmp.eq.s32.totalorder %s16, 0
    %p63 = por %p61, %p62
    %p64 = scmp.ne.s32.totalorder %s50, %s51
    %p65 = scmp.eq.s32.totalorder %s17, 1
    %p66 = por %p64, %p65
    %p68 = scmp.ne.s32.totalorder %s51, %s67
    %p69 = scmp.eq.s32.totalorder %s17, 0
    %p70 = por %p68, %p69
    %s71 = ssub.s32 %s11, %s18
    %p72 = scmp.eq.s32.totalorder %s71, 0
    %s74 = sadd.s32 %s73, 1
    %s75 = scalar_select %p72, %s73, %s74
    %p78 = pneg %p72
    %p79 = scmp.eq.s32.totalorder %s11, 1
    %p80 = por %p78, %p79
    %p81 = scmp.ne.s32.totalorder %s73, %s76
    %p82 = scmp.eq.s32.totalorder %s11, 0
    %p83 = por %p81, %p82
    %p84 = scmp.ne.s32.totalorder %s73, %s76
    %p85 = scmp.eq.s32.totalorder %s16, 1
    %p86 = por %p84, %p85
    %p87 = scmp.ne.s32.totalorder %s76, %s77
    %p88 = scmp.eq.s32.totalorder %s16, 0
    %p89 = por %p87, %p88
    %p90 = scmp.ne.s32.totalorder %s76, %s77
    %p91 = scmp.eq.s32.totalorder %s17, 1
    %p92 = por %p90, %p91
    %p94 = scmp.ne.s32.totalorder %s77, %s93
    %p95 = scmp.eq.s32.totalorder %s17, 0
    %p96 = por %p94, %p95
    %s98 = sadd.s32 %s97, 1
    %p101 = scmp.eq.s32.totalorder %s11, 1
    %p102 = scmp.ne.s32.totalorder %s97, %s99
    %p103 = scmp.eq.s32.totalorder %s11, 0
    %p104 = por %p102, %p103
    %p105 = scmp.ne.s32.totalorder %s97, %s99
    %p106 = scmp.eq.s32.totalorder %s16, 1
    %p107 = por %p105, %p106
    %p108 = scmp.ne.s32.totalorder %s99, %s100
    %p109 = scmp.eq.s32.totalorder %s16, 0
    %p110 = por %p108, %p109
    %p111 = scmp.ne.s32.totalorder %s99, %s100
    %p112 = scmp.eq.s32.totalorder %s17, 1
    %p113 = por %p111, %p112
    %p115 = scmp.ne.s32.totalorder %s100, %s114
    %p116 = scmp.eq.s32.totalorder %s17, 0
    %p117 = por %p115, %p116
    %s118 = ssub.s32 %s11, %s18
    %p119 = scmp.eq.s32.totalorder %s118, 0
    %s121 = sadd.s32 %s120, 1
    %s122 = scalar_select %p119, %s120, %s121
    %p125 = pneg %p119
    %p126 = scmp.eq.s32.totalorder %s11, 1
    %p127 = por %p125, %p126
    %p128 = scmp.ne.s32.totalorder %s120, %s123
    %p129 = scmp.eq.s32.totalorder %s11, 0
    %p130 = por %p128, %p129
    %p131 = scmp.ne.s32.totalorder %s120, %s123
    %p132 = scmp.eq.s32.totalorder %s16, 1
    %p133 = por %p131, %p132
    %p134 = scmp.ne.s32.totalorder %s123, %s124
    %p135 = scmp.eq.s32.totalorder %s16, 0
    %p136 = por %p134, %p135
    %p137 = scmp.ne.s32.totalorder %s123, %s124
    %p138 = scmp.eq.s32.totalorder %s17, 1
    %p139 = por %p137, %p138
    %p141 = scmp.ne.s32.totalorder %s124, %s140
    %p142 = scmp.eq.s32.totalorder %s17, 0
    %p143 = por %p141, %p142
    %s144 = ssub.s32 %s11, %s18
    %p145 = scmp.eq.s32.totalorder %s144, 0
    %s147 = sadd.s32 %s146, 1
    %s148 = scalar_select %p145, %s146, %s147
    %p151 = pneg %p145
    %p152 = scmp.eq.s32.totalorder %s11, 1
    %p153 = por %p151, %p152
    %p154 = scmp.ne.s32.totalorder %s146, %s149
    %p155 = scmp.eq.s32.totalorder %s11, 0
    %p156 = por %p154, %p155
    %p157 = scmp.ne.s32.totalorder %s146, %s149
    %p158 = scmp.eq.s32.totalorder %s16, 1
    %p159 = por %p157, %p158
    %p160 = scmp.ne.s32.totalorder %s149, %s150
    %p161 = scmp.eq.s32.totalorder %s16, 0
    %p162 = por %p160, %p161
    %p163 = scmp.ne.s32.totalorder %s149, %s150
    %p164 = scmp.eq.s32.totalorder %s17, 1
    %p165 = por %p163, %p164
    %p167 = scmp.ne.s32.totalorder %s150, %s166
    %p168 = scmp.eq.s32.totalorder %s17, 0
    %p169 = por %p167, %p168
    %p170 = scmp.le.s32.totalorder 1, %s11
    %p171 = scmp.lt.s32.totalorder %s11, 3
    %p172 = pnand %p170, %p171
    %p173 = pneg %p172
    // Predicated region
    $region9: #{seq2seq_transformer_forward.38} parent=5 // pred_check
      _
    $region10: #{seq2seq_transformer_forward.38} parent=5 // pred_check_branch
      %175 = sbr.rel (%p172) target = $region12
    $region11: #{seq2seq_transformer_forward.38} parent=5 // pred_region
      %s176 = ssub.s32 %s11, 1
      // Predicated region
      $region13: #{seq2seq_transformer_forward.38} parent=11 // pred_check
        %p177 = pneg %p110
      $region14: #{seq2seq_transformer_forward.38} parent=11 // pred_check_branch
        %179 = sbr.rel (%p177) target = $region16
      $region15: #{seq2seq_transformer_forward.38} parent=11 // pred_region
        _
      $region16: #{seq2seq_transformer_forward.38} parent=11 // pred_fallthru
        _
    $region12: #{seq2seq_transformer_forward.38} parent=5 // pred_fallthru
      _
    %p180 = scmp.lt.s32.totalorder %s11, 2
    // Predicated region
    $region17: #{seq2seq_transformer_forward.38} parent=5 // pred_check
      %p181 = pneg %p180
    $region18: #{seq2seq_transformer_forward.38} parent=5 // pred_check_branch
      %183 = sbr.rel (%p181) target = $region20
    $region19: #{seq2seq_transformer_forward.38} parent=5 // pred_region
      // Predicated region
      $region21: #{seq2seq_transformer_forward.38} parent=19 // pred_check
        %p184 = pneg %p31
      $region22: #{seq2seq_transformer_forward.38} parent=19 // pred_check_branch
        %186 = sbr.rel (%p184) target = $region24
      $region23: #{seq2seq_transformer_forward.38} parent=19 // pred_region
        %p187 = scmp.lt.s32.totalorder %s11, 1
        %s188 = scalar_select %p187, %s11, 1
        %s189 = smul.addr %s188, 4
        %s190 = smul.addr %s189, 8
        %s191 = scalar_lea.vmem %s0, %s190
      $region24: #{seq2seq_transformer_forward.38} parent=19 // pred_fallthru
        _
      // Predicated region
      $region25: #{seq2seq_transformer_forward.38} parent=19 // pred_check
        %p192 = pneg %p57
      $region26: #{seq2seq_transformer_forward.38} parent=19 // pred_check_branch
        %194 = sbr.rel (%p192) target = $region28
      $region27: #{seq2seq_transformer_forward.38} parent=19 // pred_region
        %p195 = scmp.lt.s32.totalorder %s11, 1
        %s196 = scalar_select %p195, %s11, 1
        %s197 = smul.addr %s196, 4
        %s198 = smul.addr %s197, 8
        %s199 = scalar_lea.vmem %s1, %s198
      $region28: #{seq2seq_transformer_forward.38} parent=19 // pred_fallthru
        _
      // Predicated region
      $region29: #{seq2seq_transformer_forward.38} parent=19 // pred_check
        %p200 = pneg %p83
      $region30: #{seq2seq_transformer_forward.38} parent=19 // pred_check_branch
        %202 = sbr.rel (%p200) target = $region32
      $region31: #{seq2seq_transformer_forward.38} parent=19 // pred_region
        %p203 = scmp.lt.s32.totalorder %s11, 1
        %s204 = scalar_select %p203, %s11, 1
        %s205 = smul.addr %s204, 4
        %s206 = smul.addr %s205, 8
        %s207 = scalar_lea.vmem %s2, %s206
      $region32: #{seq2seq_transformer_forward.38} parent=19 // pred_fallthru
        _
      // Predicated region
      $region33: #{seq2seq_transformer_forward.38} parent=19 // pred_check
        %p208 = pneg %p130
      $region34: #{seq2seq_transformer_forward.38} parent=19 // pred_check_branch
        %210 = sbr.rel (%p208) target = $region36
      $region35: #{seq2seq_transformer_forward.38} parent=19 // pred_region
        %p211 = scmp.lt.s32.totalorder %s11, 1
        %s212 = scalar_select %p211, %s11, 1
        %s213 = scalar_lea.vmem %s4, %s212
      $region36: #{seq2seq_transformer_forward.38} parent=19 // pred_fallthru
        _
    $region20: #{seq2seq_transformer_forward.38} parent=5 // pred_fallthru
      _
    %p214 = scmp.le.s32.totalorder 1, %s11
    %p215 = scmp.lt.s32.totalorder %s11, 3
    %p216 = pnand %p214, %p215
    %p217 = pneg %p216
    // Predicated region
    $region37: #{seq2seq_transformer_forward.38} parent=5 // pred_check
      _
    $region38: #{seq2seq_transformer_forward.38} parent=5 // pred_check_branch
      %219 = sbr.rel (%p216) target = $region40
    $region39: #{seq2seq_transformer_forward.38} parent=5 // pred_region
      %s220 = ssub.s32 %s11, 1
      %p221 = scmp.lt.s32.totalorder %s16, 1
      %s222 = scalar_select %p221, %s16, 1
      %s223 = smul.addr %s222, 4
      %s224 = smul.addr %s223, 8
      %s225 = scalar_lea.vmem %s0, %s224
      %p226 = pneg %p37
      %p227 = pneg %p34
      %p228 = scmp.lt.s32.totalorder %s16, 1
      %s229 = scalar_select %p228, %s16, 1
      %s230 = smul.addr %s229, 4
      %s231 = smul.addr %s230, 8
      %s232 = scalar_lea.vmem %s1, %s231
      %p233 = pneg %p63
      %p234 = pneg %p60
      %p235 = scmp.lt.s32.totalorder %s16, 1
      %s236 = scalar_select %p235, %s16, 1
      %s237 = smul.addr %s236, 4
      %s238 = smul.addr %s237, 8
      %s239 = scalar_lea.vmem %s2, %s238
      %p240 = pneg %p89
      %p241 = pneg %p86
      %p242 = pneg %p110
      %p243 = pneg %p107
      %p244 = scmp.lt.s32.totalorder %s16, 1
      %s245 = scalar_select %p244, %s16, 1
      %s246 = scalar_lea.vmem %s4, %s245
      %p247 = pneg %p136
      %p248 = pneg %p133
      %p249 = pneg %p162
      %p250 = pneg %p159
      %p251 = scmp.lt.s32.totalorder %s16, 1
      %s252 = scalar_select %p251, %s16, 1
      %s253 = smul.addr %s252, 4
      %s254 = smul.addr %s253, 8
      %s255 = scalar_lea.vmem %s5, %s254
      %p256 = scmp.lt.s32.totalorder %s16, 1
      %s257 = scalar_select %p256, %s16, 1
      %s258 = smul.addr %s257, 4
      %s259 = smul.addr %s258, 8
      %s260 = scalar_lea.vmem %s0, %s259
      %p261 = scmp.lt.s32.totalorder %s16, 1
      %s262 = scalar_select %p261, %s16, 1
      %s263 = smul.addr %s262, 4
      %s264 = smul.addr %s263, 8
      %s265 = scalar_lea.vmem %s1, %s264
      %p266 = scmp.lt.s32.totalorder %s16, 1
      %s267 = scalar_select %p266, %s16, 1
      %s268 = smul.addr %s267, 4
      %s269 = smul.addr %s268, 8
      %s270 = scalar_lea.vmem %s2, %s269
      %p271 = scmp.lt.s32.totalorder %s16, 1
      %s272 = scalar_select %p271, %s16, 1
      %s273 = scalar_lea.vmem %s4, %s272
      %p274 = scmp.lt.s32.totalorder %s16, 1
      %s275 = scalar_select %p274, %s16, 1
      %s276 = smul.addr %s275, 4
      %s277 = smul.addr %s276, 8
      %s278 = scalar_lea.vmem %s5, %s277
      %v280 = vld [vmem:[%s260] sm:$0xff]
      %v281 = vld [vmem:[%s260 + $0x8] sm:$0xff]
      %v282 = vld [vmem:[%s260 + $0x10] sm:$0xff]
      %v283 = vld [vmem:[%s260 + $0x18] sm:$0xff]
      %v284 = vpack.c.bf16 %v280, %v280
      %v285 = vpack.c.bf16 %v281, %v281
      %v286 = vpack.c.bf16 %v282, %v282
      %v287 = vpack.c.bf16 %v283, %v283
      %v288 = vld [vmem:[%s265] sm:$0xff]
      %v289 = vld [vmem:[%s265 + $0x8] sm:$0xff]
      %v290 = vld [vmem:[%s265 + $0x10] sm:$0xff]
      %v291 = vld [vmem:[%s265 + $0x18] sm:$0xff]
      %v292 = vpack.c.bf16 %v288, %v288
      %v293 = vpack.c.bf16 %v289, %v289
      %v294 = vpack.c.bf16 %v290, %v290
      %v295 = vpack.c.bf16 %v291, %v291
      %v296 = vld [vmem:[%s3] sm:$0xff]
      %vm297 = vcmask 64512
      %v299 = vsel %vm297, %v284, 0
      %v302 = vsel %vm297, %v292, 0
      %304 = vmatpush.bf16.xpose.msra.mxu0 0
      %305 = vmatpush.bf16.xpose.msra.mxu0 0
      %306 = vmatpush.bf16.xpose.msra.mxu0 0
      %307 = vmatpush.bf16.xpose.msra.mxu0 0
      %308 = vmatpush.bf16.xpose.msra.mxu0 0
      %309 = vmatpush.bf16.xpose.msra.mxu0 0
      %310 = vmatpush.bf16.xpose.msra.mxu0 0
      %311 = vmatpush.bf16.xpose.msra.mxu0 %v302
      %312 = vmatmul.bf16.gmra.mxu0 %v299
      %v313 = vpop.f32.mrf.mxu0
      %v314 = vadd.f32 %v296, %v313
      %v315 = vpop.f32.mrf.mxu0
      %316 = vdwg.mxu0
      %v318 = vsel %vm297, %v285, 0
      %v321 = vsel %vm297, %v293, 0
      %323 = vmatpush.bf16.xpose.msra.mxu0 0
      %324 = vmatpush.bf16.xpose.msra.mxu0 0
      %325 = vmatpush.bf16.xpose.msra.mxu0 0
      %326 = vmatpush.bf16.xpose.msra.mxu0 0
      %327 = vmatpush.bf16.xpose.msra.mxu0 0
      %328 = vmatpush.bf16.xpose.msra.mxu0 0
      %329 = vmatpush.bf16.xpose.msra.mxu0 0
      %330 = vmatpush.bf16.xpose.msra.mxu0 %v321
      %331 = vmatmul.bf16.gmra.mxu0 %v318
      %v332 = vpop.f32.mrf.mxu0
      %v333 = vadd.f32 %v296, %v332
      %v334 = vpop.f32.mrf.mxu0
      %335 = vdwg.mxu0
      %v337 = vsel %vm297, %v286, 0
      %v340 = vsel %vm297, %v294, 0
      %342 = vmatpush.bf16.xpose.msra.mxu0 0
      %343 = vmatpush.bf16.xpose.msra.mxu0 0
      %344 = vmatpush.bf16.xpose.msra.mxu0 0
      %345 = vmatpush.bf16.xpose.msra.mxu0 0
      %346 = vmatpush.bf16.xpose.msra.mxu0 0
      %347 = vmatpush.bf16.xpose.msra.mxu0 0
      %348 = vmatpush.bf16.xpose.msra.mxu0 0
      %349 = vmatpush.bf16.xpose.msra.mxu0 %v340
      %350 = vmatmul.bf16.gmra.mxu0 %v337
      %v351 = vpop.f32.mrf.mxu0
      %v352 = vadd.f32 %v296, %v351
      %v353 = vpop.f32.mrf.mxu0
      %354 = vdwg.mxu0
      %v356 = vsel %vm297, %v287, 0
      %v359 = vsel %vm297, %v295, 0
      %361 = vmatpush.bf16.xpose.msra.mxu0 0
      %362 = vmatpush.bf16.xpose.msra.mxu0 0
      %363 = vmatpush.bf16.xpose.msra.mxu0 0
      %364 = vmatpush.bf16.xpose.msra.mxu0 0
      %365 = vmatpush.bf16.xpose.msra.mxu0 0
      %366 = vmatpush.bf16.xpose.msra.mxu0 0
      %367 = vmatpush.bf16.xpose.msra.mxu0 0
      %368 = vmatpush.bf16.xpose.msra.mxu0 %v359
      %369 = vmatmul.bf16.gmra.mxu0 %v356
      %v370 = vpop.f32.mrf.mxu0
      %v371 = vadd.f32 %v296, %v370
      %v372 = vpop.f32.mrf.mxu0
      %373 = vdwg.mxu0
      %v374 = vld [vmem:[%s273] sm:$0x1]
      %v376 = vperm.slane %v374, 0
      %v378 = vadd.f32 %v314, %v376
      %v379 = vadd.f32 %v333, %v376
      %v380 = vadd.f32 %v352, %v376
      %v381 = vadd.f32 %v371, %v376
      %v382 = vsel %vm297, %v378, -inf
      %383 = vmax.xlane.f32.xlu0 %v382
      %v384 = vpop.xlane.xlu0 %383
      %v385 = vsel %vm297, %v379, -inf
      %386 = vmax.xlane.f32.xlu0 %v385
      %v387 = vpop.xlane.xlu0 %386
      %v388 = vsel %vm297, %v380, -inf
      %389 = vmax.xlane.f32.xlu0 %v388
      %v390 = vpop.xlane.xlu0 %389
      %v391 = vsel %vm297, %v381, -inf
      %392 = vmax.xlane.f32.xlu0 %v391
      %v393 = vpop.xlane.xlu0 %392
      %v394 = vsub.f32 %v378, %v384
      %v395 = vsub.f32 %v379, %v387
      %v396 = vsub.f32 %v380, %v390
      %v397 = vsub.f32 %v381, %v393
      %v398 = vmul.f32 %v394, 1.442695
      %v399 = vpow.pop %v398
      %v400 = vmul.f32 %v395, 1.442695
      %v401 = vpow.pop %v400
      %v402 = vmul.f32 %v396, 1.442695
      %v403 = vpow.pop %v402
      %v404 = vmul.f32 %v397, 1.442695
      %v405 = vpow.pop %v404
      %v406 = vsel %vm297, %v399, 0.0
      %407 = vadd.xlane.f32.xlu0 %v406
      %v408 = vpop.xlane.xlu0 %407
      %v409 = vsel %vm297, %v401, 0.0
      %410 = vadd.xlane.f32.xlu0 %v409
      %v411 = vpop.xlane.xlu0 %410
      %v412 = vsel %vm297, %v403, 0.0
      %413 = vadd.xlane.f32.xlu0 %v412
      %v414 = vpop.xlane.xlu0 %413
      %v415 = vsel %vm297, %v405, 0.0
      %416 = vadd.xlane.f32.xlu0 %v415
      %v417 = vpop.xlane.xlu0 %416
      %v418 = vpack.c.bf16 %v399, %v399
      %v419 = vpack.c.bf16 %v401, %v401
      %v420 = vpack.c.bf16 %v403, %v403
      %v421 = vpack.c.bf16 %v405, %v405
      %v422 = vld [vmem:[%s270] sm:$0xff]
      %v423 = vld [vmem:[%s270 + $0x8] sm:$0xff]
      %v424 = vld [vmem:[%s270 + $0x10] sm:$0xff]
      %v425 = vld [vmem:[%s270 + $0x18] sm:$0xff]
      %v426 = vpack.c.bf16 %v422, %v422
      %v427 = vpack.c.bf16 %v423, %v423
      %v428 = vpack.c.bf16 %v424, %v424
      %v429 = vpack.c.bf16 %v425, %v425
      %v431 = vsel %vm297, %v418, 0
      %vm433 = vcmask 1043456
      %v435 = vsel %vm433, %v426, 0
      %437 = vmatpush.bf16.msra.mxu0 0
      %438 = vmatpush.bf16.msra.mxu0 0
      %439 = vmatpush.bf16.msra.mxu0 0
      %440 = vmatpush.bf16.msra.mxu0 0
      %441 = vmatpush.bf16.msra.mxu0 0
      %442 = vmatpush.bf16.msra.mxu0 0
      %443 = vmatpush.bf16.msra.mxu0 0
      %444 = vmatpush.bf16.msra.mxu0 %v435
      %445 = vmatmul.bf16.gmra.mxu0 %v431
      %v446 = vpop.f32.mrf.mxu0
      %v447 = vadd.f32 0.0, %v446
      %v448 = vpop.f32.mrf.mxu0
      %449 = vdwg.mxu0
      %v451 = vsel %vm297, %v419, 0
      %v454 = vsel %vm433, %v427, 0
      %456 = vmatpush.bf16.msra.mxu0 0
      %457 = vmatpush.bf16.msra.mxu0 0
      %458 = vmatpush.bf16.msra.mxu0 0
      %459 = vmatpush.bf16.msra.mxu0 0
      %460 = vmatpush.bf16.msra.mxu0 0
      %461 = vmatpush.bf16.msra.mxu0 0
      %462 = vmatpush.bf16.msra.mxu0 0
      %463 = vmatpush.bf16.msra.mxu0 %v454
      %464 = vmatmul.bf16.gmra.mxu0 %v451
      %v465 = vpop.f32.mrf.mxu0
      %v466 = vadd.f32 0.0, %v465
      %v467 = vpop.f32.mrf.mxu0
      %468 = vdwg.mxu0
      %v470 = vsel %vm297, %v420, 0
      %v473 = vsel %vm433, %v428, 0
      %475 = vmatpush.bf16.msra.mxu0 0
      %476 = vmatpush.bf16.msra.mxu0 0
      %477 = vmatpush.bf16.msra.mxu0 0
      %478 = vmatpush.bf16.msra.mxu0 0
      %479 = vmatpush.bf16.msra.mxu0 0
      %480 = vmatpush.bf16.msra.mxu0 0
      %481 = vmatpush.bf16.msra.mxu0 0
      %482 = vmatpush.bf16.msra.mxu0 %v473
      %483 = vmatmul.bf16.gmra.mxu0 %v470
      %v484 = vpop.f32.mrf.mxu0
      %v485 = vadd.f32 0.0, %v484
      %v486 = vpop.f32.mrf.mxu0
      %487 = vdwg.mxu0
      %v489 = vsel %vm297, %v421, 0
      %v492 = vsel %vm433, %v429, 0
      %494 = vmatpush.bf16.msra.mxu0 0
      %495 = vmatpush.bf16.msra.mxu0 0
      %496 = vmatpush.bf16.msra.mxu0 0
      %497 = vmatpush.bf16.msra.mxu0 0
      %498 = vmatpush.bf16.msra.mxu0 0
      %499 = vmatpush.bf16.msra.mxu0 0
      %500 = vmatpush.bf16.msra.mxu0 0
      %501 = vmatpush.bf16.msra.mxu0 %v492
      %502 = vmatmul.bf16.gmra.mxu0 %v489
      %v503 = vpop.f32.mrf.mxu0
      %v504 = vadd.f32 0.0, %v503
      %v505 = vpop.f32.mrf.mxu0
      %506 = vdwg.mxu0
      %v507 = vrcp.pop %v408
      %v508 = vrcp.pop %v411
      %v509 = vrcp.pop %v414
      %v510 = vrcp.pop %v417
      %v511 = vmul.f32 %v447, %v507
      %v512 = vmul.f32 %v466, %v508
      %v513 = vmul.f32 %v485, %v509
      %v514 = vmul.f32 %v504, %v510
      %515 = vst.msk [vmem:[%s278] sm:$0xff] %vm297, %v511
      %516 = vst.msk [vmem:[%s278 + $0x8] sm:$0xff] %vm297, %v512
      %517 = vst.msk [vmem:[%s278 + $0x10] sm:$0xff] %vm297, %v513
      %518 = vst.msk [vmem:[%s278 + $0x18] sm:$0xff] %vm297, %v514
      %p519 = scmp.lt.s32.totalorder %s16, 1
      %s520 = scalar_select %p519, %s16, 1
      %s521 = smul.addr %s520, 4
      %s522 = smul.addr %s521, 8
      %s523 = scalar_lea.vmem %s5, %s522
      // Predicated region
      $region41: #{seq2seq_transformer_forward.38} parent=39 // pred_check
        %p524 = pneg %p159
      $region42: #{seq2seq_transformer_forward.38} parent=39 // pred_check_branch
        %526 = sbr.rel (%p524) target = $region44
      $region43: #{seq2seq_transformer_forward.38} parent=39 // pred_region
        _
      $region44: #{seq2seq_transformer_forward.38} parent=39 // pred_fallthru
        _
    $region40: #{seq2seq_transformer_forward.38} parent=5 // pred_fallthru
      _
    %p527 = scmp.le.s32.totalorder 2, %s11
    // Predicated region
    $region45: #{seq2seq_transformer_forward.38} parent=5 // pred_check
      %p528 = pneg %p527
    $region46: #{seq2seq_transformer_forward.38} parent=5 // pred_check_branch
      %530 = sbr.rel (%p528) target = $region48
    $region47: #{seq2seq_transformer_forward.38} parent=5 // pred_region
      %s531 = ssub.s32 %s11, 2
      // Predicated region
      $region49: #{seq2seq_transformer_forward.38} parent=47 // pred_check
        %p532 = pneg %p165
      $region50: #{seq2seq_transformer_forward.38} parent=47 // pred_check_branch
        %534 = sbr.rel (%p532) target = $region52
      $region51: #{seq2seq_transformer_forward.38} parent=47 // pred_region
        %p535 = scmp.lt.s32.totalorder %s17, 1
        %s536 = scalar_select %p535, %s17, 1
        %s537 = smul.addr %s536, 4
        %s538 = smul.addr %s537, 8
        %s539 = scalar_lea.vmem %s5, %s538
      $region52: #{seq2seq_transformer_forward.38} parent=47 // pred_fallthru
        _
    $region48: #{seq2seq_transformer_forward.38} parent=5 // pred_fallthru
      _
  $region6: #{seq2seq_transformer_forward.38} parent=0 // loop_footer
    %s15 = sadd.s32 1, %s11
  $region7: #{seq2seq_transformer_forward.38} parent=0 // loop_footer_branch
    %10 = sbr.rel target = $region3
  $region8: #{seq2seq_transformer_forward.38} parent=0 // loop_exit
    _

// kernel: seq2seq_transformer_forward.40
$region0: #{seq2seq_transformer_forward.40}
  #allocation0 [shape = 'u32[]', space=smem, size = 0x4, offset = 0x4, fixed_abs, tag = 'smem constant byte address 0x4 - core index']
  #allocation1 [shape = 'u32[72,128]{1,0:T(1,128)}', space=vmem, size = 0x9000, scoped, tag = 'internal scratch']
  %s0 = inlined_call_operand.vmem [shape: f32[16,32], index: 0, kind: input, shape index: {}]
  %s1 = inlined_call_operand.vmem [shape: f32[16,32], index: 1, kind: input, shape index: {}]
  %s2 = inlined_call_operand.vmem [shape: f32[1,32], index: 2, kind: input, shape index: {}]
  %s3 = inlined_call_operand.vmem [shape: f32[1,32], index: 3, kind: input, shape index: {}]
  %s4 = inlined_call_operand.vmem [shape: f32[16,32], index: 4, kind: output, shape index: {}]
  %s5 = sld [smem:[#allocation0]]
  $region26: #{seq2seq_transformer_forward.40} parent=0
    _
  %s7 = ssub.s32 1, %s5
  %s8 = scalar_select 0, %s7, %s5
  // Predicated region
  $region2: #{seq2seq_transformer_forward.40} parent=0 // pred_check
    _
  $region3: #{seq2seq_transformer_forward.40} parent=0 // pred_check_branch
    %10 = sbr.rel (0) target = $region5
  $region4: #{seq2seq_transformer_forward.40} parent=0 // pred_region
    _
  $region5: #{seq2seq_transformer_forward.40} parent=0 // pred_fallthru
    _
  // Predicated region
  $region6: #{seq2seq_transformer_forward.40} parent=0 // pred_check
    _
  $region7: #{seq2seq_transformer_forward.40} parent=0 // pred_check_branch
    %12 = sbr.rel (0) target = $region9
  $region8: #{seq2seq_transformer_forward.40} parent=0 // pred_region
    _
  $region9: #{seq2seq_transformer_forward.40} parent=0 // pred_fallthru
    _
  // Predicated region
  $region10: #{seq2seq_transformer_forward.40} parent=0 // pred_check
    _
  $region11: #{seq2seq_transformer_forward.40} parent=0 // pred_check_branch
    %14 = sbr.rel (0) target = $region13
  $region12: #{seq2seq_transformer_forward.40} parent=0 // pred_region
    _
  $region13: #{seq2seq_transformer_forward.40} parent=0 // pred_fallthru
    _
  // Predicated region
  $region14: #{seq2seq_transformer_forward.40} parent=0 // pred_check
    _
  $region15: #{seq2seq_transformer_forward.40} parent=0 // pred_check_branch
    %16 = sbr.rel (0) target = $region17
  $region16: #{seq2seq_transformer_forward.40} parent=0 // pred_region
    _
  $region17: #{seq2seq_transformer_forward.40} parent=0 // pred_fallthru
    _
  %v17 = vld [vmem:[%s0] sm:$0xff]
  %v18 = vld [vmem:[%s0 + $0x8] sm:$0xff]
  %v19 = vld [vmem:[%s1] sm:$0xff]
  %v20 = vld [vmem:[%s1 + $0x8] sm:$0xff]
  %v21 = vadd.f32 %v17, %v19
  %v22 = vadd.f32 %v18, %v20
  %vm23 = vcmask 261120
  %v24 = vsel %vm23, %v21, 0.0
  %25 = vadd.xlane.f32.xlu0 %v24
  %v26 = vpop.xlane.xlu0 %25
  %v27 = vsel %vm23, %v22, 0.0
  %28 = vadd.xlane.f32.xlu0 %v27
  %v29 = vpop.xlane.xlu0 %28
  %v30 = vrcp.pop 32.0
  %v31 = vmul.f32 32.0, %v30
  %v32 = vsub.f32 1.0, %v31
  %v33 = vmul.f32 %v30, %v32
  %v34 = vadd.f32 %v30, %v33
  %vm35 = vweird.f32 %v30
  %v36 = vsel %vm35, %v30, %v34
  %v37 = vmul.f32 %v26, %v36
  %v38 = vmul.f32 %v29, %v36
  %v39 = vsub.f32 %v21, %v37
  %v40 = vsub.f32 %v22, %v38
  %v41 = vmul.f32 %v39, %v39
  %v42 = vmul.f32 %v40, %v40
  %v43 = vsel %vm23, %v41, 0.0
  %44 = vadd.xlane.f32.xlu0 %v43
  %v45 = vpop.xlane.xlu0 %44
  %v46 = vsel %vm23, %v42, 0.0
  %47 = vadd.xlane.f32.xlu0 %v46
  %v48 = vpop.xlane.xlu0 %47
  %v49 = vmul.f32 %v45, %v36
  %v50 = vmul.f32 %v48, %v36
  %v51 = vadd.f32 %v49, 1e-05
  %v52 = vadd.f32 %v50, 1e-05
  %v53 = vrsqrt.pop %v51
  %v54 = vmul.f32 %v53, %v51
  %v55 = vmul.f32 %v54, %v53
  %v56 = vmul.f32 0.5, %v55
  %v57 = vsub.f32 1.5, %v56
  %v58 = vmul.f32 %v53, %v57
  %vm59 = vweird.f32 %v51
  %vm60 = vweird.f32 %v53
  %vm61 = vmor %vm59, %vm60
  %v62 = vsel %vm61, %v53, %v58
  %v63 = vrsqrt.pop %v52
  %v64 = vmul.f32 %v63, %v52
  %v65 = vmul.f32 %v64, %v63
  %v66 = vmul.f32 0.5, %v65
  %v67 = vsub.f32 1.5, %v66
  %v68 = vmul.f32 %v63, %v67
  %vm69 = vweird.f32 %v52
  %vm70 = vweird.f32 %v63
  %vm71 = vmor %vm69, %vm70
  %v72 = vsel %vm71, %v63, %v68
  %v73 = vmul.f32 %v39, %v62
  %v74 = vmul.f32 %v40, %v72
  %v75 = vld [vmem:[%s2] sm:$0x1]
  %v77 = vperm.slane %v75, 0
  %v79 = vmul.f32 %v73, %v77
  %v80 = vmul.f32 %v74, %v77
  %v81 = vld [vmem:[%s3] sm:$0x1]
  %v83 = vperm.slane %v81, 0
  %v85 = vadd.f32 %v79, %v83
  %v86 = vadd.f32 %v80, %v83
  %87 = vst.msk [vmem:[%s4] sm:$0xff] %vm23, %v85
  %88 = vst.msk [vmem:[%s4 + $0x8] sm:$0xff] %vm23, %v86
  // Predicated region
  $region18: #{seq2seq_transformer_forward.40} parent=0 // pred_check
    _
  $region19: #{seq2seq_transformer_forward.40} parent=0 // pred_check_branch
    %90 = sbr.rel (0) target = $region21
  $region20: #{seq2seq_transformer_forward.40} parent=0 // pred_region
    _
  $region21: #{seq2seq_transformer_forward.40} parent=0 // pred_fallthru
    _
  // Predicated region
  $region22: #{seq2seq_transformer_forward.40} parent=0 // pred_check
    _
  $region23: #{seq2seq_transformer_forward.40} parent=0 // pred_check_branch
    %92 = sbr.rel (0) target = $region25
  $region24: #{seq2seq_transformer_forward.40} parent=0 // pred_region
    _
  $region25: #{seq2seq_transformer_forward.40} parent=0 // pred_fallthru
    _

// kernel: seq2seq_transformer_forward.41
$region0: #{seq2seq_transformer_forward.41}
  #allocation0 [shape = 'u32[]', space=smem, size = 0x4, offset = 0x4, fixed_abs, tag = 'smem constant byte address 0x4 - core index']
  #allocation1 [shape = 'u32[72,128]{1,0:T(1,128)}', space=vmem, size = 0x9000, scoped, tag = 'internal scratch']
  %s0 = inlined_call_operand.vmem [shape: f32[16,32], index: 0, kind: input, shape index: {}]
  %s1 = inlined_call_operand.vmem [shape: bf16[32,64], index: 1, kind: input, shape index: {}]
  %s2 = inlined_call_operand.vmem [shape: f32[1,64], index: 2, kind: input, shape index: {}]
  %s3 = inlined_call_operand.vmem [shape: bf16[64,32], index: 3, kind: input, shape index: {}]
  %s4 = inlined_call_operand.vmem [shape: f32[1,32], index: 4, kind: input, shape index: {}]
  %s5 = inlined_call_operand.vmem [shape: f32[16,32], index: 5, kind: output, shape index: {}]
  %s6 = sld [smem:[#allocation0]]
  $region30: #{seq2seq_transformer_forward.41} parent=0
    _
  %s8 = ssub.s32 1, %s6
  %s9 = scalar_select 0, %s8, %s6
  // Predicated region
  $region2: #{seq2seq_transformer_forward.41} parent=0 // pred_check
    _
  $region3: #{seq2seq_transformer_forward.41} parent=0 // pred_check_branch
    %11 = sbr.rel (0) target = $region5
  $region4: #{seq2seq_transformer_forward.41} parent=0 // pred_region
    _
  $region5: #{seq2seq_transformer_forward.41} parent=0 // pred_fallthru
    _
  // Predicated region
  $region6: #{seq2seq_transformer_forward.41} parent=0 // pred_check
    _
  $region7: #{seq2seq_transformer_forward.41} parent=0 // pred_check_branch
    %13 = sbr.rel (0) target = $region9
  $region8: #{seq2seq_transformer_forward.41} parent=0 // pred_region
    _
  $region9: #{seq2seq_transformer_forward.41} parent=0 // pred_fallthru
    _
  // Predicated region
  $region10: #{seq2seq_transformer_forward.41} parent=0 // pred_check
    _
  $region11: #{seq2seq_transformer_forward.41} parent=0 // pred_check_branch
    %15 = sbr.rel (0) target = $region13
  $region12: #{seq2seq_transformer_forward.41} parent=0 // pred_region
    _
  $region13: #{seq2seq_transformer_forward.41} parent=0 // pred_fallthru
    _
  // Predicated region
  $region14: #{seq2seq_transformer_forward.41} parent=0 // pred_check
    _
  $region15: #{seq2seq_transformer_forward.41} parent=0 // pred_check_branch
    %17 = sbr.rel (0) target = $region17
  $region16: #{seq2seq_transformer_forward.41} parent=0 // pred_region
    _
  $region17: #{seq2seq_transformer_forward.41} parent=0 // pred_fallthru
    _
  // Predicated region
  $region18: #{seq2seq_transformer_forward.41} parent=0 // pred_check
    _
  $region19: #{seq2seq_transformer_forward.41} parent=0 // pred_check_branch
    %19 = sbr.rel (0) target = $region21
  $region20: #{seq2seq_transformer_forward.41} parent=0 // pred_region
    _
  $region21: #{seq2seq_transformer_forward.41} parent=0 // pred_fallthru
    _
  %v21 = vld [vmem:[%s0] sm:$0xff]
  %v22 = vld [vmem:[%s0 + $0x8] sm:$0xff]
  %v23 = vpack.c.bf16 %v22, %v21
  %v24 = vld [vmem:[%s1] sm:$0xf]
  %v25 = vld [vmem:[%s1 + $0x4] sm:$0xf]
  %v26 = vld [vmem:[%s1 + $0x8] sm:$0xf]
  %v27 = vld [vmem:[%s1 + $0xc] sm:$0xf]
  %v28 = vld [vmem:[%s2] sm:$0x1]
  %v30 = vperm.slane %v28, 0
  %v36 = vunpack.c.l.b16 %v24
  %v37 = vunpack.c.l.b16 %v25
  %v38 = vunpack.c.l.b16 %v26
  %v39 = vunpack.c.l.b16 %v27
  %v40 = vpack.c.b16 %v37, %v36
  %v41 = vpack.c.b16 %v39, %v38
  %vm44 = vcmask 261120
  %v46 = vsel %vm44, %v23, 0
  %48 = vmatpush.bf16.msra.mxu0 0
  %49 = vmatpush.bf16.msra.mxu0 0
  %50 = vmatpush.bf16.msra.mxu0 0
  %51 = vmatpush.bf16.msra.mxu0 0
  %52 = vmatpush.bf16.msra.mxu0 0
  %53 = vmatpush.bf16.msra.mxu0 0
  %54 = vmatpush.bf16.msra.mxu0 %v41
  %55 = vmatpush.bf16.msra.mxu0 %v40
  %56 = vmatmul.bf16.gmra.mxu0 %v46
  %v57 = vpop.f32.mrf.mxu0
  %v58 = vadd.f32 %v30, %v57
  %v59 = vpop.f32.mrf.mxu0
  %v60 = vadd.f32 %v30, %v59
  %61 = vdwg.mxu0
  %v62 = vmax.f32 %v58, 0.0
  %v63 = vmax.f32 %v60, 0.0
  %v64 = vpack.c.bf16 %v63, %v62
  %v65 = vld [vmem:[%s3] sm:$0xf]
  %v66 = vld [vmem:[%s3 + $0x4] sm:$0xf]
  %v67 = vld [vmem:[%s3 + $0x8] sm:$0xf]
  %v68 = vld [vmem:[%s3 + $0xc] sm:$0xf]
  %v69 = vld [vmem:[%s3 + $0x10] sm:$0xf]
  %v70 = vld [vmem:[%s3 + $0x14] sm:$0xf]
  %v71 = vld [vmem:[%s3 + $0x18] sm:$0xf]
  %v72 = vld [vmem:[%s3 + $0x1c] sm:$0xf]
  %v73 = vld [vmem:[%s4] sm:$0x1]
  %v75 = vperm.slane %v73, 0
  %v85 = vunpack.c.l.b16 %v65
  %v86 = vunpack.c.l.b16 %v66
  %v87 = vunpack.c.l.b16 %v67
  %v88 = vunpack.c.l.b16 %v68
  %v89 = vunpack.c.l.b16 %v69
  %v90 = vunpack.c.l.b16 %v70
  %v91 = vunpack.c.l.b16 %v71
  %v92 = vunpack.c.l.b16 %v72
  %v93 = vpack.c.b16 %v86, %v85
  %v94 = vpack.c.b16 %v88, %v87
  %v95 = vpack.c.b16 %v90, %v89
  %v96 = vpack.c.b16 %v92, %v91
  %vm101 = vcmask 523264
  %v103 = vsel %vm101, %v64, 0
  %105 = vmatpush.bf16.msra.mxu0 0
  %106 = vmatpush.bf16.msra.mxu0 0
  %107 = vmatpush.bf16.msra.mxu0 0
  %108 = vmatpush.bf16.msra.mxu0 0
  %109 = vmatpush.bf16.msra.mxu0 %v96
  %110 = vmatpush.bf16.msra.mxu0 %v95
  %111 = vmatpush.bf16.msra.mxu0 %v94
  %112 = vmatpush.bf16.msra.mxu0 %v93
  %113 = vmatmul.bf16.gmra.mxu0 %v103
  %v114 = vpop.f32.mrf.mxu0
  %v115 = vadd.f32 %v75, %v114
  %v116 = vpop.f32.mrf.mxu0
  %v117 = vadd.f32 %v75, %v116
  %118 = vdwg.mxu0
  %119 = vst.msk [vmem:[%s5] sm:$0xff] %vm44, %v115
  %120 = vst.msk [vmem:[%s5 + $0x8] sm:$0xff] %vm44, %v117
  // Predicated region
  $region22: #{seq2seq_transformer_forward.41} parent=0 // pred_check
    _
  $region23: #{seq2seq_transformer_forward.41} parent=0 // pred_check_branch
    %122 = sbr.rel (0) target = $region25
  $region24: #{seq2seq_transformer_forward.41} parent=0 // pred_region
    _
  $region25: #{seq2seq_transformer_forward.41} parent=0 // pred_fallthru
    _
  // Predicated region
  $region26: #{seq2seq_transformer_forward.41} parent=0 // pred_check
    _
  $region27: #{seq2seq_transformer_forward.41} parent=0 // pred_check_branch
    %124 = sbr.rel (0) target = $region29
  $region28: #{seq2seq_transformer_forward.41} parent=0 // pred_region
    _
  $region29: #{seq2seq_transformer_forward.41} parent=0 // pred_fallthru
    _

// kernel: seq2seq_transformer_forward.49
$region0: #{seq2seq_transformer_forward.49}
  #allocation0 [shape = 'u32[]', space=smem, size = 0x4, offset = 0x4, fixed_abs, tag = 'smem constant byte address 0x4 - core index']
  #allocation1 [shape = 'u32[72,128]{1,0:T(1,128)}', space=vmem, size = 0x9000, scoped, tag = 'internal scratch']
  %s0 = inlined_call_operand.vmem [shape: f32[16,32], index: 0, kind: input, shape index: {}]
  %s1 = inlined_call_operand.vmem [shape: f32[1,32], index: 1, kind: input, shape index: {}]
  %s2 = inlined_call_operand.vmem [shape: f32[1,32], index: 2, kind: input, shape index: {}]
  %s3 = inlined_call_operand.vmem [shape: f32[16,32], index: 3, kind: output, shape index: {}]
  %s4 = sld [smem:[#allocation0]]
  $region22: #{seq2seq_transformer_forward.49} parent=0
    _
  %s6 = ssub.s32 1, %s4
  %s7 = scalar_select 0, %s6, %s4
  // Predicated region
  $region2: #{seq2seq_transformer_forward.49} parent=0 // pred_check
    _
  $region3: #{seq2seq_transformer_forward.49} parent=0 // pred_check_branch
    %9 = sbr.rel (0) target = $region5
  $region4: #{seq2seq_transformer_forward.49} parent=0 // pred_region
    _
  $region5: #{seq2seq_transformer_forward.49} parent=0 // pred_fallthru
    _
  // Predicated region
  $region6: #{seq2seq_transformer_forward.49} parent=0 // pred_check
    _
  $region7: #{seq2seq_transformer_forward.49} parent=0 // pred_check_branch
    %11 = sbr.rel (0) target = $region9
  $region8: #{seq2seq_transformer_forward.49} parent=0 // pred_region
    _
  $region9: #{seq2seq_transformer_forward.49} parent=0 // pred_fallthru
    _
  // Predicated region
  $region10: #{seq2seq_transformer_forward.49} parent=0 // pred_check
    _
  $region11: #{seq2seq_transformer_forward.49} parent=0 // pred_check_branch
    %13 = sbr.rel (0) target = $region13
  $region12: #{seq2seq_transformer_forward.49} parent=0 // pred_region
    _
  $region13: #{seq2seq_transformer_forward.49} parent=0 // pred_fallthru
    _
  %v14 = vld [vmem:[%s0] sm:$0xff]
  %v15 = vld [vmem:[%s0 + $0x8] sm:$0xff]
  %vm16 = vcmask 261120
  %v17 = vsel %vm16, %v14, 0.0
  %18 = vadd.xlane.f32.xlu0 %v17
  %v19 = vpop.xlane.xlu0 %18
  %v20 = vsel %vm16, %v15, 0.0
  %21 = vadd.xlane.f32.xlu0 %v20
  %v22 = vpop.xlane.xlu0 %21
  %v23 = vrcp.pop 32.0
  %v24 = vmul.f32 32.0, %v23
  %v25 = vsub.f32 1.0, %v24
  %v26 = vmul.f32 %v23, %v25
  %v27 = vadd.f32 %v23, %v26
  %vm28 = vweird.f32 %v23
  %v29 = vsel %vm28, %v23, %v27
  %v30 = vmul.f32 %v19, %v29
  %v31 = vmul.f32 %v22, %v29
  %v32 = vsub.f32 %v14, %v30
  %v33 = vsub.f32 %v15, %v31
  %v34 = vmul.f32 %v32, %v32
  %v35 = vmul.f32 %v33, %v33
  %v36 = vsel %vm16, %v34, 0.0
  %37 = vadd.xlane.f32.xlu0 %v36
  %v38 = vpop.xlane.xlu0 %37
  %v39 = vsel %vm16, %v35, 0.0
  %40 = vadd.xlane.f32.xlu0 %v39
  %v41 = vpop.xlane.xlu0 %40
  %v42 = vmul.f32 %v38, %v29
  %v43 = vmul.f32 %v41, %v29
  %v44 = vadd.f32 %v42, 1e-05
  %v45 = vadd.f32 %v43, 1e-05
  %v46 = vrsqrt.pop %v44
  %v47 = vmul.f32 %v46, %v44
  %v48 = vmul.f32 %v47, %v46
  %v49 = vmul.f32 0.5, %v48
  %v50 = vsub.f32 1.5, %v49
  %v51 = vmul.f32 %v46, %v50
  %vm52 = vweird.f32 %v44
  %vm53 = vweird.f32 %v46
  %vm54 = vmor %vm52, %vm53
  %v55 = vsel %vm54, %v46, %v51
  %v56 = vrsqrt.pop %v45
  %v57 = vmul.f32 %v56, %v45
  %v58 = vmul.f32 %v57, %v56
  %v59 = vmul.f32 0.5, %v58
  %v60 = vsub.f32 1.5, %v59
  %v61 = vmul.f32 %v56, %v60
  %vm62 = vweird.f32 %v45
  %vm63 = vweird.f32 %v56
  %vm64 = vmor %vm62, %vm63
  %v65 = vsel %vm64, %v56, %v61
  %v66 = vmul.f32 %v32, %v55
  %v67 = vmul.f32 %v33, %v65
  %v68 = vld [vmem:[%s1] sm:$0x1]
  %v70 = vperm.slane %v68, 0
  %v72 = vmul.f32 %v66, %v70
  %v73 = vmul.f32 %v67, %v70
  %v74 = vld [vmem:[%s2] sm:$0x1]
  %v76 = vperm.slane %v74, 0
  %v78 = vadd.f32 %v72, %v76
  %v79 = vadd.f32 %v73, %v76
  %80 = vst.msk [vmem:[%s3] sm:$0xff] %vm16, %v78
  %81 = vst.msk [vmem:[%s3 + $0x8] sm:$0xff] %vm16, %v79
  // Predicated region
  $region14: #{seq2seq_transformer_forward.49} parent=0 // pred_check
    _
  $region15: #{seq2seq_transformer_forward.49} parent=0 // pred_check_branch
    %83 = sbr.rel (0) target = $region17
  $region16: #{seq2seq_transformer_forward.49} parent=0 // pred_region
    _
  $region17: #{seq2seq_transformer_forward.49} parent=0 // pred_fallthru
    _
  // Predicated region
  $region18: #{seq2seq_transformer_forward.49} parent=0 // pred_check
    _
  $region19: #{seq2seq_transformer_forward.49} parent=0 // pred_check_branch
    %85 = sbr.rel (0) target = $region21
  $region20: #{seq2seq_transformer_forward.49} parent=0 // pred_region
    _
  $region21: #{seq2seq_transformer_forward.49} parent=0 // pred_fallthru
    _

// kernel: seq2seq_transformer_forward.55
$region0: #{seq2seq_transformer_forward.55}
  #allocation0 [shape = 'u32[]', space=smem, size = 0x4, offset = 0x4, fixed_abs, tag = 'smem constant byte address 0x4 - core index']
  #allocation1 [shape = 'u32[72,128]{1,0:T(1,128)}', space=vmem, size = 0x9000, scoped, tag = 'internal scratch']
  #allocation2 [shape = 'f32[16,64]{1,0:T(8,128)}', space=vmem, size = 0x2000, scoped, tag = 'scratch operand']
  %s0 = inlined_call_operand.vmem [shape: f32[16,32], index: 0, kind: input, shape index: {}]
  %s1 = inlined_call_operand.vmem [shape: bf16[32,64], index: 1, kind: input, shape index: {}]
  %s2 = inlined_call_operand.vmem [shape: f32[1,64], index: 2, kind: input, shape index: {}]
  %s3 = inlined_call_operand.vmem [shape: f32[16,64], index: 3, kind: output, shape index: {}]
  %s4 = sld [smem:[#allocation0]]
  $region30: #{seq2seq_transformer_forward.55} parent=0
    _
  %s6 = ssub.s32 1, %s4
  %s7 = scalar_select 0, %s6, %s4
  // Predicated region
  $region2: #{seq2seq_transformer_forward.55} parent=0 // pred_check
    _
  $region3: #{seq2seq_transformer_forward.55} parent=0 // pred_check_branch
    %9 = sbr.rel (0) target = $region5
  $region4: #{seq2seq_transformer_forward.55} parent=0 // pred_region
    _
  $region5: #{seq2seq_transformer_forward.55} parent=0 // pred_fallthru
    _
  // Predicated region
  $region6: #{seq2seq_transformer_forward.55} parent=0 // pred_check
    _
  $region7: #{seq2seq_transformer_forward.55} parent=0 // pred_check_branch
    %11 = sbr.rel (0) target = $region9
  $region8: #{seq2seq_transformer_forward.55} parent=0 // pred_region
    _
  $region9: #{seq2seq_transformer_forward.55} parent=0 // pred_fallthru
    _
  // Predicated region
  $region10: #{seq2seq_transformer_forward.55} parent=0 // pred_check
    _
  $region11: #{seq2seq_transformer_forward.55} parent=0 // pred_check_branch
    %13 = sbr.rel (0) target = $region13
  $region12: #{seq2seq_transformer_forward.55} parent=0 // pred_region
    _
  $region13: #{seq2seq_transformer_forward.55} parent=0 // pred_fallthru
    _
  %p15 = scmp.eq.s32.totalorder 0, 0
  // Predicated region
  $region14: #{seq2seq_transformer_forward.55} parent=0 // pred_check
    %p16 = pneg %p15
  $region15: #{seq2seq_transformer_forward.55} parent=0 // pred_check_branch
    %18 = sbr.rel (%p16) target = $region17
  $region16: #{seq2seq_transformer_forward.55} parent=0 // pred_region
    %vm19 = vcmask 523264
    %20 = vst.msk [vmem:[#allocation2] sm:$0xff] %vm19, 0.0
    %21 = vst.msk [vmem:[#allocation2 + $0x8] sm:$0xff] %vm19, 0.0
  $region17: #{seq2seq_transformer_forward.55} parent=0 // pred_fallthru
    _
  %v22 = vld [vmem:[#allocation2] sm:$0xff]
  %v23 = vld [vmem:[#allocation2 + $0x8] sm:$0xff]
  %v24 = vld [vmem:[%s0] sm:$0xff]
  %v25 = vld [vmem:[%s0 + $0x8] sm:$0xff]
  %v26 = vpack.c.bf16 %v25, %v24
  %v27 = vld [vmem:[%s1] sm:$0xf]
  %v28 = vld [vmem:[%s1 + $0x4] sm:$0xf]
  %v29 = vld [vmem:[%s1 + $0x8] sm:$0xf]
  %v30 = vld [vmem:[%s1 + $0xc] sm:$0xf]
  %v35 = vunpack.c.l.b16 %v27
  %v36 = vunpack.c.l.b16 %v28
  %v37 = vunpack.c.l.b16 %v29
  %v38 = vunpack.c.l.b16 %v30
  %v39 = vpack.c.b16 %v36, %v35
  %v40 = vpack.c.b16 %v38, %v37
  %vm43 = vcmask 261120
  %v45 = vsel %vm43, %v26, 0
  %47 = vmatpush.bf16.msra.mxu0 0
  %48 = vmatpush.bf16.msra.mxu0 0
  %49 = vmatpush.bf16.msra.mxu0 0
  %50 = vmatpush.bf16.msra.mxu0 0
  %51 = vmatpush.bf16.msra.mxu0 0
  %52 = vmatpush.bf16.msra.mxu0 0
  %53 = vmatpush.bf16.msra.mxu0 %v40
  %54 = vmatpush.bf16.msra.mxu0 %v39
  %55 = vmatmul.bf16.gmra.mxu0 %v45
  %v56 = vpop.f32.mrf.mxu0
  %v57 = vadd.f32 0.0, %v56
  %v58 = vpop.f32.mrf.mxu0
  %v59 = vadd.f32 0.0, %v58
  %60 = vdwg.mxu0
  %v61 = vadd.f32 %v22, %v57
  %v62 = vadd.f32 %v23, %v59
  %vm63 = vcmask 523264
  %64 = vst.msk [vmem:[#allocation2] sm:$0xff] %vm63, %v61
  %65 = vst.msk [vmem:[#allocation2 + $0x8] sm:$0xff] %vm63, %v62
  // Predicated region
  $region18: #{seq2seq_transformer_forward.55} parent=0 // pred_check
    %p66 = pneg %p15
  $region19: #{seq2seq_transformer_forward.55} parent=0 // pred_check_branch
    %68 = sbr.rel (%p66) target = $region21
  $region20: #{seq2seq_transformer_forward.55} parent=0 // pred_region
    %v69 = vld [vmem:[#allocation2] sm:$0xff]
    %v70 = vld [vmem:[#allocation2 + $0x8] sm:$0xff]
    %v71 = vld [vmem:[%s2] sm:$0x1]
    %v73 = vperm.slane %v71, 0
    %v75 = vadd.f32 %v69, %v73
    %v76 = vadd.f32 %v70, %v73
    %77 = vst.msk [vmem:[%s3] sm:$0xff] %vm63, %v75
    %78 = vst.msk [vmem:[%s3 + $0x8] sm:$0xff] %vm63, %v76
  $region21: #{seq2seq_transformer_forward.55} parent=0 // pred_fallthru
    _
  // Predicated region
  $region22: #{seq2seq_transformer_forward.55} parent=0 // pred_check
    _
  $region23: #{seq2seq_transformer_forward.55} parent=0 // pred_check_branch
    %80 = sbr.rel (0) target = $region25
  $region24: #{seq2seq_transformer_forward.55} parent=0 // pred_region
    _
  $region25: #{seq2seq_transformer_forward.55} parent=0 // pred_fallthru
    _
  // Predicated region
  $region26: #{seq2seq_transformer_forward.55} parent=0 // pred_check
    _
  $region27: #{seq2seq_transformer_forward.55} parent=0 // pred_check_branch
    %82 = sbr.rel (0) target = $region29
  $region28: #{seq2seq_transformer_forward.55} parent=0 // pred_region
    _
  $region29: #{seq2seq_transformer_forward.55} parent=0 // pred_fallthru
    _

// kernel: seq2seq_transformer_forward.56
$region0: #{seq2seq_transformer_forward.56}
  #allocation0 [shape = 'u32[]', space=smem, size = 0x4, offset = 0x4, fixed_abs, tag = 'smem constant byte address 0x4 - core index']
  #allocation1 [shape = 'u32[72,128]{1,0:T(1,128)}', space=vmem, size = 0x9000, scoped, tag = 'internal scratch']
  %s0 = inlined_call_operand.vmem [shape: f32[2,4,6,8], index: 0, kind: input, shape index: {}]
  %s1 = inlined_call_operand.vmem [shape: f32[2,4,8,8], index: 1, kind: input, shape index: {}]
  %s2 = inlined_call_operand.vmem [shape: f32[2,4,8,8], index: 2, kind: input, shape index: {}]
  %s3 = inlined_call_operand.vmem [shape: f32[6,8], index: 3, kind: input, shape index: {}]
  %s4 = inlined_call_operand.vmem [shape: f32[2,1,8], index: 4, kind: input, shape index: {}]
  %s5 = inlined_call_operand.vmem [shape: f32[2,4,6,8], index: 5, kind: output, shape index: {}]
  %s6 = sld [smem:[#allocation0]]
  $region53: #{seq2seq_transformer_forward.56} parent=0
    _
  %s8 = ssub.s32 1, %s6
  %s9 = scalar_select 0, %s8, %s6
  loop: start=0, step=1, limit=4
  $region2: #{seq2seq_transformer_forward.56} parent=0 // loop_pre_header
    _
  $region3: #{seq2seq_transformer_forward.56} parent=0 // loop_header
    %s11 = sphi 0, %s15
    %p12 = scmp.ge.s32.totalorder %s11, 4
    %s21 = sphi 0, %s23
    %s24 = sphi 0, %s21
    %s25 = sphi 0, %s24
    %s41 = sphi 0, %s25
    %s47 = sphi 0, %s49
    %s50 = sphi 0, %s47
    %s51 = sphi 0, %s50
    %s67 = sphi 0, %s51
    %s73 = sphi 0, %s75
    %s76 = sphi 0, %s73
    %s77 = sphi 0, %s76
    %s93 = sphi 0, %s77
    %s97 = sphi 0, %s97
    %s99 = sphi 0, %s97
    %s100 = sphi 0, %s99
    %s114 = sphi 0, %s100
    %s120 = sphi 0, %s122
    %s123 = sphi 0, %s120
    %s124 = sphi 0, %s123
    %s140 = sphi 0, %s124
    %s146 = sphi 0, %s148
    %s149 = sphi 0, %s146
    %s150 = sphi 0, %s149
    %s166 = sphi 0, %s150
  $region4: #{seq2seq_transformer_forward.56} parent=0 // loop_header_branch
    %14 = sbr.rel (%p12) target = $region8
  $region5: #{seq2seq_transformer_forward.56} parent=0 // loop_body
    %s16 = ssub.s32 %s11, 1
    %s17 = ssub.s32 %s11, 2
    %s18 = sadd.s32 %s11, 1
    %s19 = ssub.s32 %s11, %s18
    %p20 = scmp.eq.s32.totalorder %s19, 0
    %s22 = sadd.s32 %s21, 1
    %s23 = scalar_select %p20, %s21, %s22
    %p26 = pneg %p20
    %p27 = scmp.eq.s32.totalorder %s11, 1
    %p28 = por %p26, %p27
    %p29 = scmp.ne.s32.totalorder %s21, %s24
    %p30 = scmp.eq.s32.totalorder %s11, 0
    %p31 = por %p29, %p30
    %p32 = scmp.ne.s32.totalorder %s21, %s24
    %p33 = scmp.eq.s32.totalorder %s16, 1
    %p34 = por %p32, %p33
    %p35 = scmp.ne.s32.totalorder %s24, %s25
    %p36 = scmp.eq.s32.totalorder %s16, 0
    %p37 = por %p35, %p36
    %p38 = scmp.ne.s32.totalorder %s24, %s25
    %p39 = scmp.eq.s32.totalorder %s17, 1
    %p40 = por %p38, %p39
    %p42 = scmp.ne.s32.totalorder %s25, %s41
    %p43 = scmp.eq.s32.totalorder %s17, 0
    %p44 = por %p42, %p43
    %s45 = ssub.s32 %s11, %s18
    %p46 = scmp.eq.s32.totalorder %s45, 0
    %s48 = sadd.s32 %s47, 1
    %s49 = scalar_select %p46, %s47, %s48
    %p52 = pneg %p46
    %p53 = scmp.eq.s32.totalorder %s11, 1
    %p54 = por %p52, %p53
    %p55 = scmp.ne.s32.totalorder %s47, %s50
    %p56 = scmp.eq.s32.totalorder %s11, 0
    %p57 = por %p55, %p56
    %p58 = scmp.ne.s32.totalorder %s47, %s50
    %p59 = scmp.eq.s32.totalorder %s16, 1
    %p60 = por %p58, %p59
    %p61 = scmp.ne.s32.totalorder %s50, %s51
    %p62 = scmp.eq.s32.totalorder %s16, 0
    %p63 = por %p61, %p62
    %p64 = scmp.ne.s32.totalorder %s50, %s51
    %p65 = scmp.eq.s32.totalorder %s17, 1
    %p66 = por %p64, %p65
    %p68 = scmp.ne.s32.totalorder %s51, %s67
    %p69 = scmp.eq.s32.totalorder %s17, 0
    %p70 = por %p68, %p69
    %s71 = ssub.s32 %s11, %s18
    %p72 = scmp.eq.s32.totalorder %s71, 0
    %s74 = sadd.s32 %s73, 1
    %s75 = scalar_select %p72, %s73, %s74
    %p78 = pneg %p72
    %p79 = scmp.eq.s32.totalorder %s11, 1
    %p80 = por %p78, %p79
    %p81 = scmp.ne.s32.totalorder %s73, %s76
    %p82 = scmp.eq.s32.totalorder %s11, 0
    %p83 = por %p81, %p82
    %p84 = scmp.ne.s32.totalorder %s73, %s76
    %p85 = scmp.eq.s32.totalorder %s16, 1
    %p86 = por %p84, %p85
    %p87 = scmp.ne.s32.totalorder %s76, %s77
    %p88 = scmp.eq.s32.totalorder %s16, 0
    %p89 = por %p87, %p88
    %p90 = scmp.ne.s32.totalorder %s76, %s77
    %p91 = scmp.eq.s32.totalorder %s17, 1
    %p92 = por %p90, %p91
    %p94 = scmp.ne.s32.totalorder %s77, %s93
    %p95 = scmp.eq.s32.totalorder %s17, 0
    %p96 = por %p94, %p95
    %s98 = sadd.s32 %s97, 1
    %p101 = scmp.eq.s32.totalorder %s11, 1
    %p102 = scmp.ne.s32.totalorder %s97, %s99
    %p103 = scmp.eq.s32.totalorder %s11, 0
    %p104 = por %p102, %p103
    %p105 = scmp.ne.s32.totalorder %s97, %s99
    %p106 = scmp.eq.s32.totalorder %s16, 1
    %p107 = por %p105, %p106
    %p108 = scmp.ne.s32.totalorder %s99, %s100
    %p109 = scmp.eq.s32.totalorder %s16, 0
    %p110 = por %p108, %p109
    %p111 = scmp.ne.s32.totalorder %s99, %s100
    %p112 = scmp.eq.s32.totalorder %s17, 1
    %p113 = por %p111, %p112
    %p115 = scmp.ne.s32.totalorder %s100, %s114
    %p116 = scmp.eq.s32.totalorder %s17, 0
    %p117 = por %p115, %p116
    %s118 = ssub.s32 %s11, %s18
    %p119 = scmp.eq.s32.totalorder %s118, 0
    %s121 = sadd.s32 %s120, 1
    %s122 = scalar_select %p119, %s120, %s121
    %p125 = pneg %p119
    %p126 = scmp.eq.s32.totalorder %s11, 1
    %p127 = por %p125, %p126
    %p128 = scmp.ne.s32.totalorder %s120, %s123
    %p129 = scmp.eq.s32.totalorder %s11, 0
    %p130 = por %p128, %p129
    %p131 = scmp.ne.s32.totalorder %s120, %s123
    %p132 = scmp.eq.s32.totalorder %s16, 1
    %p133 = por %p131, %p132
    %p134 = scmp.ne.s32.totalorder %s123, %s124
    %p135 = scmp.eq.s32.totalorder %s16, 0
    %p136 = por %p134, %p135
    %p137 = scmp.ne.s32.totalorder %s123, %s124
    %p138 = scmp.eq.s32.totalorder %s17, 1
    %p139 = por %p137, %p138
    %p141 = scmp.ne.s32.totalorder %s124, %s140
    %p142 = scmp.eq.s32.totalorder %s17, 0
    %p143 = por %p141, %p142
    %s144 = ssub.s32 %s11, %s18
    %p145 = scmp.eq.s32.totalorder %s144, 0
    %s147 = sadd.s32 %s146, 1
    %s148 = scalar_select %p145, %s146, %s147
    %p151 = pneg %p145
    %p152 = scmp.eq.s32.totalorder %s11, 1
    %p153 = por %p151, %p152
    %p154 = scmp.ne.s32.totalorder %s146, %s149
    %p155 = scmp.eq.s32.totalorder %s11, 0
    %p156 = por %p154, %p155
    %p157 = scmp.ne.s32.totalorder %s146, %s149
    %p158 = scmp.eq.s32.totalorder %s16, 1
    %p159 = por %p157, %p158
    %p160 = scmp.ne.s32.totalorder %s149, %s150
    %p161 = scmp.eq.s32.totalorder %s16, 0
    %p162 = por %p160, %p161
    %p163 = scmp.ne.s32.totalorder %s149, %s150
    %p164 = scmp.eq.s32.totalorder %s17, 1
    %p165 = por %p163, %p164
    %p167 = scmp.ne.s32.totalorder %s150, %s166
    %p168 = scmp.eq.s32.totalorder %s17, 0
    %p169 = por %p167, %p168
    %p170 = scmp.le.s32.totalorder 1, %s11
    %p171 = scmp.lt.s32.totalorder %s11, 3
    %p172 = pnand %p170, %p171
    %p173 = pneg %p172
    // Predicated region
    $region9: #{seq2seq_transformer_forward.56} parent=5 // pred_check
      _
    $region10: #{seq2seq_transformer_forward.56} parent=5 // pred_check_branch
      %175 = sbr.rel (%p172) target = $region12
    $region11: #{seq2seq_transformer_forward.56} parent=5 // pred_region
      %s176 = ssub.s32 %s11, 1
      // Predicated region
      $region13: #{seq2seq_transformer_forward.56} parent=11 // pred_check
        %p177 = pneg %p110
      $region14: #{seq2seq_transformer_forward.56} parent=11 // pred_check_branch
        %179 = sbr.rel (%p177) target = $region16
      $region15: #{seq2seq_transformer_forward.56} parent=11 // pred_region
        _
      $region16: #{seq2seq_transformer_forward.56} parent=11 // pred_fallthru
        _
    $region12: #{seq2seq_transformer_forward.56} parent=5 // pred_fallthru
      _
    %p180 = scmp.lt.s32.totalorder %s11, 2
    // Predicated region
    $region17: #{seq2seq_transformer_forward.56} parent=5 // pred_check
      %p181 = pneg %p180
    $region18: #{seq2seq_transformer_forward.56} parent=5 // pred_check_branch
      %183 = sbr.rel (%p181) target = $region20
    $region19: #{seq2seq_transformer_forward.56} parent=5 // pred_region
      // Predicated region
      $region21: #{seq2seq_transformer_forward.56} parent=19 // pred_check
        %p184 = pneg %p31
      $region22: #{seq2seq_transformer_forward.56} parent=19 // pred_check_branch
        %186 = sbr.rel (%p184) target = $region24
      $region23: #{seq2seq_transformer_forward.56} parent=19 // pred_region
        %p187 = scmp.lt.s32.totalorder %s11, 1
        %s188 = scalar_select %p187, %s11, 1
        %s189 = smul.addr %s188, 4
        %s190 = smul.addr %s189, 8
        %s191 = scalar_lea.vmem %s0, %s190
      $region24: #{seq2seq_transformer_forward.56} parent=19 // pred_fallthru
        _
      // Predicated region
      $region25: #{seq2seq_transformer_forward.56} parent=19 // pred_check
        %p192 = pneg %p57
      $region26: #{seq2seq_transformer_forward.56} parent=19 // pred_check_branch
        %194 = sbr.rel (%p192) target = $region28
      $region27: #{seq2seq_transformer_forward.56} parent=19 // pred_region
        %p195 = scmp.lt.s32.totalorder %s11, 1
        %s196 = scalar_select %p195, %s11, 1
        %s197 = smul.addr %s196, 4
        %s198 = smul.addr %s197, 8
        %s199 = scalar_lea.vmem %s1, %s198
      $region28: #{seq2seq_transformer_forward.56} parent=19 // pred_fallthru
        _
      // Predicated region
      $region29: #{seq2seq_transformer_forward.56} parent=19 // pred_check
        %p200 = pneg %p83
      $region30: #{seq2seq_transformer_forward.56} parent=19 // pred_check_branch
        %202 = sbr.rel (%p200) target = $region32
      $region31: #{seq2seq_transformer_forward.56} parent=19 // pred_region
        %p203 = scmp.lt.s32.totalorder %s11, 1
        %s204 = scalar_select %p203, %s11, 1
        %s205 = smul.addr %s204, 4
        %s206 = smul.addr %s205, 8
        %s207 = scalar_lea.vmem %s2, %s206
      $region32: #{seq2seq_transformer_forward.56} parent=19 // pred_fallthru
        _
      // Predicated region
      $region33: #{seq2seq_transformer_forward.56} parent=19 // pred_check
        %p208 = pneg %p130
      $region34: #{seq2seq_transformer_forward.56} parent=19 // pred_check_branch
        %210 = sbr.rel (%p208) target = $region36
      $region35: #{seq2seq_transformer_forward.56} parent=19 // pred_region
        %p211 = scmp.lt.s32.totalorder %s11, 1
        %s212 = scalar_select %p211, %s11, 1
        %s213 = scalar_lea.vmem %s4, %s212
      $region36: #{seq2seq_transformer_forward.56} parent=19 // pred_fallthru
        _
    $region20: #{seq2seq_transformer_forward.56} parent=5 // pred_fallthru
      _
    %p214 = scmp.le.s32.totalorder 1, %s11
    %p215 = scmp.lt.s32.totalorder %s11, 3
    %p216 = pnand %p214, %p215
    %p217 = pneg %p216
    // Predicated region
    $region37: #{seq2seq_transformer_forward.56} parent=5 // pred_check
      _
    $region38: #{seq2seq_transformer_forward.56} parent=5 // pred_check_branch
      %219 = sbr.rel (%p216) target = $region40
    $region39: #{seq2seq_transformer_forward.56} parent=5 // pred_region
      %s220 = ssub.s32 %s11, 1
      %p221 = scmp.lt.s32.totalorder %s16, 1
      %s222 = scalar_select %p221, %s16, 1
      %s223 = smul.addr %s222, 4
      %s224 = smul.addr %s223, 8
      %s225 = scalar_lea.vmem %s0, %s224
      %p226 = pneg %p37
      %p227 = pneg %p34
      %p228 = scmp.lt.s32.totalorder %s16, 1
      %s229 = scalar_select %p228, %s16, 1
      %s230 = smul.addr %s229, 4
      %s231 = smul.addr %s230, 8
      %s232 = scalar_lea.vmem %s1, %s231
      %p233 = pneg %p63
      %p234 = pneg %p60
      %p235 = scmp.lt.s32.totalorder %s16, 1
      %s236 = scalar_select %p235, %s16, 1
      %s237 = smul.addr %s236, 4
      %s238 = smul.addr %s237, 8
      %s239 = scalar_lea.vmem %s2, %s238
      %p240 = pneg %p89
      %p241 = pneg %p86
      %p242 = pneg %p110
      %p243 = pneg %p107
      %p244 = scmp.lt.s32.totalorder %s16, 1
      %s245 = scalar_select %p244, %s16, 1
      %s246 = scalar_lea.vmem %s4, %s245
      %p247 = pneg %p136
      %p248 = pneg %p133
      %p249 = pneg %p162
      %p250 = pneg %p159
      %p251 = scmp.lt.s32.totalorder %s16, 1
      %s252 = scalar_select %p251, %s16, 1
      %s253 = smul.addr %s252, 4
      %s254 = smul.addr %s253, 8
      %s255 = scalar_lea.vmem %s5, %s254
      %p256 = scmp.lt.s32.totalorder %s16, 1
      %s257 = scalar_select %p256, %s16, 1
      %s258 = smul.addr %s257, 4
      %s259 = smul.addr %s258, 8
      %s260 = scalar_lea.vmem %s0, %s259
      %p261 = scmp.lt.s32.totalorder %s16, 1
      %s262 = scalar_select %p261, %s16, 1
      %s263 = smul.addr %s262, 4
      %s264 = smul.addr %s263, 8
      %s265 = scalar_lea.vmem %s1, %s264
      %p266 = scmp.lt.s32.totalorder %s16, 1
      %s267 = scalar_select %p266, %s16, 1
      %s268 = smul.addr %s267, 4
      %s269 = smul.addr %s268, 8
      %s270 = scalar_lea.vmem %s2, %s269
      %p271 = scmp.lt.s32.totalorder %s16, 1
      %s272 = scalar_select %p271, %s16, 1
      %s273 = scalar_lea.vmem %s4, %s272
      %p274 = scmp.lt.s32.totalorder %s16, 1
      %s275 = scalar_select %p274, %s16, 1
      %s276 = smul.addr %s275, 4
      %s277 = smul.addr %s276, 8
      %s278 = scalar_lea.vmem %s5, %s277
      %v280 = vld [vmem:[%s260] sm:$0x3f]
      %v281 = vld [vmem:[%s260 + $0x8] sm:$0x3f]
      %v282 = vld [vmem:[%s260 + $0x10] sm:$0x3f]
      %v283 = vld [vmem:[%s260 + $0x18] sm:$0x3f]
      %v284 = vpack.c.bf16 %v280, %v280
      %v285 = vpack.c.bf16 %v281, %v281
      %v286 = vpack.c.bf16 %v282, %v282
      %v287 = vpack.c.bf16 %v283, %v283
      %v288 = vld [vmem:[%s265] sm:$0xff]
      %v289 = vld [vmem:[%s265 + $0x8] sm:$0xff]
      %v290 = vld [vmem:[%s265 + $0x10] sm:$0xff]
      %v291 = vld [vmem:[%s265 + $0x18] sm:$0xff]
      %v292 = vpack.c.bf16 %v288, %v288
      %v293 = vpack.c.bf16 %v289, %v289
      %v294 = vpack.c.bf16 %v290, %v290
      %v295 = vpack.c.bf16 %v291, %v291
      %v296 = vld [vmem:[%s3] sm:$0x3f]
      %vm297 = vcmask 64512
      %v299 = vsel %vm297, %v284, 0
      %v302 = vsel %vm297, %v292, 0
      %304 = vmatpush.bf16.xpose.msra.mxu0 0
      %305 = vmatpush.bf16.xpose.msra.mxu0 0
      %306 = vmatpush.bf16.xpose.msra.mxu0 0
      %307 = vmatpush.bf16.xpose.msra.mxu0 0
      %308 = vmatpush.bf16.xpose.msra.mxu0 0
      %309 = vmatpush.bf16.xpose.msra.mxu0 0
      %310 = vmatpush.bf16.xpose.msra.mxu0 0
      %311 = vmatpush.bf16.xpose.msra.mxu0 %v302
      %312 = vmatmul.bf16.gmra.mxu0 %v299
      %v313 = vpop.f32.mrf.mxu0
      %v314 = vadd.f32 %v296, %v313
      %v315 = vpop.f32.mrf.mxu0
      %316 = vdwg.mxu0
      %v318 = vsel %vm297, %v285, 0
      %v321 = vsel %vm297, %v293, 0
      %323 = vmatpush.bf16.xpose.msra.mxu0 0
      %324 = vmatpush.bf16.xpose.msra.mxu0 0
      %325 = vmatpush.bf16.xpose.msra.mxu0 0
      %326 = vmatpush.bf16.xpose.msra.mxu0 0
      %327 = vmatpush.bf16.xpose.msra.mxu0 0
      %328 = vmatpush.bf16.xpose.msra.mxu0 0
      %329 = vmatpush.bf16.xpose.msra.mxu0 0
      %330 = vmatpush.bf16.xpose.msra.mxu0 %v321
      %331 = vmatmul.bf16.gmra.mxu0 %v318
      %v332 = vpop.f32.mrf.mxu0
      %v333 = vadd.f32 %v296, %v332
      %v334 = vpop.f32.mrf.mxu0
      %335 = vdwg.mxu0
      %v337 = vsel %vm297, %v286, 0
      %v340 = vsel %vm297, %v294, 0
      %342 = vmatpush.bf16.xpose.msra.mxu0 0
      %343 = vmatpush.bf16.xpose.msra.mxu0 0
      %344 = vmatpush.bf16.xpose.msra.mxu0 0
      %345 = vmatpush.bf16.xpose.msra.mxu0 0
      %346 = vmatpush.bf16.xpose.msra.mxu0 0
      %347 = vmatpush.bf16.xpose.msra.mxu0 0
      %348 = vmatpush.bf16.xpose.msra.mxu0 0
      %349 = vmatpush.bf16.xpose.msra.mxu0 %v340
      %350 = vmatmul.bf16.gmra.mxu0 %v337
      %v351 = vpop.f32.mrf.mxu0
      %v352 = vadd.f32 %v296, %v351
      %v353 = vpop.f32.mrf.mxu0
      %354 = vdwg.mxu0
      %v356 = vsel %vm297, %v287, 0
      %v359 = vsel %vm297, %v295, 0
      %361 = vmatpush.bf16.xpose.msra.mxu0 0
      %362 = vmatpush.bf16.xpose.msra.mxu0 0
      %363 = vmatpush.bf16.xpose.msra.mxu0 0
      %364 = vmatpush.bf16.xpose.msra.mxu0 0
      %365 = vmatpush.bf16.xpose.msra.mxu0 0
      %366 = vmatpush.bf16.xpose.msra.mxu0 0
      %367 = vmatpush.bf16.xpose.msra.mxu0 0
      %368 = vmatpush.bf16.xpose.msra.mxu0 %v359
      %369 = vmatmul.bf16.gmra.mxu0 %v356
      %v370 = vpop.f32.mrf.mxu0
      %v371 = vadd.f32 %v296, %v370
      %v372 = vpop.f32.mrf.mxu0
      %373 = vdwg.mxu0
      %v374 = vld [vmem:[%s273] sm:$0x1]
      %v376 = vperm.slane %v374, 0
      %v378 = vadd.f32 %v314, %v376
      %v379 = vadd.f32 %v333, %v376
      %v380 = vadd.f32 %v352, %v376
      %v381 = vadd.f32 %v371, %v376
      %vm382 = vcmask 62464
      %v383 = vsel %vm382, %v378, -inf
      %384 = vmax.xlane.f32.xlu0 %v383
      %v385 = vpop.xlane.xlu0 %384
      %v386 = vsel %vm382, %v379, -inf
      %387 = vmax.xlane.f32.xlu0 %v386
      %v388 = vpop.xlane.xlu0 %387
      %v389 = vsel %vm382, %v380, -inf
      %390 = vmax.xlane.f32.xlu0 %v389
      %v391 = vpop.xlane.xlu0 %390
      %v392 = vsel %vm382, %v381, -inf
      %393 = vmax.xlane.f32.xlu0 %v392
      %v394 = vpop.xlane.xlu0 %393
      %v395 = vsub.f32 %v378, %v385
      %v396 = vsub.f32 %v379, %v388
      %v397 = vsub.f32 %v380, %v391
      %v398 = vsub.f32 %v381, %v394
      %v399 = vmul.f32 %v395, 1.442695
      %v400 = vpow.pop %v399
      %v401 = vmul.f32 %v396, 1.442695
      %v402 = vpow.pop %v401
      %v403 = vmul.f32 %v397, 1.442695
      %v404 = vpow.pop %v403
      %v405 = vmul.f32 %v398, 1.442695
      %v406 = vpow.pop %v405
      %v407 = vsel %vm382, %v400, 0.0
      %408 = vadd.xlane.f32.xlu0 %v407
      %v409 = vpop.xlane.xlu0 %408
      %v410 = vsel %vm382, %v402, 0.0
      %411 = vadd.xlane.f32.xlu0 %v410
      %v412 = vpop.xlane.xlu0 %411
      %v413 = vsel %vm382, %v404, 0.0
      %414 = vadd.xlane.f32.xlu0 %v413
      %v415 = vpop.xlane.xlu0 %414
      %v416 = vsel %vm382, %v406, 0.0
      %417 = vadd.xlane.f32.xlu0 %v416
      %v418 = vpop.xlane.xlu0 %417
      %v419 = vpack.c.bf16 %v400, %v400
      %v420 = vpack.c.bf16 %v402, %v402
      %v421 = vpack.c.bf16 %v404, %v404
      %v422 = vpack.c.bf16 %v406, %v406
      %v423 = vld [vmem:[%s270] sm:$0xff]
      %v424 = vld [vmem:[%s270 + $0x8] sm:$0xff]
      %v425 = vld [vmem:[%s270 + $0x10] sm:$0xff]
      %v426 = vld [vmem:[%s270 + $0x18] sm:$0xff]
      %v427 = vpack.c.bf16 %v423, %v423
      %v428 = vpack.c.bf16 %v424, %v424
      %v429 = vpack.c.bf16 %v425, %v425
      %v430 = vpack.c.bf16 %v426, %v426
      %v432 = vsel %vm297, %v419, 0
      %vm434 = vcmask 1043456
      %v436 = vsel %vm434, %v427, 0
      %438 = vmatpush.bf16.msra.mxu0 0
      %439 = vmatpush.bf16.msra.mxu0 0
      %440 = vmatpush.bf16.msra.mxu0 0
      %441 = vmatpush.bf16.msra.mxu0 0
      %442 = vmatpush.bf16.msra.mxu0 0
      %443 = vmatpush.bf16.msra.mxu0 0
      %444 = vmatpush.bf16.msra.mxu0 0
      %445 = vmatpush.bf16.msra.mxu0 %v436
      %446 = vmatmul.bf16.gmra.mxu0 %v432
      %v447 = vpop.f32.mrf.mxu0
      %v448 = vadd.f32 0.0, %v447
      %v449 = vpop.f32.mrf.mxu0
      %450 = vdwg.mxu0
      %v452 = vsel %vm297, %v420, 0
      %v455 = vsel %vm434, %v428, 0
      %457 = vmatpush.bf16.msra.mxu0 0
      %458 = vmatpush.bf16.msra.mxu0 0
      %459 = vmatpush.bf16.msra.mxu0 0
      %460 = vmatpush.bf16.msra.mxu0 0
      %461 = vmatpush.bf16.msra.mxu0 0
      %462 = vmatpush.bf16.msra.mxu0 0
      %463 = vmatpush.bf16.msra.mxu0 0
      %464 = vmatpush.bf16.msra.mxu0 %v455
      %465 = vmatmul.bf16.gmra.mxu0 %v452
      %v466 = vpop.f32.mrf.mxu0
      %v467 = vadd.f32 0.0, %v466
      %v468 = vpop.f32.mrf.mxu0
      %469 = vdwg.mxu0
      %v471 = vsel %vm297, %v421, 0
      %v474 = vsel %vm434, %v429, 0
      %476 = vmatpush.bf16.msra.mxu0 0
      %477 = vmatpush.bf16.msra.mxu0 0
      %478 = vmatpush.bf16.msra.mxu0 0
      %479 = vmatpush.bf16.msra.mxu0 0
      %480 = vmatpush.bf16.msra.mxu0 0
      %481 = vmatpush.bf16.msra.mxu0 0
      %482 = vmatpush.bf16.msra.mxu0 0
      %483 = vmatpush.bf16.msra.mxu0 %v474
      %484 = vmatmul.bf16.gmra.mxu0 %v471
      %v485 = vpop.f32.mrf.mxu0
      %v486 = vadd.f32 0.0, %v485
      %v487 = vpop.f32.mrf.mxu0
      %488 = vdwg.mxu0
      %v490 = vsel %vm297, %v422, 0
      %v493 = vsel %vm434, %v430, 0
      %495 = vmatpush.bf16.msra.mxu0 0
      %496 = vmatpush.bf16.msra.mxu0 0
      %497 = vmatpush.bf16.msra.mxu0 0
      %498 = vmatpush.bf16.msra.mxu0 0
      %499 = vmatpush.bf16.msra.mxu0 0
      %500 = vmatpush.bf16.msra.mxu0 0
      %501 = vmatpush.bf16.msra.mxu0 0
      %502 = vmatpush.bf16.msra.mxu0 %v493
      %503 = vmatmul.bf16.gmra.mxu0 %v490
      %v504 = vpop.f32.mrf.mxu0
      %v505 = vadd.f32 0.0, %v504
      %v506 = vpop.f32.mrf.mxu0
      %507 = vdwg.mxu0
      %v508 = vrcp.pop %v409
      %v509 = vrcp.pop %v412
      %v510 = vrcp.pop %v415
      %v511 = vrcp.pop %v418
      %v512 = vmul.f32 %v448, %v508
      %v513 = vmul.f32 %v467, %v509
      %v514 = vmul.f32 %v486, %v510
      %v515 = vmul.f32 %v505, %v511
      %516 = vst.msk [vmem:[%s278] sm:$0x3f] %vm382, %v512
      %517 = vst.msk [vmem:[%s278 + $0x8] sm:$0x3f] %vm382, %v513
      %518 = vst.msk [vmem:[%s278 + $0x10] sm:$0x3f] %vm382, %v514
      %519 = vst.msk [vmem:[%s278 + $0x18] sm:$0x3f] %vm382, %v515
      %p520 = scmp.lt.s32.totalorder %s16, 1
      %s521 = scalar_select %p520, %s16, 1
      %s522 = smul.addr %s521, 4
      %s523 = smul.addr %s522, 8
      %s524 = scalar_lea.vmem %s5, %s523
      // Predicated region
      $region41: #{seq2seq_transformer_forward.56} parent=39 // pred_check
        %p525 = pneg %p159
      $region42: #{seq2seq_transformer_forward.56} parent=39 // pred_check_branch
        %527 = sbr.rel (%p525) target = $region44
      $region43: #{seq2seq_transformer_forward.56} parent=39 // pred_region
        _
      $region44: #{seq2seq_transformer_forward.56} parent=39 // pred_fallthru
        _
    $region40: #{seq2seq_transformer_forward.56} parent=5 // pred_fallthru
      _
    %p528 = scmp.le.s32.totalorder 2, %s11
    // Predicated region
    $region45: #{seq2seq_transformer_forward.56} parent=5 // pred_check
      %p529 = pneg %p528
    $region46: #{seq2seq_transformer_forward.56} parent=5 // pred_check_branch
      %531 = sbr.rel (%p529) target = $region48
    $region47: #{seq2seq_transformer_forward.56} parent=5 // pred_region
      %s532 = ssub.s32 %s11, 2
      // Predicated region
      $region49: #{seq2seq_transformer_forward.56} parent=47 // pred_check
        %p533 = pneg %p165
      $region50: #{seq2seq_transformer_forward.56} parent=47 // pred_check_branch
        %535 = sbr.rel (%p533) target = $region52
      $region51: #{seq2seq_transformer_forward.56} parent=47 // pred_region
        %p536 = scmp.lt.s32.totalorder %s17, 1
        %s537 = scalar_select %p536, %s17, 1
        %s538 = smul.addr %s537, 4
        %s539 = smul.addr %s538, 8
        %s540 = scalar_lea.vmem %s5, %s539
      $region52: #{seq2seq_transformer_forward.56} parent=47 // pred_fallthru
        _
    $region48: #{seq2seq_transformer_forward.56} parent=5 // pred_fallthru
      _
  $region6: #{seq2seq_transformer_forward.56} parent=0 // loop_footer
    %s15 = sadd.s32 1, %s11
  $region7: #{seq2seq_transformer_forward.56} parent=0 // loop_footer_branch
    %10 = sbr.rel target = $region3
  $region8: #{seq2seq_transformer_forward.56} parent=0 // loop_exit
    _

// kernel: seq2seq_transformer_forward.72
$region0: #{seq2seq_transformer_forward.72}
  #allocation0 [shape = 'u32[]', space=smem, size = 0x4, offset = 0x4, fixed_abs, tag = 'smem constant byte address 0x4 - core index']
  #allocation1 [shape = 'u32[72,128]{1,0:T(1,128)}', space=vmem, size = 0x9000, scoped, tag = 'internal scratch']
  %s0 = inlined_call_operand.vmem [shape: f32[12,32], index: 0, kind: input, shape index: {}]
  %s1 = inlined_call_operand.vmem [shape: f32[1,32], index: 1, kind: input, shape index: {}]
  %s2 = inlined_call_operand.vmem [shape: f32[1,32], index: 2, kind: input, shape index: {}]
  %s3 = inlined_call_operand.vmem [shape: f32[12,32], index: 3, kind: output, shape index: {}]
  %s4 = sld [smem:[#allocation0]]
  $region22: #{seq2seq_transformer_forward.72} parent=0
    _
  %s6 = ssub.s32 1, %s4
  %s7 = scalar_select 0, %s6, %s4
  // Predicated region
  $region2: #{seq2seq_transformer_forward.72} parent=0 // pred_check
    _
  $region3: #{seq2seq_transformer_forward.72} parent=0 // pred_check_branch
    %9 = sbr.rel (0) target = $region5
  $region4: #{seq2seq_transformer_forward.72} parent=0 // pred_region
    _
  $region5: #{seq2seq_transformer_forward.72} parent=0 // pred_fallthru
    _
  // Predicated region
  $region6: #{seq2seq_transformer_forward.72} parent=0 // pred_check
    _
  $region7: #{seq2seq_transformer_forward.72} parent=0 // pred_check_branch
    %11 = sbr.rel (0) target = $region9
  $region8: #{seq2seq_transformer_forward.72} parent=0 // pred_region
    _
  $region9: #{seq2seq_transformer_forward.72} parent=0 // pred_fallthru
    _
  // Predicated region
  $region10: #{seq2seq_transformer_forward.72} parent=0 // pred_check
    _
  $region11: #{seq2seq_transformer_forward.72} parent=0 // pred_check_branch
    %13 = sbr.rel (0) target = $region13
  $region12: #{seq2seq_transformer_forward.72} parent=0 // pred_region
    _
  $region13: #{seq2seq_transformer_forward.72} parent=0 // pred_fallthru
    _
  %v14 = vld [vmem:[%s0] sm:$0xff]
  %v15 = vld [vmem:[%s0 + $0x8] sm:$0xf]
  %vm16 = vcmask 261120
  %v17 = vsel %vm16, %v14, 0.0
  %18 = vadd.xlane.f32.xlu0 %v17
  %v19 = vpop.xlane.xlu0 %18
  %vm20 = vcmask 257024
  %v21 = vsel %vm20, %v15, 0.0
  %22 = vadd.xlane.f32.xlu0 %v21
  %v23 = vpop.xlane.xlu0 %22
  %v24 = vrcp.pop 32.0
  %v25 = vmul.f32 32.0, %v24
  %v26 = vsub.f32 1.0, %v25
  %v27 = vmul.f32 %v24, %v26
  %v28 = vadd.f32 %v24, %v27
  %vm29 = vweird.f32 %v24
  %v30 = vsel %vm29, %v24, %v28
  %v31 = vmul.f32 %v19, %v30
  %v32 = vmul.f32 %v23, %v30
  %v33 = vsub.f32 %v14, %v31
  %v34 = vsub.f32 %v15, %v32
  %v35 = vmul.f32 %v33, %v33
  %v36 = vmul.f32 %v34, %v34
  %v37 = vsel %vm16, %v35, 0.0
  %38 = vadd.xlane.f32.xlu0 %v37
  %v39 = vpop.xlane.xlu0 %38
  %v40 = vsel %vm20, %v36, 0.0
  %41 = vadd.xlane.f32.xlu0 %v40
  %v42 = vpop.xlane.xlu0 %41
  %v43 = vmul.f32 %v39, %v30
  %v44 = vmul.f32 %v42, %v30
  %v45 = vadd.f32 %v43, 1e-05
  %v46 = vadd.f32 %v44, 1e-05
  %v47 = vrsqrt.pop %v45
  %v48 = vmul.f32 %v47, %v45
  %v49 = vmul.f32 %v48, %v47
  %v50 = vmul.f32 0.5, %v49
  %v51 = vsub.f32 1.5, %v50
  %v52 = vmul.f32 %v47, %v51
  %vm53 = vweird.f32 %v45
  %vm54 = vweird.f32 %v47
  %vm55 = vmor %vm53, %vm54
  %v56 = vsel %vm55, %v47, %v52
  %v57 = vrsqrt.pop %v46
  %v58 = vmul.f32 %v57, %v46
  %v59 = vmul.f32 %v58, %v57
  %v60 = vmul.f32 0.5, %v59
  %v61 = vsub.f32 1.5, %v60
  %v62 = vmul.f32 %v57, %v61
  %vm63 = vweird.f32 %v46
  %vm64 = vweird.f32 %v57
  %vm65 = vmor %vm63, %vm64
  %v66 = vsel %vm65, %v57, %v62
  %v67 = vmul.f32 %v33, %v56
  %v68 = vmul.f32 %v34, %v66
  %v69 = vld [vmem:[%s1] sm:$0x1]
  %v71 = vperm.slane %v69, 0
  %v73 = vmul.f32 %v67, %v71
  %v74 = vmul.f32 %v68, %v71
  %v75 = vld [vmem:[%s2] sm:$0x1]
  %v77 = vperm.slane %v75, 0
  %v79 = vadd.f32 %v73, %v77
  %v80 = vadd.f32 %v74, %v77
  %81 = vst.msk [vmem:[%s3] sm:$0xff] %vm16, %v79
  %82 = vst.msk [vmem:[%s3 + $0x8] sm:$0xf] %vm20, %v80
  // Predicated region
  $region14: #{seq2seq_transformer_forward.72} parent=0 // pred_check
    _
  $region15: #{seq2seq_transformer_forward.72} parent=0 // pred_check_branch
    %84 = sbr.rel (0) target = $region17
  $region16: #{seq2seq_transformer_forward.72} parent=0 // pred_region
    _
  $region17: #{seq2seq_transformer_forward.72} parent=0 // pred_fallthru
    _
  // Predicated region
  $region18: #{seq2seq_transformer_forward.72} parent=0 // pred_check
    _
  $region19: #{seq2seq_transformer_forward.72} parent=0 // pred_check_branch
    %86 = sbr.rel (0) target = $region21
  $region20: #{seq2seq_transformer_forward.72} parent=0 // pred_region
    _
  $region21: #{seq2seq_transformer_forward.72} parent=0 // pred_fallthru
    _

// kernel: seq2seq_transformer_forward.59
$region0: #{seq2seq_transformer_forward.59}
  #allocation0 [shape = 'u32[]', space=smem, size = 0x4, offset = 0x4, fixed_abs, tag = 'smem constant byte address 0x4 - core index']
  #allocation1 [shape = 'u32[72,128]{1,0:T(1,128)}', space=vmem, size = 0x9000, scoped, tag = 'internal scratch']
  %s0 = inlined_call_operand.vmem [shape: f32[12,32], index: 0, kind: input, shape index: {}]
  %s1 = inlined_call_operand.vmem [shape: bf16[32,64], index: 1, kind: input, shape index: {}]
  %s2 = inlined_call_operand.vmem [shape: f32[1,64], index: 2, kind: input, shape index: {}]
  %s3 = inlined_call_operand.vmem [shape: bf16[64,32], index: 3, kind: input, shape index: {}]
  %s4 = inlined_call_operand.vmem [shape: f32[1,32], index: 4, kind: input, shape index: {}]
  %s5 = inlined_call_operand.vmem [shape: f32[12,32], index: 5, kind: output, shape index: {}]
  %s6 = sld [smem:[#allocation0]]
  $region30: #{seq2seq_transformer_forward.59} parent=0
    _
  %s8 = ssub.s32 1, %s6
  %s9 = scalar_select 0, %s8, %s6
  // Predicated region
  $region2: #{seq2seq_transformer_forward.59} parent=0 // pred_check
    _
  $region3: #{seq2seq_transformer_forward.59} parent=0 // pred_check_branch
    %11 = sbr.rel (0) target = $region5
  $region4: #{seq2seq_transformer_forward.59} parent=0 // pred_region
    _
  $region5: #{seq2seq_transformer_forward.59} parent=0 // pred_fallthru
    _
  // Predicated region
  $region6: #{seq2seq_transformer_forward.59} parent=0 // pred_check
    _
  $region7: #{seq2seq_transformer_forward.59} parent=0 // pred_check_branch
    %13 = sbr.rel (0) target = $region9
  $region8: #{seq2seq_transformer_forward.59} parent=0 // pred_region
    _
  $region9: #{seq2seq_transformer_forward.59} parent=0 // pred_fallthru
    _
  // Predicated region
  $region10: #{seq2seq_transformer_forward.59} parent=0 // pred_check
    _
  $region11: #{seq2seq_transformer_forward.59} parent=0 // pred_check_branch
    %15 = sbr.rel (0) target = $region13
  $region12: #{seq2seq_transformer_forward.59} parent=0 // pred_region
    _
  $region13: #{seq2seq_transformer_forward.59} parent=0 // pred_fallthru
    _
  // Predicated region
  $region14: #{seq2seq_transformer_forward.59} parent=0 // pred_check
    _
  $region15: #{seq2seq_transformer_forward.59} parent=0 // pred_check_branch
    %17 = sbr.rel (0) target = $region17
  $region16: #{seq2seq_transformer_forward.59} parent=0 // pred_region
    _
  $region17: #{seq2seq_transformer_forward.59} parent=0 // pred_fallthru
    _
  // Predicated region
  $region18: #{seq2seq_transformer_forward.59} parent=0 // pred_check
    _
  $region19: #{seq2seq_transformer_forward.59} parent=0 // pred_check_branch
    %19 = sbr.rel (0) target = $region21
  $region20: #{seq2seq_transformer_forward.59} parent=0 // pred_region
    _
  $region21: #{seq2seq_transformer_forward.59} parent=0 // pred_fallthru
    _
  %v21 = vld [vmem:[%s0] sm:$0xff]
  %v22 = vld [vmem:[%s0 + $0x8] sm:$0xf]
  %v23 = vpack.c.bf16 %v22, %v21
  %v24 = vld [vmem:[%s1] sm:$0xf]
  %v25 = vld [vmem:[%s1 + $0x4] sm:$0xf]
  %v26 = vld [vmem:[%s1 + $0x8] sm:$0xf]
  %v27 = vld [vmem:[%s1 + $0xc] sm:$0xf]
  %v28 = vld [vmem:[%s2] sm:$0x1]
  %v30 = vperm.slane %v28, 0
  %v36 = vunpack.c.l.b16 %v24
  %v37 = vunpack.c.l.b16 %v25
  %v38 = vunpack.c.l.b16 %v26
  %v39 = vunpack.c.l.b16 %v27
  %v40 = vpack.c.b16 %v37, %v36
  %v41 = vpack.c.b16 %v39, %v38
  %vm44 = vcmask 261120
  %v46 = vsel %vm44, %v23, 0
  %48 = vmatpush.bf16.msra.mxu0 0
  %49 = vmatpush.bf16.msra.mxu0 0
  %50 = vmatpush.bf16.msra.mxu0 0
  %51 = vmatpush.bf16.msra.mxu0 0
  %52 = vmatpush.bf16.msra.mxu0 0
  %53 = vmatpush.bf16.msra.mxu0 0
  %54 = vmatpush.bf16.msra.mxu0 %v41
  %55 = vmatpush.bf16.msra.mxu0 %v40
  %56 = vmatmul.bf16.gmra.mxu0 %v46
  %v57 = vpop.f32.mrf.mxu0
  %v58 = vadd.f32 %v30, %v57
  %v59 = vpop.f32.mrf.mxu0
  %v60 = vadd.f32 %v30, %v59
  %61 = vdwg.mxu0
  %v62 = vmax.f32 %v58, 0.0
  %v63 = vmax.f32 %v60, 0.0
  %v64 = vpack.c.bf16 %v63, %v62
  %v65 = vld [vmem:[%s3] sm:$0xf]
  %v66 = vld [vmem:[%s3 + $0x4] sm:$0xf]
  %v67 = vld [vmem:[%s3 + $0x8] sm:$0xf]
  %v68 = vld [vmem:[%s3 + $0xc] sm:$0xf]
  %v69 = vld [vmem:[%s3 + $0x10] sm:$0xf]
  %v70 = vld [vmem:[%s3 + $0x14] sm:$0xf]
  %v71 = vld [vmem:[%s3 + $0x18] sm:$0xf]
  %v72 = vld [vmem:[%s3 + $0x1c] sm:$0xf]
  %v73 = vld [vmem:[%s4] sm:$0x1]
  %v75 = vperm.slane %v73, 0
  %v85 = vunpack.c.l.b16 %v65
  %v86 = vunpack.c.l.b16 %v66
  %v87 = vunpack.c.l.b16 %v67
  %v88 = vunpack.c.l.b16 %v68
  %v89 = vunpack.c.l.b16 %v69
  %v90 = vunpack.c.l.b16 %v70
  %v91 = vunpack.c.l.b16 %v71
  %v92 = vunpack.c.l.b16 %v72
  %v93 = vpack.c.b16 %v86, %v85
  %v94 = vpack.c.b16 %v88, %v87
  %v95 = vpack.c.b16 %v90, %v89
  %v96 = vpack.c.b16 %v92, %v91
  %vm101 = vcmask 523264
  %v103 = vsel %vm101, %v64, 0
  %105 = vmatpush.bf16.msra.mxu0 0
  %106 = vmatpush.bf16.msra.mxu0 0
  %107 = vmatpush.bf16.msra.mxu0 0
  %108 = vmatpush.bf16.msra.mxu0 0
  %109 = vmatpush.bf16.msra.mxu0 %v96
  %110 = vmatpush.bf16.msra.mxu0 %v95
  %111 = vmatpush.bf16.msra.mxu0 %v94
  %112 = vmatpush.bf16.msra.mxu0 %v93
  %113 = vmatmul.bf16.gmra.mxu0 %v103
  %v114 = vpop.f32.mrf.mxu0
  %v115 = vadd.f32 %v75, %v114
  %v116 = vpop.f32.mrf.mxu0
  %v117 = vadd.f32 %v75, %v116
  %118 = vdwg.mxu0
  %119 = vst.msk [vmem:[%s5] sm:$0xff] %vm44, %v115
  %vm120 = vcmask 257024
  %121 = vst.msk [vmem:[%s5 + $0x8] sm:$0xf] %vm120, %v117
  // Predicated region
  $region22: #{seq2seq_transformer_forward.59} parent=0 // pred_check
    _
  $region23: #{seq2seq_transformer_forward.59} parent=0 // pred_check_branch
    %123 = sbr.rel (0) target = $region25
  $region24: #{seq2seq_transformer_forward.59} parent=0 // pred_region
    _
  $region25: #{seq2seq_transformer_forward.59} parent=0 // pred_fallthru
    _
  // Predicated region
  $region26: #{seq2seq_transformer_forward.59} parent=0 // pred_check
    _
  $region27: #{seq2seq_transformer_forward.59} parent=0 // pred_check_branch
    %125 = sbr.rel (0) target = $region29
  $region28: #{seq2seq_transformer_forward.59} parent=0 // pred_region
    _
  $region29: #{seq2seq_transformer_forward.59} parent=0 // pred_fallthru
    _

// kernel: seq2seq_transformer_forward.73
$region0: #{seq2seq_transformer_forward.73}
  #allocation0 [shape = 'u32[]', space=smem, size = 0x4, offset = 0x4, fixed_abs, tag = 'smem constant byte address 0x4 - core index']
  #allocation1 [shape = 'u32[72,128]{1,0:T(1,128)}', space=vmem, size = 0x9000, scoped, tag = 'internal scratch']
  #allocation2 [shape = 'f32[12,16]{1,0:T(8,128)}', space=vmem, size = 0x2000, scoped, tag = 'scratch operand']
  %s0 = inlined_call_operand.vmem [shape: f32[12,32], index: 0, kind: input, shape index: {}]
  %s1 = inlined_call_operand.vmem [shape: bf16[32,16], index: 1, kind: input, shape index: {}]
  %s2 = inlined_call_operand.vmem [shape: f32[1,16], index: 2, kind: input, shape index: {}]
  %s3 = inlined_call_operand.vmem [shape: f32[12,16], index: 3, kind: output, shape index: {}]
  %s4 = sld [smem:[#allocation0]]
  $region30: #{seq2seq_transformer_forward.73} parent=0
    _
  %s6 = ssub.s32 1, %s4
  %s7 = scalar_select 0, %s6, %s4
  // Predicated region
  $region2: #{seq2seq_transformer_forward.73} parent=0 // pred_check
    _
  $region3: #{seq2seq_transformer_forward.73} parent=0 // pred_check_branch
    %9 = sbr.rel (0) target = $region5
  $region4: #{seq2seq_transformer_forward.73} parent=0 // pred_region
    _
  $region5: #{seq2seq_transformer_forward.73} parent=0 // pred_fallthru
    _
  // Predicated region
  $region6: #{seq2seq_transformer_forward.73} parent=0 // pred_check
    _
  $region7: #{seq2seq_transformer_forward.73} parent=0 // pred_check_branch
    %11 = sbr.rel (0) target = $region9
  $region8: #{seq2seq_transformer_forward.73} parent=0 // pred_region
    _
  $region9: #{seq2seq_transformer_forward.73} parent=0 // pred_fallthru
    _
  // Predicated region
  $region10: #{seq2seq_transformer_forward.73} parent=0 // pred_check
    _
  $region11: #{seq2seq_transformer_forward.73} parent=0 // pred_check_branch
    %13 = sbr.rel (0) target = $region13
  $region12: #{seq2seq_transformer_forward.73} parent=0 // pred_region
    _
  $region13: #{seq2seq_transformer_forward.73} parent=0 // pred_fallthru
    _
  %p15 = scmp.eq.s32.totalorder 0, 0
  // Predicated region
  $region14: #{seq2seq_transformer_forward.73} parent=0 // pred_check
    %p16 = pneg %p15
  $region15: #{seq2seq_transformer_forward.73} parent=0 // pred_check_branch
    %18 = sbr.rel (%p16) target = $region17
  $region16: #{seq2seq_transformer_forward.73} parent=0 // pred_region
    %vm19 = vcmask 130048
    %20 = vst.msk [vmem:[#allocation2] sm:$0xff] %vm19, 0.0
    %vm21 = vcmask 125952
    %22 = vst.msk [vmem:[#allocation2 + $0x8] sm:$0xf] %vm21, 0.0
  $region17: #{seq2seq_transformer_forward.73} parent=0 // pred_fallthru
    _
  %v23 = vld [vmem:[#allocation2] sm:$0xff]
  %v24 = vld [vmem:[#allocation2 + $0x8] sm:$0xf]
  %v25 = vld [vmem:[%s0] sm:$0xff]
  %v26 = vld [vmem:[%s0 + $0x8] sm:$0xf]
  %v27 = vpack.c.bf16 %v26, %v25
  %v28 = vld [vmem:[%s1] sm:$0xf]
  %v29 = vld [vmem:[%s1 + $0x4] sm:$0xf]
  %v30 = vld [vmem:[%s1 + $0x8] sm:$0xf]
  %v31 = vld [vmem:[%s1 + $0xc] sm:$0xf]
  %v36 = vunpack.c.l.b16 %v28
  %v37 = vunpack.c.l.b16 %v29
  %v38 = vunpack.c.l.b16 %v30
  %v39 = vunpack.c.l.b16 %v31
  %v40 = vpack.c.b16 %v37, %v36
  %v41 = vpack.c.b16 %v39, %v38
  %vm44 = vcmask 261120
  %v46 = vsel %vm44, %v27, 0
  %48 = vmatpush.bf16.msra.mxu0 0
  %49 = vmatpush.bf16.msra.mxu0 0
  %50 = vmatpush.bf16.msra.mxu0 0
  %51 = vmatpush.bf16.msra.mxu0 0
  %52 = vmatpush.bf16.msra.mxu0 0
  %53 = vmatpush.bf16.msra.mxu0 0
  %54 = vmatpush.bf16.msra.mxu0 %v41
  %55 = vmatpush.bf16.msra.mxu0 %v40
  %56 = vmatmul.bf16.gmra.mxu0 %v46
  %v57 = vpop.f32.mrf.mxu0
  %v58 = vadd.f32 0.0, %v57
  %v59 = vpop.f32.mrf.mxu0
  %v60 = vadd.f32 0.0, %v59
  %61 = vdwg.mxu0
  %v62 = vadd.f32 %v23, %v58
  %v63 = vadd.f32 %v24, %v60
  %vm64 = vcmask 130048
  %65 = vst.msk [vmem:[#allocation2] sm:$0xff] %vm64, %v62
  %vm66 = vcmask 125952
  %67 = vst.msk [vmem:[#allocation2 + $0x8] sm:$0xf] %vm66, %v63
  // Predicated region
  $region18: #{seq2seq_transformer_forward.73} parent=0 // pred_check
    %p68 = pneg %p15
  $region19: #{seq2seq_transformer_forward.73} parent=0 // pred_check_branch
    %70 = sbr.rel (%p68) target = $region21
  $region20: #{seq2seq_transformer_forward.73} parent=0 // pred_region
    %v71 = vld [vmem:[#allocation2] sm:$0xff]
    %v72 = vld [vmem:[#allocation2 + $0x8] sm:$0xf]
    %v73 = vld [vmem:[%s2] sm:$0x1]
    %v75 = vperm.slane %v73, 0
    %v77 = vadd.f32 %v71, %v75
    %v78 = vadd.f32 %v72, %v75
    %79 = vst.msk [vmem:[%s3] sm:$0xff] %vm64, %v77
    %80 = vst.msk [vmem:[%s3 + $0x8] sm:$0xf] %vm66, %v78
  $region21: #{seq2seq_transformer_forward.73} parent=0 // pred_fallthru
    _
  // Predicated region
  $region22: #{seq2seq_transformer_forward.73} parent=0 // pred_check
    _
  $region23: #{seq2seq_transformer_forward.73} parent=0 // pred_check_branch
    %82 = sbr.rel (0) target = $region25
  $region24: #{seq2seq_transformer_forward.73} parent=0 // pred_region
    _
  $region25: #{seq2seq_transformer_forward.73} parent=0 // pred_fallthru
    _
  // Predicated region
  $region26: #{seq2seq_transformer_forward.73} parent=0 // pred_check
    _
  $region27: #{seq2seq_transformer_forward.73} parent=0 // pred_check_branch
    %84 = sbr.rel (0) target = $region29
  $region28: #{seq2seq_transformer_forward.73} parent=0 // pred_region
    _
  $region29: #{seq2seq_transformer_forward.73} parent=0 // pred_fallthru
    _

</llo_original>
